<compile_context>
chip_gen: v5e
topology: v5e:2x2
jax: 0.10.0
libtpu: 0.0.40
codegen_flags: <defaults>
</compile_context>

<pallas_src>
import functools

import numpy as np
import jax
import jax.numpy as jnp
from jax import lax
from jax.experimental import pallas as pl
from jax.experimental.pallas import tpu as pltpu


def _round_up(x, m):
    return (x + m - 1) // m * m


# --------------------------------------------------------------------------- Pallas kernel
def _conv3x3_tap_kernel(wp, rsub, x_ref, w_ref, s_ref, o_ref):
    """One (Cout-tile, batch, row-chunk) block of 3x3 conv + folded-BN shift + ReLU.

    x_ref : (tm + halo, Cin)  bf16  padded-image rows (halo included)
    w_ref : (3, 3, Cin, tn)   bf16  BN-folded conv weights (Cout tile)
    s_ref : (1, tn)           f32   folded BN shift
    o_ref : (tm, tn)          bf16  conv + BN + ReLU output rows

    The 9 taps of each <=rsub-row sub-tile accumulate in a register (vreg) value; the
    only VMEM store per sub-tile is the final bf16 output write.
    """
    tm = o_ref.shape[0]
    shift = s_ref[...]                          # (1, tn) f32, hoisted out of the loop
    r0 = 0
    while r0 < tm:                              # static python loop (unrolled at trace)
        rs = min(rsub, tm - r0)
        acc = None
        for kh in range(3):
            base = r0 + kh * wp                 # sublane-aligned (wp % 8 == 0)
            for kw in range(3):
                xs = x_ref[pl.ds(base + kw, rs), :]
                d = jnp.dot(xs, w_ref[kh, kw], preferred_element_type=jnp.float32)
                acc = d if acc is None else acc + d
        o_ref[pl.ds(r0, rs), :] = jnp.maximum(acc + shift, 0.0).astype(o_ref.dtype)
        r0 += rs


def conv3x3_bn_relu_nhwc(x, prep, *, tm_target=512, rsub=128, tn=128):
    """Conv2d(3x3, pad=1) + folded BN + ReLU in NHWC via the Pallas kernel.

    x: (N,H,W,Cin) float,  prep: dict(w=(3,3,Cin,Coutp) bf16 HWIO with BN scale folded,
    s=(1,Coutp) f32 folded shift, cout=int valid output channels).  Returns bf16.
    """
    w, s, cout = prep['w'], prep['s'], prep['cout']
    N, H, W, cin = x.shape
    assert w.shape[2] == cin, (w.shape, cin)
    coutp = w.shape[3]

    wp = _round_up(W + 2, 8)                    # padded width, sublane-aligned
    halo = 2 * wp + 2                           # extra rows needed by the 9 taps
    mv = H * wp                                 # output rows (wrap-garbage cols incl.)

    if mv <= tm_target:
        tm, n_m = mv, 1                         # mv is a multiple of 8 by construction
    else:
        tm, n_m = tm_target, pl.cdiv(mv, tm_target)
    n_c = coutp // tn

    # Pad once (already bf16), flatten rows, make sure the halo rows exist.
    xb = x.astype(jnp.bfloat16)
    xpad = jnp.pad(xb, ((0, 0), (1, 1), (1, wp - W - 1), (0, 0)))
    xf = xpad.reshape(N, (H + 2) * wp, cin)
    need_rows = n_m * tm + halo
    if need_rows > xf.shape[1]:
        xf = jnp.pad(xf, ((0, 0), (0, need_rows - xf.shape[1]), (0, 0)))
    tmh = tm + halo
    if n_m == 1:
        xc = xf[:, None, :tmh, :]
    else:
        # TODO(synk): stream overlapping tmh-row windows (pl.Element row offsets or a
        #             manual halo DMA from a pl.ANY ref) instead of materializing
        #             duplicated-halo chunks for large images.
        xc = jnp.stack([xf[:, j * tm:j * tm + tmh, :] for j in range(n_m)], axis=1)

    # TODO(synk): shingle the kw taps into the lane dim (K=3*Cin per matmul) once the
    #             in-kernel lane concat is verified cheap; at the decoder's shapes the
    #             layer is launch/glue bound so the 9 K=Cin dots are kept.
    flops = 2 * N * n_m * tm * 9 * cin * coutp
    bytes_accessed = int(xc.size * 2 + w.size * 2 + s.size * 4
                         + N * n_m * tm * coutp * 2)

    y = pl.pallas_call(
        functools.partial(_conv3x3_tap_kernel, wp, rsub),
        out_shape=jax.ShapeDtypeStruct((N, n_m, tm, coutp), jnp.bfloat16),
        grid=(n_c, N, n_m),                     # Cout tile outermost: weight stays put
        in_specs=[
            pl.BlockSpec((None, None, tmh, cin), lambda c, n, j: (n, j, 0, 0)),
            pl.BlockSpec((3, 3, cin, tn), lambda c, n, j: (0, 0, 0, c)),
            pl.BlockSpec((1, tn), lambda c, n, j: (0, c)),
        ],
        out_specs=pl.BlockSpec((None, None, tm, tn), lambda c, n, j: (n, j, 0, c)),
        compiler_params=pltpu.CompilerParams(
            dimension_semantics=("parallel", "parallel", "parallel")),
        cost_estimate=pl.CostEstimate(flops=flops, transcendentals=0,
                                      bytes_accessed=bytes_accessed),
    )(xc, w, s)

    # Drop row/channel padding: flat row r -> (h, w') = (r // wp, r % wp); keep w' < W.
    y = y.reshape(N, n_m * tm, coutp)[:, :mv, :cout]
    return y.reshape(N, H, wp, cout)[:, :, :W, :]


# --------------------------------------------------------------------------- resize glue
def maxpool2d_nhwc(x, k):
    N, H, W, C = x.shape
    return x.reshape(N, H // k, k, W // k, k, C).max(axis=(2, 4))


def _interp_matrix(out_size, in_size):
    """Dense (out,in) bilinear interpolation matrix, align_corners=True (compile const)."""
    if in_size == 1:
        return jnp.asarray(np.ones((out_size, 1), np.float32))
    pos = np.arange(out_size, dtype=np.float32) * ((in_size - 1) / (out_size - 1))
    i0 = np.clip(np.floor(pos).astype(np.int32), 0, in_size - 1)
    i1 = np.clip(i0 + 1, 0, in_size - 1)
    w = (pos - i0).astype(np.float32)
    m = np.zeros((out_size, in_size), np.float32)
    m[np.arange(out_size), i0] += 1.0 - w
    m[np.arange(out_size), i1] += w
    return jnp.asarray(m)


def upsample_bilinear_align_corners_nhwc(x, scale):
    # Matmul-based resize (MXU) instead of gather-based indexing.
    N, H, W, C = x.shape
    rh = _interp_matrix(H * scale, H)
    rw = _interp_matrix(W * scale, W)
    t = jnp.einsum('oh,nhwc->nowc', rh, x.astype(jnp.float32))
    return jnp.einsum('pw,nowc->nopc', rw, t)


# --------------------------------------------------------------------------- params
def _branch_cin_list(d, encoder_channels, cat_channel, n_blocks):
    cins = []
    for e in range(1, n_blocks + 1):
        if e <= d:
            cins.append(encoder_channels[e - 1])
        else:
            cins.append(encoder_channels[-1] if e == n_blocks else cat_channel * n_blocks)
    return cins


def init_conv_block(key, cin, cout):
    k_w, k_g = jax.random.split(key)
    std = (2.0 / (cin * 9 + cout * 9)) ** 0.5                       # xavier_normal_
    w = jax.random.normal(k_w, (cout, cin, 3, 3), jnp.float32) * std
    bias = jnp.zeros((cout,), jnp.float32)
    gamma = 1.0 + 0.02 * jax.random.normal(k_g, (cout,), jnp.float32)  # BN init N(1,.02)
    beta = jnp.zeros((cout,), jnp.float32)
    eps = 1e-5
    scale = gamma / jnp.sqrt(1.0 + eps)        # eval-mode BN: running mean=0, var=1
    shift = beta + scale * bias
    return dict(w=w, scale=scale, shift=shift)


def init_decoder_params(key, encoder_channels, cat_channel, n_blocks):
    params = {}
    keys = iter(jax.random.split(key, (n_blocks - 1) * (n_blocks + 1) + 4))
    for d in range(n_blocks - 1, 0, -1):
        layer = {}
        cins = _branch_cin_list(d, encoder_channels, cat_channel, n_blocks)
        for e in range(1, n_blocks + 1):
            layer[f'from_{e}_enc'] = init_conv_block(next(keys), cins[e - 1], cat_channel)
        layer['fusion'] = init_conv_block(
            next(keys), cat_channel * n_blocks, cat_channel * n_blocks)
        params[f'to_{d}_dec'] = layer
    return params


def _fold_weight(p):
    # (Cout,Cin,3,3) OIHW -> HWIO with the BN scale folded into the output channels.
    return jnp.transpose(p['w'], (2, 3, 1, 0)) * p['scale'][None, None, None, :]


def _prepare_conv(w_hwio_folded, shift):
    """Pad Cout to a lane-dense multiple of 128, cast weights bf16, shift f32."""
    cin, cout = w_hwio_folded.shape[2], w_hwio_folded.shape[3]
    coutp = _round_up(cout, 128)
    w_pad = jnp.zeros((3, 3, cin, coutp), jnp.bfloat16)
    w_pad = w_pad.at[..., :cout].set(w_hwio_folded.astype(jnp.bfloat16))
    s_pad = jnp.zeros((1, coutp), jnp.float32).at[:, :cout].set(shift.reshape(1, cout))
    return dict(w=w_pad, s=s_pad, cout=cout)


def prepare_decoder(params, encoder_channels, cat_channel, n_blocks):
    """All weight folding / block-diag fusion / padding done ONCE, outside the jit."""
    prepared = {}
    for d in range(n_blocks - 1, 0, -1):
        sub = params[f'to_{d}_dec']
        cins = _branch_cin_list(d, encoder_channels, cat_channel, n_blocks)
        # Fuse the n_blocks branch convs (same output resolution, disjoint input slices)
        # into one conv with a block-diagonal weight over the channel-concatenated input.
        w_bd = jnp.zeros((3, 3, sum(cins), n_blocks * cat_channel), jnp.float32)
        shifts, off = [], 0
        for i, cin in enumerate(cins):
            p = sub[f'from_{i + 1}_enc']
            w_bd = w_bd.at[:, :, off:off + cin,
                           i * cat_channel:(i + 1) * cat_channel].set(_fold_weight(p))
            shifts.append(p['shift'])
            off += cin
        pf = sub['fusion']
        prepared[f'to_{d}_dec'] = dict(
            branch=_prepare_conv(w_bd, jnp.concatenate(shifts)),
            fusion=_prepare_conv(_fold_weight(pf), pf['shift']),
        )
    return prepared


# --------------------------------------------------------------------------- forward
def u3p_decoder_forward(prepared, encoder_cache, n_blocks, cat_channel, conv_fn):
    """encoder_cache: list of NCHW arrays (module boundary); internally NHWC/bf16."""
    del cat_channel  # channel bookkeeping lives in `prepared`
    enc = [jnp.transpose(x, (0, 2, 3, 1)) for x in encoder_cache]
    decoder = [enc[-1]]
    for d in range(n_blocks - 1, 0, -1):
        lv = prepared[f'to_{d}_dec']
        srcs = []
        for i, x in enumerate(list(enc[:d]) + decoder):
            e = i + 1
            if e < d:
                x = maxpool2d_nhwc(x, 2 ** (d - e))
            elif e > d:
                x = upsample_bilinear_align_corners_nhwc(x, 2 ** (e - d))
            srcs.append(x.astype(jnp.bfloat16))
            # TODO(synk): Dropout2d assumed to be an eval-mode no-op.
        xcat = jnp.concatenate(srcs, axis=-1)
        ycat = conv_fn(xcat, lv['branch'])
        # TODO(synk): fuse the branch conv + fusion conv of a level into one launch
        #             (keep ycat in VMEM) to remove one activation HBM round trip.
        decoder.insert(0, conv_fn(ycat, lv['fusion']))
    return [jnp.transpose(x.astype(jnp.float32), (0, 3, 1, 2)) for x in decoder]


# --------------------------------------------------------------------------- reference
def conv3x3_bn_relu_reference(x, prep):
    # Same bf16 rounding points as the Pallas path; f32 accumulation.
    w = prep['w'][..., :prep['cout']].astype(jnp.float32)
    xb = x.astype(jnp.bfloat16).astype(jnp.float32)
    y = lax.conv_general_dilated(xb, w, window_strides=(1, 1), padding='SAME',
                                 dimension_numbers=('NHWC', 'HWIO', 'NHWC'),
                                 precision=lax.Precision.HIGHEST)
    y = jnp.maximum(y + prep['s'][:, :prep['cout']], 0.0)
    return y.astype(jnp.bfloat16)


# --------------------------------------------------------------------------- main
if __name__ == "__main__":
    key = jax.random.PRNGKey(0)
    n_blocks = 4
    encoder_channels = (4, 8, 16, 32)
    cat_channel = 4
    N, H = 2, 16

    keys = jax.random.split(key, n_blocks + 4)
    encoder_cache = []
    for lvl in range(n_blocks):
        s = H // (2 ** lvl)
        encoder_cache.append(
            jax.random.normal(keys[lvl], (N, encoder_channels[lvl], s, s), jnp.float32))

    params = init_decoder_params(keys[n_blocks], encoder_channels, cat_channel, n_blocks)
    prepared = prepare_decoder(params, encoder_channels, cat_channel, n_blocks)

    # Numerical sanity check of the Pallas conv kernel against lax.conv (same rounding).
    xt = jax.random.normal(keys[n_blocks + 1], (2, 16, 16, 24), jnp.float32)
    wt = jax.random.normal(keys[n_blocks + 2], (3, 3, 24, 16), jnp.float32) * 0.1
    st = jax.random.normal(keys[n_blocks + 3], (16,), jnp.float32) * 0.1
    prep_t = _prepare_conv(wt, st)
    y_k = conv3x3_bn_relu_nhwc(xt, prep_t).astype(jnp.float32)
    y_r = conv3x3_bn_relu_reference(xt, prep_t).astype(jnp.float32)
    err = float(jnp.max(jnp.abs(y_k - y_r)))
    assert err < 8e-2, f"conv kernel mismatch: {err}"

    fwd = jax.jit(lambda enc: u3p_decoder_forward(
        prepared, enc, n_blocks, cat_channel, conv3x3_bn_relu_nhwc))
    ref = jax.jit(lambda enc: u3p_decoder_forward(
        prepared, enc, n_blocks, cat_channel, conv3x3_bn_relu_reference))

    decoder_cache = fwd(encoder_cache)
    for o in decoder_cache:
        jax.block_until_ready(o)

    # Shape sanity: levels 1..n_blocks-1 have cat_channel*n_blocks channels,
    # last entry is the untouched deepest encoder feature.
    for lvl, o in enumerate(decoder_cache[:-1], start=1):
        assert o.shape == (N, cat_channel * n_blocks,
                           H // 2 ** (lvl - 1), H // 2 ** (lvl - 1))
    assert decoder_cache[-1].shape == encoder_cache[-1].shape

    # Whole-decoder plumbing check against the lax.conv reference path.
    decoder_ref = ref(encoder_cache)
    for a, b in zip(decoder_cache, decoder_ref):
        d = float(jnp.max(jnp.abs(a - b)))
        assert d < 0.25, f"decoder mismatch vs reference: {d}"

    print("KERNEL_OK")
</pallas_src>

<mosaic_0001>
module attributes {stable_mosaic.version = 11 : i64} {
  func.func @_conv3x3_tap_kernel(%arg0: i32, %arg1: i32, %arg2: i32, %arg3: memref<1x1x434x24xbf16, #tpu.memory_space<vmem>>, %arg4: memref<3x3x24x128xbf16, #tpu.memory_space<vmem>>, %arg5: memref<1x128xf32, #tpu.memory_space<vmem>>, %arg6: memref<1x1x384x128xbf16, #tpu.memory_space<vmem>>) attributes {dimension_semantics = [#tpu.dimension_semantics<parallel>, #tpu.dimension_semantics<parallel>, #tpu.dimension_semantics<parallel>], iteration_bounds = array<i64: 1, 2, 1>, scalar_prefetch = 0 : i64, scratch_operands = 0 : i64, tpu.core_type = #tpu.core_type<tc>, window_params = [{transform_indices = @transform_0, window_bounds = array<i64: 1, 1, 434, 24>}, {transform_indices = @transform_1, window_bounds = array<i64: 3, 3, 24, 128>}, {transform_indices = @transform_2, window_bounds = array<i64: 1, 128>}, {transform_indices = @transform_3, window_bounds = array<i64: 1, 1, 384, 128>}]} {
    %c0 = arith.constant 0 : index
    %c0_0 = arith.constant 0 : index
    %0 = vector.load %arg5[%c0, %c0_0] : memref<1x128xf32, #tpu.memory_space<vmem>>, vector<1x128xf32>
    %c0_1 = arith.constant 0 : index
    %c0_2 = arith.constant 0 : index
    %c0_3 = arith.constant 0 : index
    %c0_4 = arith.constant 0 : index
    %1 = vector.load %arg3[%c0_1, %c0_2, %c0_3, %c0_4] : memref<1x1x434x24xbf16, #tpu.memory_space<vmem>>, vector<1x1x128x24xbf16>
    %2 = vector.shape_cast %1 : vector<1x1x128x24xbf16> to vector<128x24xbf16>
    %c0_5 = arith.constant 0 : index
    %c0_6 = arith.constant 0 : index
    %c0_7 = arith.constant 0 : index
    %c0_8 = arith.constant 0 : index
    %3 = vector.load %arg4[%c0_5, %c0_6, %c0_7, %c0_8] : memref<3x3x24x128xbf16, #tpu.memory_space<vmem>>, vector<1x1x24x128xbf16>
    %4 = vector.shape_cast %3 : vector<1x1x24x128xbf16> to vector<24x128xbf16>
    %cst = arith.constant dense<0.000000e+00> : vector<128x128xf32>
    %5 = tpu.matmul %2, %4, %cst {dimension_numbers = #tpu.dot_dimension_numbers<[1], [0], [0], [1], [0, 0, 1, 1], [], []>} : vector<128x24xbf16>, vector<24x128xbf16>, vector<128x128xf32> -> vector<128x128xf32>
    %c0_9 = arith.constant 0 : index
    %c0_10 = arith.constant 0 : index
    %c1 = arith.constant 1 : index
    %c0_11 = arith.constant 0 : index
    %6 = vector.load %arg3[%c0_9, %c0_10, %c1, %c0_11] : memref<1x1x434x24xbf16, #tpu.memory_space<vmem>>, vector<1x1x128x24xbf16>
    %7 = vector.shape_cast %6 : vector<1x1x128x24xbf16> to vector<128x24xbf16>
    %c0_12 = arith.constant 0 : index
    %c1_13 = arith.constant 1 : index
    %c0_14 = arith.constant 0 : index
    %c0_15 = arith.constant 0 : index
    %8 = vector.load %arg4[%c0_12, %c1_13, %c0_14, %c0_15] : memref<3x3x24x128xbf16, #tpu.memory_space<vmem>>, vector<1x1x24x128xbf16>
    %9 = vector.shape_cast %8 : vector<1x1x24x128xbf16> to vector<24x128xbf16>
    %cst_16 = arith.constant dense<0.000000e+00> : vector<128x128xf32>
    %10 = tpu.matmul %7, %9, %cst_16 {dimension_numbers = #tpu.dot_dimension_numbers<[1], [0], [0], [1], [0, 0, 1, 1], [], []>} : vector<128x24xbf16>, vector<24x128xbf16>, vector<128x128xf32> -> vector<128x128xf32>
    %11 = arith.addf %5, %10 : vector<128x128xf32>
    %c0_17 = arith.constant 0 : index
    %c0_18 = arith.constant 0 : index
    %c2 = arith.constant 2 : index
    %c0_19 = arith.constant 0 : index
    %12 = vector.load %arg3[%c0_17, %c0_18, %c2, %c0_19] : memref<1x1x434x24xbf16, #tpu.memory_space<vmem>>, vector<1x1x128x24xbf16>
    %13 = vector.shape_cast %12 : vector<1x1x128x24xbf16> to vector<128x24xbf16>
    %c0_20 = arith.constant 0 : index
    %c2_21 = arith.constant 2 : index
    %c0_22 = arith.constant 0 : index
    %c0_23 = arith.constant 0 : index
    %14 = vector.load %arg4[%c0_20, %c2_21, %c0_22, %c0_23] : memref<3x3x24x128xbf16, #tpu.memory_space<vmem>>, vector<1x1x24x128xbf16>
    %15 = vector.shape_cast %14 : vector<1x1x24x128xbf16> to vector<24x128xbf16>
    %cst_24 = arith.constant dense<0.000000e+00> : vector<128x128xf32>
    %16 = tpu.matmul %13, %15, %cst_24 {dimension_numbers = #tpu.dot_dimension_numbers<[1], [0], [0], [1], [0, 0, 1, 1], [], []>} : vector<128x24xbf16>, vector<24x128xbf16>, vector<128x128xf32> -> vector<128x128xf32>
    %17 = arith.addf %11, %16 : vector<128x128xf32>
    %c0_25 = arith.constant 0 : index
    %c0_26 = arith.constant 0 : index
    %c24 = arith.constant 24 : index
    %c0_27 = arith.constant 0 : index
    %18 = vector.load %arg3[%c0_25, %c0_26, %c24, %c0_27] : memref<1x1x434x24xbf16, #tpu.memory_space<vmem>>, vector<1x1x128x24xbf16>
    %19 = vector.shape_cast %18 : vector<1x1x128x24xbf16> to vector<128x24xbf16>
    %c1_28 = arith.constant 1 : index
    %c0_29 = arith.constant 0 : index
    %c0_30 = arith.constant 0 : index
    %c0_31 = arith.constant 0 : index
    %20 = vector.load %arg4[%c1_28, %c0_29, %c0_30, %c0_31] : memref<3x3x24x128xbf16, #tpu.memory_space<vmem>>, vector<1x1x24x128xbf16>
    %21 = vector.shape_cast %20 : vector<1x1x24x128xbf16> to vector<24x128xbf16>
    %cst_32 = arith.constant dense<0.000000e+00> : vector<128x128xf32>
    %22 = tpu.matmul %19, %21, %cst_32 {dimension_numbers = #tpu.dot_dimension_numbers<[1], [0], [0], [1], [0, 0, 1, 1], [], []>} : vector<128x24xbf16>, vector<24x128xbf16>, vector<128x128xf32> -> vector<128x128xf32>
    %23 = arith.addf %17, %22 : vector<128x128xf32>
    %c0_33 = arith.constant 0 : index
    %c0_34 = arith.constant 0 : index
    %c25 = arith.constant 25 : index
    %c0_35 = arith.constant 0 : index
    %24 = vector.load %arg3[%c0_33, %c0_34, %c25, %c0_35] : memref<1x1x434x24xbf16, #tpu.memory_space<vmem>>, vector<1x1x128x24xbf16>
    %25 = vector.shape_cast %24 : vector<1x1x128x24xbf16> to vector<128x24xbf16>
    %c1_36 = arith.constant 1 : index
    %c1_37 = arith.constant 1 : index
    %c0_38 = arith.constant 0 : index
    %c0_39 = arith.constant 0 : index
    %26 = vector.load %arg4[%c1_36, %c1_37, %c0_38, %c0_39] : memref<3x3x24x128xbf16, #tpu.memory_space<vmem>>, vector<1x1x24x128xbf16>
    %27 = vector.shape_cast %26 : vector<1x1x24x128xbf16> to vector<24x128xbf16>
    %cst_40 = arith.constant dense<0.000000e+00> : vector<128x128xf32>
    %28 = tpu.matmul %25, %27, %cst_40 {dimension_numbers = #tpu.dot_dimension_numbers<[1], [0], [0], [1], [0, 0, 1, 1], [], []>} : vector<128x24xbf16>, vector<24x128xbf16>, vector<128x128xf32> -> vector<128x128xf32>
    %29 = arith.addf %23, %28 : vector<128x128xf32>
    %c0_41 = arith.constant 0 : index
    %c0_42 = arith.constant 0 : index
    %c26 = arith.constant 26 : index
    %c0_43 = arith.constant 0 : index
    %30 = vector.load %arg3[%c0_41, %c0_42, %c26, %c0_43] : memref<1x1x434x24xbf16, #tpu.memory_space<vmem>>, vector<1x1x128x24xbf16>
    %31 = vector.shape_cast %30 : vector<1x1x128x24xbf16> to vector<128x24xbf16>
    %c1_44 = arith.constant 1 : index
    %c2_45 = arith.constant 2 : index
    %c0_46 = arith.constant 0 : index
    %c0_47 = arith.constant 0 : index
    %32 = vector.load %arg4[%c1_44, %c2_45, %c0_46, %c0_47] : memref<3x3x24x128xbf16, #tpu.memory_space<vmem>>, vector<1x1x24x128xbf16>
    %33 = vector.shape_cast %32 : vector<1x1x24x128xbf16> to vector<24x128xbf16>
    %cst_48 = arith.constant dense<0.000000e+00> : vector<128x128xf32>
    %34 = tpu.matmul %31, %33, %cst_48 {dimension_numbers = #tpu.dot_dimension_numbers<[1], [0], [0], [1], [0, 0, 1, 1], [], []>} : vector<128x24xbf16>, vector<24x128xbf16>, vector<128x128xf32> -> vector<128x128xf32>
    %35 = arith.addf %29, %34 : vector<128x128xf32>
    %c0_49 = arith.constant 0 : index
    %c0_50 = arith.constant 0 : index
    %c48 = arith.constant 48 : index
    %c0_51 = arith.constant 0 : index
    %36 = vector.load %arg3[%c0_49, %c0_50, %c48, %c0_51] : memref<1x1x434x24xbf16, #tpu.memory_space<vmem>>, vector<1x1x128x24xbf16>
    %37 = vector.shape_cast %36 : vector<1x1x128x24xbf16> to vector<128x24xbf16>
    %c2_52 = arith.constant 2 : index
    %c0_53 = arith.constant 0 : index
    %c0_54 = arith.constant 0 : index
    %c0_55 = arith.constant 0 : index
    %38 = vector.load %arg4[%c2_52, %c0_53, %c0_54, %c0_55] : memref<3x3x24x128xbf16, #tpu.memory_space<vmem>>, vector<1x1x24x128xbf16>
    %39 = vector.shape_cast %38 : vector<1x1x24x128xbf16> to vector<24x128xbf16>
    %cst_56 = arith.constant dense<0.000000e+00> : vector<128x128xf32>
    %40 = tpu.matmul %37, %39, %cst_56 {dimension_numbers = #tpu.dot_dimension_numbers<[1], [0], [0], [1], [0, 0, 1, 1], [], []>} : vector<128x24xbf16>, vector<24x128xbf16>, vector<128x128xf32> -> vector<128x128xf32>
    %41 = arith.addf %35, %40 : vector<128x128xf32>
    %c0_57 = arith.constant 0 : index
    %c0_58 = arith.constant 0 : index
    %c49 = arith.constant 49 : index
    %c0_59 = arith.constant 0 : index
    %42 = vector.load %arg3[%c0_57, %c0_58, %c49, %c0_59] : memref<1x1x434x24xbf16, #tpu.memory_space<vmem>>, vector<1x1x128x24xbf16>
    %43 = vector.shape_cast %42 : vector<1x1x128x24xbf16> to vector<128x24xbf16>
    %c2_60 = arith.constant 2 : index
    %c1_61 = arith.constant 1 : index
    %c0_62 = arith.constant 0 : index
    %c0_63 = arith.constant 0 : index
    %44 = vector.load %arg4[%c2_60, %c1_61, %c0_62, %c0_63] : memref<3x3x24x128xbf16, #tpu.memory_space<vmem>>, vector<1x1x24x128xbf16>
    %45 = vector.shape_cast %44 : vector<1x1x24x128xbf16> to vector<24x128xbf16>
    %cst_64 = arith.constant dense<0.000000e+00> : vector<128x128xf32>
    %46 = tpu.matmul %43, %45, %cst_64 {dimension_numbers = #tpu.dot_dimension_numbers<[1], [0], [0], [1], [0, 0, 1, 1], [], []>} : vector<128x24xbf16>, vector<24x128xbf16>, vector<128x128xf32> -> vector<128x128xf32>
    %47 = arith.addf %41, %46 : vector<128x128xf32>
    %c0_65 = arith.constant 0 : index
    %c0_66 = arith.constant 0 : index
    %c50 = arith.constant 50 : index
    %c0_67 = arith.constant 0 : index
    %48 = vector.load %arg3[%c0_65, %c0_66, %c50, %c0_67] : memref<1x1x434x24xbf16, #tpu.memory_space<vmem>>, vector<1x1x128x24xbf16>
    %49 = vector.shape_cast %48 : vector<1x1x128x24xbf16> to vector<128x24xbf16>
    %c2_68 = arith.constant 2 : index
    %c2_69 = arith.constant 2 : index
    %c0_70 = arith.constant 0 : index
    %c0_71 = arith.constant 0 : index
    %50 = vector.load %arg4[%c2_68, %c2_69, %c0_70, %c0_71] : memref<3x3x24x128xbf16, #tpu.memory_space<vmem>>, vector<1x1x24x128xbf16>
    %51 = vector.shape_cast %50 : vector<1x1x24x128xbf16> to vector<24x128xbf16>
    %cst_72 = arith.constant dense<0.000000e+00> : vector<128x128xf32>
    %52 = tpu.matmul %49, %51, %cst_72 {dimension_numbers = #tpu.dot_dimension_numbers<[1], [0], [0], [1], [0, 0, 1, 1], [], []>} : vector<128x24xbf16>, vector<24x128xbf16>, vector<128x128xf32> -> vector<128x128xf32>
    %53 = arith.addf %47, %52 : vector<128x128xf32>
    %54 = vector.broadcast %0 : vector<1x128xf32> to vector<128x128xf32>
    %55 = arith.addf %53, %54 : vector<128x128xf32>
    %cst_73 = arith.constant 0.000000e+00 : f32
    %56 = vector.broadcast %cst_73 : f32 to vector<128x128xf32>
    %57 = arith.maximumf %55, %56 : vector<128x128xf32>
    %58 = arith.truncf %57 : vector<128x128xf32> to vector<128x128xbf16>
    %c0_74 = arith.constant 0 : index
    %c0_75 = arith.constant 0 : index
    %c0_76 = arith.constant 0 : index
    %c0_77 = arith.constant 0 : index
    %59 = vector.load %arg6[%c0_74, %c0_75, %c0_76, %c0_77] : memref<1x1x384x128xbf16, #tpu.memory_space<vmem>>, vector<1x1x128x128xbf16>
    %60 = vector.shape_cast %59 : vector<1x1x128x128xbf16> to vector<128x128xbf16>
    %61 = vector.shape_cast %58 : vector<128x128xbf16> to vector<1x1x128x128xbf16>
    tpu.vector_store %arg6[%c0_74, %c0_75, %c0_76, %c0_77], %61 {strides = array<i32>} : memref<1x1x384x128xbf16, #tpu.memory_space<vmem>>, vector<1x1x128x128xbf16>,
    %c0_78 = arith.constant 0 : index
    %c0_79 = arith.constant 0 : index
    %c128 = arith.constant 128 : index
    %c0_80 = arith.constant 0 : index
    %62 = vector.load %arg3[%c0_78, %c0_79, %c128, %c0_80] : memref<1x1x434x24xbf16, #tpu.memory_space<vmem>>, vector<1x1x128x24xbf16>
    %63 = vector.shape_cast %62 : vector<1x1x128x24xbf16> to vector<128x24xbf16>
    %c0_81 = arith.constant 0 : index
    %c0_82 = arith.constant 0 : index
    %c0_83 = arith.constant 0 : index
    %c0_84 = arith.constant 0 : index
    %64 = vector.load %arg4[%c0_81, %c0_82, %c0_83, %c0_84] : memref<3x3x24x128xbf16, #tpu.memory_space<vmem>>, vector<1x1x24x128xbf16>
    %65 = vector.shape_cast %64 : vector<1x1x24x128xbf16> to vector<24x128xbf16>
    %cst_85 = arith.constant dense<0.000000e+00> : vector<128x128xf32>
    %66 = tpu.matmul %63, %65, %cst_85 {dimension_numbers = #tpu.dot_dimension_numbers<[1], [0], [0], [1], [0, 0, 1, 1], [], []>} : vector<128x24xbf16>, vector<24x128xbf16>, vector<128x128xf32> -> vector<128x128xf32>
    %c0_86 = arith.constant 0 : index
    %c0_87 = arith.constant 0 : index
    %c129 = arith.constant 129 : index
    %c0_88 = arith.constant 0 : index
    %67 = vector.load %arg3[%c0_86, %c0_87, %c129, %c0_88] : memref<1x1x434x24xbf16, #tpu.memory_space<vmem>>, vector<1x1x128x24xbf16>
    %68 = vector.shape_cast %67 : vector<1x1x128x24xbf16> to vector<128x24xbf16>
    %c0_89 = arith.constant 0 : index
    %c1_90 = arith.constant 1 : index
    %c0_91 = arith.constant 0 : index
    %c0_92 = arith.constant 0 : index
    %69 = vector.load %arg4[%c0_89, %c1_90, %c0_91, %c0_92] : memref<3x3x24x128xbf16, #tpu.memory_space<vmem>>, vector<1x1x24x128xbf16>
    %70 = vector.shape_cast %69 : vector<1x1x24x128xbf16> to vector<24x128xbf16>
    %cst_93 = arith.constant dense<0.000000e+00> : vector<128x128xf32>
    %71 = tpu.matmul %68, %70, %cst_93 {dimension_numbers = #tpu.dot_dimension_numbers<[1], [0], [0], [1], [0, 0, 1, 1], [], []>} : vector<128x24xbf16>, vector<24x128xbf16>, vector<128x128xf32> -> vector<128x128xf32>
    %72 = arith.addf %66, %71 : vector<128x128xf32>
    %c0_94 = arith.constant 0 : index
    %c0_95 = arith.constant 0 : index
    %c130 = arith.constant 130 : index
    %c0_96 = arith.constant 0 : index
    %73 = vector.load %arg3[%c0_94, %c0_95, %c130, %c0_96] : memref<1x1x434x24xbf16, #tpu.memory_space<vmem>>, vector<1x1x128x24xbf16>
    %74 = vector.shape_cast %73 : vector<1x1x128x24xbf16> to vector<128x24xbf16>
    %c0_97 = arith.constant 0 : index
    %c2_98 = arith.constant 2 : index
    %c0_99 = arith.constant 0 : index
    %c0_100 = arith.constant 0 : index
    %75 = vector.load %arg4[%c0_97, %c2_98, %c0_99, %c0_100] : memref<3x3x24x128xbf16, #tpu.memory_space<vmem>>, vector<1x1x24x128xbf16>
    %76 = vector.shape_cast %75 : vector<1x1x24x128xbf16> to vector<24x128xbf16>
    %cst_101 = arith.constant dense<0.000000e+00> : vector<128x128xf32>
    %77 = tpu.matmul %74, %76, %cst_101 {dimension_numbers = #tpu.dot_dimension_numbers<[1], [0], [0], [1], [0, 0, 1, 1], [], []>} : vector<128x24xbf16>, vector<24x128xbf16>, vector<128x128xf32> -> vector<128x128xf32>
    %78 = arith.addf %72, %77 : vector<128x128xf32>
    %c0_102 = arith.constant 0 : index
    %c0_103 = arith.constant 0 : index
    %c152 = arith.constant 152 : index
    %c0_104 = arith.constant 0 : index
    %79 = vector.load %arg3[%c0_102, %c0_103, %c152, %c0_104] : memref<1x1x434x24xbf16, #tpu.memory_space<vmem>>, vector<1x1x128x24xbf16>
    %80 = vector.shape_cast %79 : vector<1x1x128x24xbf16> to vector<128x24xbf16>
    %c1_105 = arith.constant 1 : index
    %c0_106 = arith.constant 0 : index
    %c0_107 = arith.constant 0 : index
    %c0_108 = arith.constant 0 : index
    %81 = vector.load %arg4[%c1_105, %c0_106, %c0_107, %c0_108] : memref<3x3x24x128xbf16, #tpu.memory_space<vmem>>, vector<1x1x24x128xbf16>
    %82 = vector.shape_cast %81 : vector<1x1x24x128xbf16> to vector<24x128xbf16>
    %cst_109 = arith.constant dense<0.000000e+00> : vector<128x128xf32>
    %83 = tpu.matmul %80, %82, %cst_109 {dimension_numbers = #tpu.dot_dimension_numbers<[1], [0], [0], [1], [0, 0, 1, 1], [], []>} : vector<128x24xbf16>, vector<24x128xbf16>, vector<128x128xf32> -> vector<128x128xf32>
    %84 = arith.addf %78, %83 : vector<128x128xf32>
    %c0_110 = arith.constant 0 : index
    %c0_111 = arith.constant 0 : index
    %c153 = arith.constant 153 : index
    %c0_112 = arith.constant 0 : index
    %85 = vector.load %arg3[%c0_110, %c0_111, %c153, %c0_112] : memref<1x1x434x24xbf16, #tpu.memory_space<vmem>>, vector<1x1x128x24xbf16>
    %86 = vector.shape_cast %85 : vector<1x1x128x24xbf16> to vector<128x24xbf16>
    %c1_113 = arith.constant 1 : index
    %c1_114 = arith.constant 1 : index
    %c0_115 = arith.constant 0 : index
    %c0_116 = arith.constant 0 : index
    %87 = vector.load %arg4[%c1_113, %c1_114, %c0_115, %c0_116] : memref<3x3x24x128xbf16, #tpu.memory_space<vmem>>, vector<1x1x24x128xbf16>
    %88 = vector.shape_cast %87 : vector<1x1x24x128xbf16> to vector<24x128xbf16>
    %cst_117 = arith.constant dense<0.000000e+00> : vector<128x128xf32>
    %89 = tpu.matmul %86, %88, %cst_117 {dimension_numbers = #tpu.dot_dimension_numbers<[1], [0], [0], [1], [0, 0, 1, 1], [], []>} : vector<128x24xbf16>, vector<24x128xbf16>, vector<128x128xf32> -> vector<128x128xf32>
    %90 = arith.addf %84, %89 : vector<128x128xf32>
    %c0_118 = arith.constant 0 : index
    %c0_119 = arith.constant 0 : index
    %c154 = arith.constant 154 : index
    %c0_120 = arith.constant 0 : index
    %91 = vector.load %arg3[%c0_118, %c0_119, %c154, %c0_120] : memref<1x1x434x24xbf16, #tpu.memory_space<vmem>>, vector<1x1x128x24xbf16>
    %92 = vector.shape_cast %91 : vector<1x1x128x24xbf16> to vector<128x24xbf16>
    %c1_121 = arith.constant 1 : index
    %c2_122 = arith.constant 2 : index
    %c0_123 = arith.constant 0 : index
    %c0_124 = arith.constant 0 : index
    %93 = vector.load %arg4[%c1_121, %c2_122, %c0_123, %c0_124] : memref<3x3x24x128xbf16, #tpu.memory_space<vmem>>, vector<1x1x24x128xbf16>
    %94 = vector.shape_cast %93 : vector<1x1x24x128xbf16> to vector<24x128xbf16>
    %cst_125 = arith.constant dense<0.000000e+00> : vector<128x128xf32>
    %95 = tpu.matmul %92, %94, %cst_125 {dimension_numbers = #tpu.dot_dimension_numbers<[1], [0], [0], [1], [0, 0, 1, 1], [], []>} : vector<128x24xbf16>, vector<24x128xbf16>, vector<128x128xf32> -> vector<128x128xf32>
    %96 = arith.addf %90, %95 : vector<128x128xf32>
    %c0_126 = arith.constant 0 : index
    %c0_127 = arith.constant 0 : index
    %c176 = arith.constant 176 : index
    %c0_128 = arith.constant 0 : index
    %97 = vector.load %arg3[%c0_126, %c0_127, %c176, %c0_128] : memref<1x1x434x24xbf16, #tpu.memory_space<vmem>>, vector<1x1x128x24xbf16>
    %98 = vector.shape_cast %97 : vector<1x1x128x24xbf16> to vector<128x24xbf16>
    %c2_129 = arith.constant 2 : index
    %c0_130 = arith.constant 0 : index
    %c0_131 = arith.constant 0 : index
    %c0_132 = arith.constant 0 : index
    %99 = vector.load %arg4[%c2_129, %c0_130, %c0_131, %c0_132] : memref<3x3x24x128xbf16, #tpu.memory_space<vmem>>, vector<1x1x24x128xbf16>
    %100 = vector.shape_cast %99 : vector<1x1x24x128xbf16> to vector<24x128xbf16>
    %cst_133 = arith.constant dense<0.000000e+00> : vector<128x128xf32>
    %101 = tpu.matmul %98, %100, %cst_133 {dimension_numbers = #tpu.dot_dimension_numbers<[1], [0], [0], [1], [0, 0, 1, 1], [], []>} : vector<128x24xbf16>, vector<24x128xbf16>, vector<128x128xf32> -> vector<128x128xf32>
    %102 = arith.addf %96, %101 : vector<128x128xf32>
    %c0_134 = arith.constant 0 : index
    %c0_135 = arith.constant 0 : index
    %c177 = arith.constant 177 : index
    %c0_136 = arith.constant 0 : index
    %103 = vector.load %arg3[%c0_134, %c0_135, %c177, %c0_136] : memref<1x1x434x24xbf16, #tpu.memory_space<vmem>>, vector<1x1x128x24xbf16>
    %104 = vector.shape_cast %103 : vector<1x1x128x24xbf16> to vector<128x24xbf16>
    %c2_137 = arith.constant 2 : index
    %c1_138 = arith.constant 1 : index
    %c0_139 = arith.constant 0 : index
    %c0_140 = arith.constant 0 : index
    %105 = vector.load %arg4[%c2_137, %c1_138, %c0_139, %c0_140] : memref<3x3x24x128xbf16, #tpu.memory_space<vmem>>, vector<1x1x24x128xbf16>
    %106 = vector.shape_cast %105 : vector<1x1x24x128xbf16> to vector<24x128xbf16>
    %cst_141 = arith.constant dense<0.000000e+00> : vector<128x128xf32>
    %107 = tpu.matmul %104, %106, %cst_141 {dimension_numbers = #tpu.dot_dimension_numbers<[1], [0], [0], [1], [0, 0, 1, 1], [], []>} : vector<128x24xbf16>, vector<24x128xbf16>, vector<128x128xf32> -> vector<128x128xf32>
    %108 = arith.addf %102, %107 : vector<128x128xf32>
    %c0_142 = arith.constant 0 : index
    %c0_143 = arith.constant 0 : index
    %c178 = arith.constant 178 : index
    %c0_144 = arith.constant 0 : index
    %109 = vector.load %arg3[%c0_142, %c0_143, %c178, %c0_144] : memref<1x1x434x24xbf16, #tpu.memory_space<vmem>>, vector<1x1x128x24xbf16>
    %110 = vector.shape_cast %109 : vector<1x1x128x24xbf16> to vector<128x24xbf16>
    %c2_145 = arith.constant 2 : index
    %c2_146 = arith.constant 2 : index
    %c0_147 = arith.constant 0 : index
    %c0_148 = arith.constant 0 : index
    %111 = vector.load %arg4[%c2_145, %c2_146, %c0_147, %c0_148] : memref<3x3x24x128xbf16, #tpu.memory_space<vmem>>, vector<1x1x24x128xbf16>
    %112 = vector.shape_cast %111 : vector<1x1x24x128xbf16> to vector<24x128xbf16>
    %cst_149 = arith.constant dense<0.000000e+00> : vector<128x128xf32>
    %113 = tpu.matmul %110, %112, %cst_149 {dimension_numbers = #tpu.dot_dimension_numbers<[1], [0], [0], [1], [0, 0, 1, 1], [], []>} : vector<128x24xbf16>, vector<24x128xbf16>, vector<128x128xf32> -> vector<128x128xf32>
    %114 = arith.addf %108, %113 : vector<128x128xf32>
    %115 = vector.broadcast %0 : vector<1x128xf32> to vector<128x128xf32>
    %116 = arith.addf %114, %115 : vector<128x128xf32>
    %cst_150 = arith.constant 0.000000e+00 : f32
    %117 = vector.broadcast %cst_150 : f32 to vector<128x128xf32>
    %118 = arith.maximumf %116, %117 : vector<128x128xf32>
    %119 = arith.truncf %118 : vector<128x128xf32> to vector<128x128xbf16>
    %c0_151 = arith.constant 0 : index
    %c0_152 = arith.constant 0 : index
    %c128_153 = arith.constant 128 : index
    %c0_154 = arith.constant 0 : index
    %120 = vector.load %arg6[%c0_151, %c0_152, %c128_153, %c0_154] : memref<1x1x384x128xbf16, #tpu.memory_space<vmem>>, vector<1x1x128x128xbf16>
    %121 = vector.shape_cast %120 : vector<1x1x128x128xbf16> to vector<128x128xbf16>
    %122 = vector.shape_cast %119 : vector<128x128xbf16> to vector<1x1x128x128xbf16>
    tpu.vector_store %arg6[%c0_151, %c0_152, %c128_153, %c0_154], %122 {strides = array<i32>} : memref<1x1x384x128xbf16, #tpu.memory_space<vmem>>, vector<1x1x128x128xbf16>,
    %c0_155 = arith.constant 0 : index
    %c0_156 = arith.constant 0 : index
    %c256 = arith.constant 256 : index
    %c0_157 = arith.constant 0 : index
    %123 = vector.load %arg3[%c0_155, %c0_156, %c256, %c0_157] : memref<1x1x434x24xbf16, #tpu.memory_space<vmem>>, vector<1x1x128x24xbf16>
    %124 = vector.shape_cast %123 : vector<1x1x128x24xbf16> to vector<128x24xbf16>
    %c0_158 = arith.constant 0 : index
    %c0_159 = arith.constant 0 : index
    %c0_160 = arith.constant 0 : index
    %c0_161 = arith.constant 0 : index
    %125 = vector.load %arg4[%c0_158, %c0_159, %c0_160, %c0_161] : memref<3x3x24x128xbf16, #tpu.memory_space<vmem>>, vector<1x1x24x128xbf16>
    %126 = vector.shape_cast %125 : vector<1x1x24x128xbf16> to vector<24x128xbf16>
    %cst_162 = arith.constant dense<0.000000e+00> : vector<128x128xf32>
    %127 = tpu.matmul %124, %126, %cst_162 {dimension_numbers = #tpu.dot_dimension_numbers<[1], [0], [0], [1], [0, 0, 1, 1], [], []>} : vector<128x24xbf16>, vector<24x128xbf16>, vector<128x128xf32> -> vector<128x128xf32>
    %c0_163 = arith.constant 0 : index
    %c0_164 = arith.constant 0 : index
    %c257 = arith.constant 257 : index
    %c0_165 = arith.constant 0 : index
    %128 = vector.load %arg3[%c0_163, %c0_164, %c257, %c0_165] : memref<1x1x434x24xbf16, #tpu.memory_space<vmem>>, vector<1x1x128x24xbf16>
    %129 = vector.shape_cast %128 : vector<1x1x128x24xbf16> to vector<128x24xbf16>
    %c0_166 = arith.constant 0 : index
    %c1_167 = arith.constant 1 : index
    %c0_168 = arith.constant 0 : index
    %c0_169 = arith.constant 0 : index
    %130 = vector.load %arg4[%c0_166, %c1_167, %c0_168, %c0_169] : memref<3x3x24x128xbf16, #tpu.memory_space<vmem>>, vector<1x1x24x128xbf16>
    %131 = vector.shape_cast %130 : vector<1x1x24x128xbf16> to vector<24x128xbf16>
    %cst_170 = arith.constant dense<0.000000e+00> : vector<128x128xf32>
    %132 = tpu.matmul %129, %131, %cst_170 {dimension_numbers = #tpu.dot_dimension_numbers<[1], [0], [0], [1], [0, 0, 1, 1], [], []>} : vector<128x24xbf16>, vector<24x128xbf16>, vector<128x128xf32> -> vector<128x128xf32>
    %133 = arith.addf %127, %132 : vector<128x128xf32>
    %c0_171 = arith.constant 0 : index
    %c0_172 = arith.constant 0 : index
    %c258 = arith.constant 258 : index
    %c0_173 = arith.constant 0 : index
    %134 = vector.load %arg3[%c0_171, %c0_172, %c258, %c0_173] : memref<1x1x434x24xbf16, #tpu.memory_space<vmem>>, vector<1x1x128x24xbf16>
    %135 = vector.shape_cast %134 : vector<1x1x128x24xbf16> to vector<128x24xbf16>
    %c0_174 = arith.constant 0 : index
    %c2_175 = arith.constant 2 : index
    %c0_176 = arith.constant 0 : index
    %c0_177 = arith.constant 0 : index
    %136 = vector.load %arg4[%c0_174, %c2_175, %c0_176, %c0_177] : memref<3x3x24x128xbf16, #tpu.memory_space<vmem>>, vector<1x1x24x128xbf16>
    %137 = vector.shape_cast %136 : vector<1x1x24x128xbf16> to vector<24x128xbf16>
    %cst_178 = arith.constant dense<0.000000e+00> : vector<128x128xf32>
    %138 = tpu.matmul %135, %137, %cst_178 {dimension_numbers = #tpu.dot_dimension_numbers<[1], [0], [0], [1], [0, 0, 1, 1], [], []>} : vector<128x24xbf16>, vector<24x128xbf16>, vector<128x128xf32> -> vector<128x128xf32>
    %139 = arith.addf %133, %138 : vector<128x128xf32>
    %c0_179 = arith.constant 0 : index
    %c0_180 = arith.constant 0 : index
    %c280 = arith.constant 280 : index
    %c0_181 = arith.constant 0 : index
    %140 = vector.load %arg3[%c0_179, %c0_180, %c280, %c0_181] : memref<1x1x434x24xbf16, #tpu.memory_space<vmem>>, vector<1x1x128x24xbf16>
    %141 = vector.shape_cast %140 : vector<1x1x128x24xbf16> to vector<128x24xbf16>
    %c1_182 = arith.constant 1 : index
    %c0_183 = arith.constant 0 : index
    %c0_184 = arith.constant 0 : index
    %c0_185 = arith.constant 0 : index
    %142 = vector.load %arg4[%c1_182, %c0_183, %c0_184, %c0_185] : memref<3x3x24x128xbf16, #tpu.memory_space<vmem>>, vector<1x1x24x128xbf16>
    %143 = vector.shape_cast %142 : vector<1x1x24x128xbf16> to vector<24x128xbf16>
    %cst_186 = arith.constant dense<0.000000e+00> : vector<128x128xf32>
    %144 = tpu.matmul %141, %143, %cst_186 {dimension_numbers = #tpu.dot_dimension_numbers<[1], [0], [0], [1], [0, 0, 1, 1], [], []>} : vector<128x24xbf16>, vector<24x128xbf16>, vector<128x128xf32> -> vector<128x128xf32>
    %145 = arith.addf %139, %144 : vector<128x128xf32>
    %c0_187 = arith.constant 0 : index
    %c0_188 = arith.constant 0 : index
    %c281 = arith.constant 281 : index
    %c0_189 = arith.constant 0 : index
    %146 = vector.load %arg3[%c0_187, %c0_188, %c281, %c0_189] : memref<1x1x434x24xbf16, #tpu.memory_space<vmem>>, vector<1x1x128x24xbf16>
    %147 = vector.shape_cast %146 : vector<1x1x128x24xbf16> to vector<128x24xbf16>
    %c1_190 = arith.constant 1 : index
    %c1_191 = arith.constant 1 : index
    %c0_192 = arith.constant 0 : index
    %c0_193 = arith.constant 0 : index
    %148 = vector.load %arg4[%c1_190, %c1_191, %c0_192, %c0_193] : memref<3x3x24x128xbf16, #tpu.memory_space<vmem>>, vector<1x1x24x128xbf16>
    %149 = vector.shape_cast %148 : vector<1x1x24x128xbf16> to vector<24x128xbf16>
    %cst_194 = arith.constant dense<0.000000e+00> : vector<128x128xf32>
    %150 = tpu.matmul %147, %149, %cst_194 {dimension_numbers = #tpu.dot_dimension_numbers<[1], [0], [0], [1], [0, 0, 1, 1], [], []>} : vector<128x24xbf16>, vector<24x128xbf16>, vector<128x128xf32> -> vector<128x128xf32>
    %151 = arith.addf %145, %150 : vector<128x128xf32>
    %c0_195 = arith.constant 0 : index
    %c0_196 = arith.constant 0 : index
    %c282 = arith.constant 282 : index
    %c0_197 = arith.constant 0 : index
    %152 = vector.load %arg3[%c0_195, %c0_196, %c282, %c0_197] : memref<1x1x434x24xbf16, #tpu.memory_space<vmem>>, vector<1x1x128x24xbf16>
    %153 = vector.shape_cast %152 : vector<1x1x128x24xbf16> to vector<128x24xbf16>
    %c1_198 = arith.constant 1 : index
    %c2_199 = arith.constant 2 : index
    %c0_200 = arith.constant 0 : index
    %c0_201 = arith.constant 0 : index
    %154 = vector.load %arg4[%c1_198, %c2_199, %c0_200, %c0_201] : memref<3x3x24x128xbf16, #tpu.memory_space<vmem>>, vector<1x1x24x128xbf16>
    %155 = vector.shape_cast %154 : vector<1x1x24x128xbf16> to vector<24x128xbf16>
    %cst_202 = arith.constant dense<0.000000e+00> : vector<128x128xf32>
    %156 = tpu.matmul %153, %155, %cst_202 {dimension_numbers = #tpu.dot_dimension_numbers<[1], [0], [0], [1], [0, 0, 1, 1], [], []>} : vector<128x24xbf16>, vector<24x128xbf16>, vector<128x128xf32> -> vector<128x128xf32>
    %157 = arith.addf %151, %156 : vector<128x128xf32>
    %c0_203 = arith.constant 0 : index
    %c0_204 = arith.constant 0 : index
    %c304 = arith.constant 304 : index
    %c0_205 = arith.constant 0 : index
    %158 = vector.load %arg3[%c0_203, %c0_204, %c304, %c0_205] : memref<1x1x434x24xbf16, #tpu.memory_space<vmem>>, vector<1x1x128x24xbf16>
    %159 = vector.shape_cast %158 : vector<1x1x128x24xbf16> to vector<128x24xbf16>
    %c2_206 = arith.constant 2 : index
    %c0_207 = arith.constant 0 : index
    %c0_208 = arith.constant 0 : index
    %c0_209 = arith.constant 0 : index
    %160 = vector.load %arg4[%c2_206, %c0_207, %c0_208, %c0_209] : memref<3x3x24x128xbf16, #tpu.memory_space<vmem>>, vector<1x1x24x128xbf16>
    %161 = vector.shape_cast %160 : vector<1x1x24x128xbf16> to vector<24x128xbf16>
    %cst_210 = arith.constant dense<0.000000e+00> : vector<128x128xf32>
    %162 = tpu.matmul %159, %161, %cst_210 {dimension_numbers = #tpu.dot_dimension_numbers<[1], [0], [0], [1], [0, 0, 1, 1], [], []>} : vector<128x24xbf16>, vector<24x128xbf16>, vector<128x128xf32> -> vector<128x128xf32>
    %163 = arith.addf %157, %162 : vector<128x128xf32>
    %c0_211 = arith.constant 0 : index
    %c0_212 = arith.constant 0 : index
    %c305 = arith.constant 305 : index
    %c0_213 = arith.constant 0 : index
    %164 = vector.load %arg3[%c0_211, %c0_212, %c305, %c0_213] : memref<1x1x434x24xbf16, #tpu.memory_space<vmem>>, vector<1x1x128x24xbf16>
    %165 = vector.shape_cast %164 : vector<1x1x128x24xbf16> to vector<128x24xbf16>
    %c2_214 = arith.constant 2 : index
    %c1_215 = arith.constant 1 : index
    %c0_216 = arith.constant 0 : index
    %c0_217 = arith.constant 0 : index
    %166 = vector.load %arg4[%c2_214, %c1_215, %c0_216, %c0_217] : memref<3x3x24x128xbf16, #tpu.memory_space<vmem>>, vector<1x1x24x128xbf16>
    %167 = vector.shape_cast %166 : vector<1x1x24x128xbf16> to vector<24x128xbf16>
    %cst_218 = arith.constant dense<0.000000e+00> : vector<128x128xf32>
    %168 = tpu.matmul %165, %167, %cst_218 {dimension_numbers = #tpu.dot_dimension_numbers<[1], [0], [0], [1], [0, 0, 1, 1], [], []>} : vector<128x24xbf16>, vector<24x128xbf16>, vector<128x128xf32> -> vector<128x128xf32>
    %169 = arith.addf %163, %168 : vector<128x128xf32>
    %c0_219 = arith.constant 0 : index
    %c0_220 = arith.constant 0 : index
    %c306 = arith.constant 306 : index
    %c0_221 = arith.constant 0 : index
    %170 = vector.load %arg3[%c0_219, %c0_220, %c306, %c0_221] : memref<1x1x434x24xbf16, #tpu.memory_space<vmem>>, vector<1x1x128x24xbf16>
    %171 = vector.shape_cast %170 : vector<1x1x128x24xbf16> to vector<128x24xbf16>
    %c2_222 = arith.constant 2 : index
    %c2_223 = arith.constant 2 : index
    %c0_224 = arith.constant 0 : index
    %c0_225 = arith.constant 0 : index
    %172 = vector.load %arg4[%c2_222, %c2_223, %c0_224, %c0_225] : memref<3x3x24x128xbf16, #tpu.memory_space<vmem>>, vector<1x1x24x128xbf16>
    %173 = vector.shape_cast %172 : vector<1x1x24x128xbf16> to vector<24x128xbf16>
    %cst_226 = arith.constant dense<0.000000e+00> : vector<128x128xf32>
    %174 = tpu.matmul %171, %173, %cst_226 {dimension_numbers = #tpu.dot_dimension_numbers<[1], [0], [0], [1], [0, 0, 1, 1], [], []>} : vector<128x24xbf16>, vector<24x128xbf16>, vector<128x128xf32> -> vector<128x128xf32>
    %175 = arith.addf %169, %174 : vector<128x128xf32>
    %176 = vector.broadcast %0 : vector<1x128xf32> to vector<128x128xf32>
    %177 = arith.addf %175, %176 : vector<128x128xf32>
    %cst_227 = arith.constant 0.000000e+00 : f32
    %178 = vector.broadcast %cst_227 : f32 to vector<128x128xf32>
    %179 = arith.maximumf %177, %178 : vector<128x128xf32>
    %180 = arith.truncf %179 : vector<128x128xf32> to vector<128x128xbf16>
    %c0_228 = arith.constant 0 : index
    %c0_229 = arith.constant 0 : index
    %c256_230 = arith.constant 256 : index
    %c0_231 = arith.constant 0 : index
    %181 = vector.load %arg6[%c0_228, %c0_229, %c256_230, %c0_231] : memref<1x1x384x128xbf16, #tpu.memory_space<vmem>>, vector<1x1x128x128xbf16>
    %182 = vector.shape_cast %181 : vector<1x1x128x128xbf16> to vector<128x128xbf16>
    %183 = vector.shape_cast %180 : vector<128x128xbf16> to vector<1x1x128x128xbf16>
    tpu.vector_store %arg6[%c0_228, %c0_229, %c256_230, %c0_231], %183 {strides = array<i32>} : memref<1x1x384x128xbf16, #tpu.memory_space<vmem>>, vector<1x1x128x128xbf16>,
    return
  }
  func.func @transform_0(%arg0: i32, %arg1: i32, %arg2: i32) -> (i32, i32, i32, i32) {
    %c0_i32 = arith.constant 0 : i32
    %c0_i32_0 = arith.constant 0 : i32
    %c0_i32_1 = arith.constant 0 : i32
    return %arg1, %arg2, %c0_i32, %c0_i32_0 : i32, i32, i32, i32
  }
  func.func @transform_1(%arg0: i32, %arg1: i32, %arg2: i32) -> (i32, i32, i32, i32) {
    %c0_i32 = arith.constant 0 : i32
    %c0_i32_0 = arith.constant 0 : i32
    %c0_i32_1 = arith.constant 0 : i32
    %c0_i32_2 = arith.constant 0 : i32
    return %c0_i32, %c0_i32_0, %c0_i32_1, %arg0 : i32, i32, i32, i32
  }
  func.func @transform_2(%arg0: i32, %arg1: i32, %arg2: i32) -> (i32, i32) {
    %c0_i32 = arith.constant 0 : i32
    %c0_i32_0 = arith.constant 0 : i32
    return %c0_i32, %arg0 : i32, i32
  }
  func.func @transform_3(%arg0: i32, %arg1: i32, %arg2: i32) -> (i32, i32, i32, i32) {
    %c0_i32 = arith.constant 0 : i32
    %c0_i32_0 = arith.constant 0 : i32
    return %arg1, %arg2, %c0_i32, %arg0 : i32, i32, i32, i32
  }
}

</mosaic_0001>

<llo_original>
// kernel: tpu_custom_call.1
$region0: #{tpu_custom_call.1}
  #allocation0 [shape = 'u32[]', space=smem, size = 0x4, offset = 0x4, fixed_abs, tag = 'smem constant byte address 0x4 - core index']
  #allocation1 [shape = 'u32[72,128]{1,0:T(1,128)}', space=vmem, size = 0x9000, scoped, tag = 'internal scratch']
  %s0 = inlined_call_operand.vmem [shape: bf16[2,1,434,24], index: 0, kind: input, shape index: {}]
  %s1 = inlined_call_operand.vmem [shape: bf16[3,3,24,128], index: 1, kind: input, shape index: {}]
  %s2 = inlined_call_operand.vmem [shape: f32[1,128], index: 2, kind: input, shape index: {}]
  %s3 = inlined_call_operand.hbm [shape: bf16[2,1,384,128], index: 3, kind: output, shape index: {}]
  %s4 = sld [smem:[#allocation0]]
  $region45: #{tpu_custom_call.1} parent=0
    _
  %s6 = ssub.s32 1, %s4
  %s7 = scalar_select 0, %s6, %s4
  $region1: #{tpu_custom_call.1} parent=0
    #allocation2 [shape = 'u8[196608]{0}', space=vmem, size = 0x30000, scoped, tag = 'output window, operand 0']
    #allocation3 [shape = 's32[2]{0}', space=sflag, size = 0x8, scoped, tag = 'scoped memory for tpu_custom_call.1']
    %8 = vsyncpa [#allocation3], 0
    %s9 = scalar_lea.sflag [#allocation3], 1
    %10 = vsyncpa %s9, 0
    loop: start=0, step=1, limit=4
    $region2: #{tpu_custom_call.1} parent=1 // loop_pre_header
      _
    $region3: #{tpu_custom_call.1} parent=1 // loop_header
      %s12 = sphi 0, %s16
      %p13 = scmp.ge.s32.totalorder %s12, 4
      %s19 = sphi 0, %s38
      %s20 = sphi 0, %s34
      %s21 = sphi 0, %s30
      %s22 = sphi 0, %s19
      %s23 = sphi 0, %s20
      %s24 = sphi 0, %s21
      %s25 = sphi 0, %s22
      %s26 = sphi 0, %s23
      %s27 = sphi 0, %s24
      %s43 = sphi 0, %s45
      %s46 = sphi 0, %s43
      %s47 = sphi 0, %s46
      %s63 = sphi 0, %s47
      %s69 = sphi 0, %s71
      %s72 = sphi 0, %s69
      %s73 = sphi 0, %s72
      %s89 = sphi 0, %s73
      %s95 = sphi 0, %s97
      %s98 = sphi 0, %s95
      %s99 = sphi 0, %s98
      %s115 = sphi 0, %s99
      %s125 = sphi 0, %s127
      %s128 = sphi 0, %s125
      %s129 = sphi 0, %s128
      %s145 = sphi 0, %s129
    $region4: #{tpu_custom_call.1} parent=1 // loop_header_branch
      %15 = sbr.rel (%p13) target = $region8
    $region5: #{tpu_custom_call.1} parent=1 // loop_body
      %s17 = ssub.s32 %s12, 1
      %s18 = ssub.s32 %s12, 2
      %s28 = sadd.s32 1, %s21
      %p29 = scmp.ge.s32.totalorder %s28, 1
      %s30 = scalar_select %p29, 0, %s28
      %s31 = sadd.s32 1, %s20
      %s32 = scalar_select %p29, %s31, %s20
      %p33 = scmp.ge.s32.totalorder %s32, 2
      %s34 = scalar_select %p33, 0, %s32
      %s35 = sadd.s32 1, %s19
      %s36 = scalar_select %p33, %s35, %s19
      %p37 = scmp.ge.s32.totalorder %s36, 1
      %s38 = scalar_select %p37, 0, %s36
      %s39 = ssub.s32 %s20, %s34
      %s40 = ssub.s32 %s21, %s30
      %s41 = sor.u32 %s39, %s40
      %p42 = scmp.eq.s32.totalorder %s41, 0
      %s44 = sadd.s32 %s43, 1
      %s45 = scalar_select %p42, %s43, %s44
      %p48 = pneg %p42
      %p49 = scmp.eq.s32.totalorder %s12, 1
      %p50 = por %p48, %p49
      %p51 = scmp.ne.s32.totalorder %s43, %s46
      %p52 = scmp.eq.s32.totalorder %s12, 0
      %p53 = por %p51, %p52
      %p54 = scmp.ne.s32.totalorder %s43, %s46
      %p55 = scmp.eq.s32.totalorder %s17, 1
      %p56 = por %p54, %p55
      %p57 = scmp.ne.s32.totalorder %s46, %s47
      %p58 = scmp.eq.s32.totalorder %s17, 0
      %p59 = por %p57, %p58
      %p60 = scmp.ne.s32.totalorder %s46, %s47
      %p61 = scmp.eq.s32.totalorder %s18, 1
      %p62 = por %p60, %p61
      %p64 = scmp.ne.s32.totalorder %s47, %s63
      %p65 = scmp.eq.s32.totalorder %s18, 0
      %p66 = por %p64, %p65
      %s67 = ssub.s32 %s19, %s38
      %p68 = scmp.eq.s32.totalorder %s67, 0
      %s70 = sadd.s32 %s69, 1
      %s71 = scalar_select %p68, %s69, %s70
      %p74 = pneg %p68
      %p75 = scmp.eq.s32.totalorder %s12, 1
      %p76 = por %p74, %p75
      %p77 = scmp.ne.s32.totalorder %s69, %s72
      %p78 = scmp.eq.s32.totalorder %s12, 0
      %p79 = por %p77, %p78
      %p80 = scmp.ne.s32.totalorder %s69, %s72
      %p81 = scmp.eq.s32.totalorder %s17, 1
      %p82 = por %p80, %p81
      %p83 = scmp.ne.s32.totalorder %s72, %s73
      %p84 = scmp.eq.s32.totalorder %s17, 0
      %p85 = por %p83, %p84
      %p86 = scmp.ne.s32.totalorder %s72, %s73
      %p87 = scmp.eq.s32.totalorder %s18, 1
      %p88 = por %p86, %p87
      %p90 = scmp.ne.s32.totalorder %s73, %s89
      %p91 = scmp.eq.s32.totalorder %s18, 0
      %p92 = por %p90, %p91
      %s93 = ssub.s32 %s19, %s38
      %p94 = scmp.eq.s32.totalorder %s93, 0
      %s96 = sadd.s32 %s95, 1
      %s97 = scalar_select %p94, %s95, %s96
      %p100 = pneg %p94
      %p101 = scmp.eq.s32.totalorder %s12, 1
      %p102 = por %p100, %p101
      %p103 = scmp.ne.s32.totalorder %s95, %s98
      %p104 = scmp.eq.s32.totalorder %s12, 0
      %p105 = por %p103, %p104
      %p106 = scmp.ne.s32.totalorder %s95, %s98
      %p107 = scmp.eq.s32.totalorder %s17, 1
      %p108 = por %p106, %p107
      %p109 = scmp.ne.s32.totalorder %s98, %s99
      %p110 = scmp.eq.s32.totalorder %s17, 0
      %p111 = por %p109, %p110
      %p112 = scmp.ne.s32.totalorder %s98, %s99
      %p113 = scmp.eq.s32.totalorder %s18, 1
      %p114 = por %p112, %p113
      %p116 = scmp.ne.s32.totalorder %s99, %s115
      %p117 = scmp.eq.s32.totalorder %s18, 0
      %p118 = por %p116, %p117
      %s119 = ssub.s32 %s20, %s34
      %s120 = ssub.s32 %s21, %s30
      %s121 = sor.u32 %s119, %s120
      %s122 = ssub.s32 %s19, %s38
      %s123 = sor.u32 %s121, %s122
      %p124 = scmp.eq.s32.totalorder %s123, 0
      %s126 = sadd.s32 %s125, 1
      %s127 = scalar_select %p124, %s125, %s126
      %p130 = pneg %p124
      %p131 = scmp.eq.s32.totalorder %s12, 1
      %p132 = por %p130, %p131
      %p133 = scmp.ne.s32.totalorder %s125, %s128
      %p134 = scmp.eq.s32.totalorder %s12, 0
      %p135 = por %p133, %p134
      %p136 = scmp.ne.s32.totalorder %s125, %s128
      %p137 = scmp.eq.s32.totalorder %s17, 1
      %p138 = por %p136, %p137
      %p139 = scmp.ne.s32.totalorder %s128, %s129
      %p140 = scmp.eq.s32.totalorder %s17, 0
      %p141 = por %p139, %p140
      %p142 = scmp.ne.s32.totalorder %s128, %s129
      %p143 = scmp.eq.s32.totalorder %s18, 1
      %p144 = por %p142, %p143
      %p146 = scmp.ne.s32.totalorder %s129, %s145
      %p147 = scmp.eq.s32.totalorder %s18, 0
      %p148 = por %p146, %p147
      %p149 = scmp.le.s32.totalorder 1, %s12
      %p150 = scmp.lt.s32.totalorder %s12, 3
      %p151 = pnand %p149, %p150
      %p152 = pneg %p151
      // Predicated region
      $region9: #{tpu_custom_call.1} parent=5 // pred_check
        _
      $region10: #{tpu_custom_call.1} parent=5 // pred_check_branch
        %154 = sbr.rel (%p151) target = $region12
      $region11: #{tpu_custom_call.1} parent=5 // pred_region
        %s155 = ssub.s32 %s12, 1
        // Predicated region
        $region13: #{tpu_custom_call.1} parent=11 // pred_check
          %p156 = pneg %p85
        $region14: #{tpu_custom_call.1} parent=11 // pred_check_branch
          %158 = sbr.rel (%p156) target = $region16
        $region15: #{tpu_custom_call.1} parent=11 // pred_region
          %p159 = scmp.lt.s32.totalorder %s22, 0
          %s160 = scalar_select %p159, %s22, 0
          %s161 = smul.addr %s160, 4
          %s162 = scalar_lea.vmem %s1, %s161
        $region16: #{tpu_custom_call.1} parent=11 // pred_fallthru
          _
        // Predicated region
        $region17: #{tpu_custom_call.1} parent=11 // pred_check
          %p163 = pneg %p111
        $region18: #{tpu_custom_call.1} parent=11 // pred_check_branch
          %165 = sbr.rel (%p163) target = $region20
        $region19: #{tpu_custom_call.1} parent=11 // pred_region
          %p166 = scmp.lt.s32.totalorder %s22, 0
          %s167 = scalar_select %p166, %s22, 0
          %s168 = scalar_lea.vmem %s2, %s167
        $region20: #{tpu_custom_call.1} parent=11 // pred_fallthru
          _
      $region12: #{tpu_custom_call.1} parent=5 // pred_fallthru
        _
      %p169 = scmp.lt.s32.totalorder %s12, 2
      // Predicated region
      $region21: #{tpu_custom_call.1} parent=5 // pred_check
        %p170 = pneg %p169
      $region22: #{tpu_custom_call.1} parent=5 // pred_check_branch
        %172 = sbr.rel (%p170) target = $region24
      $region23: #{tpu_custom_call.1} parent=5 // pred_region
        // Predicated region
        $region25: #{tpu_custom_call.1} parent=23 // pred_check
          %p173 = pneg %p53
        $region26: #{tpu_custom_call.1} parent=23 // pred_check_branch
          %175 = sbr.rel (%p173) target = $region28
        $region27: #{tpu_custom_call.1} parent=23 // pred_region
          %p176 = scmp.lt.s32.totalorder %s20, 1
          %s177 = scalar_select %p176, %s20, 1
          %p178 = scmp.lt.s32.totalorder %s21, 0
          %s179 = scalar_select %p178, %s21, 0
          %s180 = smul.addr %s179, 55
          %s181 = smul.addr %s177, 55
          %s182 = sadd.s32 %s180, %s181
          %s183 = smul.addr %s182, 4
          %s184 = scalar_lea.vmem %s0, %s183
        $region28: #{tpu_custom_call.1} parent=23 // pred_fallthru
          _
      $region24: #{tpu_custom_call.1} parent=5 // pred_fallthru
        _
      %p185 = scmp.le.s32.totalorder 1, %s12
      %p186 = scmp.lt.s32.totalorder %s12, 3
      %p187 = pnand %p185, %p186
      %p188 = pneg %p187
      // Predicated region
      $region29: #{tpu_custom_call.1} parent=5 // pred_check
        _
      $region30: #{tpu_custom_call.1} parent=5 // pred_check_branch
        %190 = sbr.rel (%p187) target = $region32
      $region31: #{tpu_custom_call.1} parent=5 // pred_region
        %s191 = ssub.s32 %s12, 1
        %p192 = scmp.lt.s32.totalorder %s23, 1
        %s193 = scalar_select %p192, %s23, 1
        %p194 = scmp.lt.s32.totalorder %s24, 0
        %s195 = scalar_select %p194, %s24, 0
        %s196 = smul.addr %s195, 55
        %s197 = smul.addr %s193, 55
        %s198 = sadd.s32 %s196, %s197
        %s199 = smul.addr %s198, 4
        %s200 = scalar_lea.vmem %s0, %s199
        %p201 = pneg %p59
        %p202 = pneg %p56
        %p203 = scmp.lt.s32.totalorder %s22, 0
        %s204 = scalar_select %p203, %s22, 0
        %s205 = smul.addr %s204, 4
        %s206 = scalar_lea.vmem %s1, %s205
        %p207 = pneg %p85
        %p208 = pneg %p82
        %p209 = scmp.lt.s32.totalorder %s22, 0
        %s210 = scalar_select %p209, %s22, 0
        %s211 = scalar_lea.vmem %s2, %s210
        %p212 = pneg %p111
        %p213 = pneg %p108
        %p214 = pneg %p141
        %p215 = pneg %p138
        %s216 = sand.u32 %s128, 1
        %s217 = scalar_lea.sflag [#allocation3], %s216
        %s218 = sand.u32 %s128, 1
        %s219 = smul.addr %s218, 192
        %s220 = scalar_lea.vmem [#allocation2], %s219
        %p221 = scmp.lt.s32.totalorder %s23, 1
        %s222 = scalar_select %p221, %s23, 1
        %p223 = scmp.lt.s32.totalorder %s24, 0
        %s224 = scalar_select %p223, %s24, 0
        %s225 = smul.addr %s224, 55
        %s226 = smul.addr %s222, 55
        %s227 = sadd.s32 %s225, %s226
        %s228 = smul.addr %s227, 4
        %s229 = scalar_lea.vmem %s0, %s228
        %p230 = scmp.lt.s32.totalorder %s22, 0
        %s231 = scalar_select %p230, %s22, 0
        %s232 = smul.addr %s231, 4
        %s233 = scalar_lea.vmem %s1, %s232
        %p234 = scmp.lt.s32.totalorder %s22, 0
        %s235 = scalar_select %p234, %s22, 0
        %s236 = scalar_lea.vmem %s2, %s235
        %v238 = vld [vmem:[%s236] sm:$0x1]
        %v239 = vld [vmem:[%s229] sm:$0xf]
        %v240 = vld [vmem:[%s229 + $0x4] sm:$0xf]
        %v241 = vld [vmem:[%s229 + $0x8] sm:$0xf]
        %v242 = vld [vmem:[%s229 + $0xc] sm:$0xf]
        %v243 = vld [vmem:[%s229 + $0x10] sm:$0xf]
        %v244 = vld [vmem:[%s229 + $0x14] sm:$0xf]
        %v245 = vld [vmem:[%s229 + $0x18] sm:$0xf]
        %v246 = vld [vmem:[%s229 + $0x1c] sm:$0xf]
        %v247 = vld [vmem:[%s229 + $0x20] sm:$0xf]
        %v248 = vld [vmem:[%s229 + $0x24] sm:$0xf]
        %v249 = vld [vmem:[%s229 + $0x28] sm:$0xf]
        %v250 = vld [vmem:[%s229 + $0x2c] sm:$0xf]
        %v251 = vld [vmem:[%s229 + $0x30] sm:$0xf]
        %v252 = vld [vmem:[%s229 + $0x34] sm:$0xf]
        %v253 = vld [vmem:[%s229 + $0x38] sm:$0xf]
        %v254 = vld [vmem:[%s229 + $0x3c] sm:$0xf]
        %v255 = vld [vmem:[%s233] sm:$0xf]
        %v256 = vld [vmem:[%s233 + $0x4] sm:$0xf]
        %v257 = vld [vmem:[%s233 + $0x8] sm:$0xf]
        %v258 = vld [vmem:[%s229 + $0x40] sm:$0x1]
        %s259 = scalar_lea.vmem %s233, 12
        %v260 = vld [vmem:[%s259] sm:$0xf]
        %v261 = vld [vmem:[%s259 + $0x4] sm:$0xf]
        %v262 = vld [vmem:[%s259 + $0x8] sm:$0xf]
        %v280 = vunpack.c.l.b16 %v239
        %v281 = vunpack.c.l.b16 %v240
        %v282 = vunpack.c.l.b16 %v241
        %v283 = vunpack.c.l.b16 %v242
        %v284 = vunpack.c.l.b16 %v243
        %v285 = vunpack.c.l.b16 %v244
        %v286 = vunpack.c.l.b16 %v245
        %v287 = vunpack.c.l.b16 %v246
        %v288 = vunpack.c.l.b16 %v247
        %v289 = vunpack.c.l.b16 %v248
        %v290 = vunpack.c.l.b16 %v249
        %v291 = vunpack.c.l.b16 %v250
        %v292 = vunpack.c.l.b16 %v251
        %v293 = vunpack.c.l.b16 %v252
        %v294 = vunpack.c.l.b16 %v253
        %v295 = vunpack.c.l.b16 %v254
        %v296 = vunpack.c.l.b16 %v258
        %v297 = vpack.c.b16 %v281, %v280
        %v298 = vpack.c.b16 %v283, %v282
        %v299 = vpack.c.b16 %v285, %v284
        %v300 = vpack.c.b16 %v287, %v286
        %v301 = vpack.c.b16 %v289, %v288
        %v302 = vpack.c.b16 %v291, %v290
        %v303 = vpack.c.b16 %v293, %v292
        %v304 = vpack.c.b16 %v295, %v294
        %v305 = vpack.c.b16 %v296, %v296
        %vm306 = vsmask.f32 7424
        %v308 = vshrl.u32 %v297, 16
        %v310 = vshll.u32 %v297, 16
        %v312 = vrot.slane %v310, 1
        %v313 = vor.u32 %v308, %v312
        %v315 = vshll.u32 %v298, 16
        %v317 = vrot.slane %v315, 1
        %v318 = vsel %vm306, %v313, %v317
        %v319 = vshrl.u32 %v298, 16
        %v321 = vor.u32 %v319, %v317
        %v323 = vshll.u32 %v299, 16
        %v325 = vrot.slane %v323, 1
        %v326 = vsel %vm306, %v321, %v325
        %v327 = vshrl.u32 %v299, 16
        %v329 = vor.u32 %v327, %v325
        %v331 = vshll.u32 %v300, 16
        %v333 = vrot.slane %v331, 1
        %v334 = vsel %vm306, %v329, %v333
        %v335 = vshrl.u32 %v300, 16
        %v337 = vor.u32 %v335, %v333
        %v339 = vshll.u32 %v301, 16
        %v341 = vrot.slane %v339, 1
        %v342 = vsel %vm306, %v337, %v341
        %v343 = vshrl.u32 %v301, 16
        %v345 = vor.u32 %v343, %v341
        %v347 = vshll.u32 %v302, 16
        %v349 = vrot.slane %v347, 1
        %v350 = vsel %vm306, %v345, %v349
        %v351 = vshrl.u32 %v302, 16
        %v353 = vor.u32 %v351, %v349
        %v355 = vshll.u32 %v303, 16
        %v357 = vrot.slane %v355, 1
        %v358 = vsel %vm306, %v353, %v357
        %v359 = vshrl.u32 %v303, 16
        %v361 = vor.u32 %v359, %v357
        %v363 = vshll.u32 %v304, 16
        %v365 = vrot.slane %v363, 1
        %v366 = vsel %vm306, %v361, %v365
        %v367 = vshrl.u32 %v304, 16
        %v369 = vor.u32 %v367, %v365
        %v371 = vshll.u32 %v305, 16
        %v373 = vrot.slane %v371, 1
        %v374 = vsel %vm306, %v369, %v373
        %v378 = vunpack.c.l.b16 %v260
        %v379 = vunpack.c.l.b16 %v261
        %v380 = vunpack.c.l.b16 %v262
        %v381 = vpack.c.b16 %v379, %v378
        %v382 = vpack.c.b16 %v380, %v380
        %vm384 = vcmask 195584
        %v386 = vsel %vm384, %v318, 0
        %v389 = vsel %vm384, %v326, 0
        %v392 = vsel %vm384, %v334, 0
        %v395 = vsel %vm384, %v342, 0
        %v398 = vsel %vm384, %v350, 0
        %v401 = vsel %vm384, %v358, 0
        %v404 = vsel %vm384, %v366, 0
        %v407 = vsel %vm384, %v374, 0
        %vm409 = vcmask 1043456
        %v411 = vsel %vm409, %v382, 0
        %413 = vmatpush.bf16.msra.mxu0 0
        %414 = vmatpush.bf16.msra.mxu0 0
        %415 = vmatpush.bf16.msra.mxu0 0
        %416 = vmatpush.bf16.msra.mxu0 0
        %417 = vmatpush.bf16.msra.mxu0 0
        %418 = vmatpush.bf16.msra.mxu0 0
        %419 = vmatpush.bf16.msra.mxu0 %v411
        %420 = vmatpush.bf16.msra.mxu0 %v381
        %421 = vmatmul.bf16.gmra.mxu0 %v386
        %v422 = vpop.f32.mrf.mxu0
        %v423 = vadd.f32 0.0, %v422
        %v424 = vpop.f32.mrf.mxu0
        %v425 = vadd.f32 0.0, %v424
        %426 = vmatmul.bf16.gmra.mxu0 %v389
        %v427 = vpop.f32.mrf.mxu0
        %v428 = vadd.f32 0.0, %v427
        %v429 = vpop.f32.mrf.mxu0
        %v430 = vadd.f32 0.0, %v429
        %431 = vmatmul.bf16.gmra.mxu0 %v392
        %v432 = vpop.f32.mrf.mxu0
        %v433 = vadd.f32 0.0, %v432
        %v434 = vpop.f32.mrf.mxu0
        %v435 = vadd.f32 0.0, %v434
        %436 = vmatmul.bf16.gmra.mxu0 %v395
        %v437 = vpop.f32.mrf.mxu0
        %v438 = vadd.f32 0.0, %v437
        %v439 = vpop.f32.mrf.mxu0
        %v440 = vadd.f32 0.0, %v439
        %441 = vmatmul.bf16.gmra.mxu0 %v398
        %v442 = vpop.f32.mrf.mxu0
        %v443 = vadd.f32 0.0, %v442
        %v444 = vpop.f32.mrf.mxu0
        %v445 = vadd.f32 0.0, %v444
        %446 = vmatmul.bf16.gmra.mxu0 %v401
        %v447 = vpop.f32.mrf.mxu0
        %v448 = vadd.f32 0.0, %v447
        %v449 = vpop.f32.mrf.mxu0
        %v450 = vadd.f32 0.0, %v449
        %451 = vmatmul.bf16.gmra.mxu0 %v404
        %v452 = vpop.f32.mrf.mxu0
        %v453 = vadd.f32 0.0, %v452
        %v454 = vpop.f32.mrf.mxu0
        %v455 = vadd.f32 0.0, %v454
        %456 = vmatmul.bf16.gmra.mxu0 %v407
        %v457 = vpop.f32.mrf.mxu0
        %v458 = vadd.f32 0.0, %v457
        %v459 = vpop.f32.mrf.mxu0
        %v460 = vadd.f32 0.0, %v459
        %461 = vdwg.mxu0
        %v465 = vunpack.c.l.b16 %v255
        %v466 = vunpack.c.l.b16 %v256
        %v467 = vunpack.c.l.b16 %v257
        %v468 = vpack.c.b16 %v466, %v465
        %v469 = vpack.c.b16 %v467, %v467
        %v471 = vsel %vm384, %v297, 0
        %v473 = vsel %vm384, %v298, 0
        %v475 = vsel %vm384, %v299, 0
        %v477 = vsel %vm384, %v300, 0
        %v479 = vsel %vm384, %v301, 0
        %v481 = vsel %vm384, %v302, 0
        %v483 = vsel %vm384, %v303, 0
        %v485 = vsel %vm384, %v304, 0
        %v488 = vsel %vm409, %v469, 0
        %490 = vmatpush.bf16.msra.mxu0 0
        %491 = vmatpush.bf16.msra.mxu0 0
        %492 = vmatpush.bf16.msra.mxu0 0
        %493 = vmatpush.bf16.msra.mxu0 0
        %494 = vmatpush.bf16.msra.mxu0 0
        %495 = vmatpush.bf16.msra.mxu0 0
        %496 = vmatpush.bf16.msra.mxu0 %v488
        %497 = vmatpush.bf16.msra.mxu0 %v468
        %498 = vmatmul.bf16.gmra.mxu0 %v471
        %v499 = vpop.f32.mrf.mxu0
        %v500 = vadd.f32 %v423, %v499
        %v501 = vpop.f32.mrf.mxu0
        %v502 = vadd.f32 %v425, %v501
        %503 = vmatmul.bf16.gmra.mxu0 %v473
        %v504 = vpop.f32.mrf.mxu0
        %v505 = vadd.f32 %v428, %v504
        %v506 = vpop.f32.mrf.mxu0
        %v507 = vadd.f32 %v430, %v506
        %508 = vmatmul.bf16.gmra.mxu0 %v475
        %v509 = vpop.f32.mrf.mxu0
        %v510 = vadd.f32 %v433, %v509
        %v511 = vpop.f32.mrf.mxu0
        %v512 = vadd.f32 %v435, %v511
        %513 = vmatmul.bf16.gmra.mxu0 %v477
        %v514 = vpop.f32.mrf.mxu0
        %v515 = vadd.f32 %v438, %v514
        %v516 = vpop.f32.mrf.mxu0
        %v517 = vadd.f32 %v440, %v516
        %518 = vmatmul.bf16.gmra.mxu0 %v479
        %v519 = vpop.f32.mrf.mxu0
        %v520 = vadd.f32 %v443, %v519
        %v521 = vpop.f32.mrf.mxu0
        %v522 = vadd.f32 %v445, %v521
        %523 = vmatmul.bf16.gmra.mxu0 %v481
        %v524 = vpop.f32.mrf.mxu0
        %v525 = vadd.f32 %v448, %v524
        %v526 = vpop.f32.mrf.mxu0
        %v527 = vadd.f32 %v450, %v526
        %528 = vmatmul.bf16.gmra.mxu0 %v483
        %v529 = vpop.f32.mrf.mxu0
        %v530 = vadd.f32 %v453, %v529
        %v531 = vpop.f32.mrf.mxu0
        %v532 = vadd.f32 %v455, %v531
        %533 = vmatmul.bf16.gmra.mxu0 %v485
        %v534 = vpop.f32.mrf.mxu0
        %v535 = vadd.f32 %v458, %v534
        %v536 = vpop.f32.mrf.mxu0
        %v537 = vadd.f32 %v460, %v536
        %538 = vdwg.mxu0
        %v539 = vld [vmem:[%s229] sm:$0xe]
        %s540 = scalar_lea.vmem %s233, 24
        %v541 = vld [vmem:[%s540] sm:$0xf]
        %v542 = vld [vmem:[%s540 + $0x4] sm:$0xf]
        %v543 = vld [vmem:[%s540 + $0x8] sm:$0xf]
        %v545 = vunpack.c.l.b16 %v539
        %v546 = vpack.c.b16 %v281, %v545
        %vm547 = vcmask 1046528
        %v548 = vrot.slane %v546, 1
        %v549 = vrot.slane %v298, 1
        %v550 = vsel %vm547, %v548, %v549
        %v551 = vrot.slane %v299, 1
        %v552 = vsel %vm547, %v549, %v551
        %v553 = vrot.slane %v300, 1
        %v554 = vsel %vm547, %v551, %v553
        %v555 = vrot.slane %v301, 1
        %v556 = vsel %vm547, %v553, %v555
        %v557 = vrot.slane %v302, 1
        %v558 = vsel %vm547, %v555, %v557
        %v559 = vrot.slane %v303, 1
        %v560 = vsel %vm547, %v557, %v559
        %v561 = vrot.slane %v304, 1
        %v562 = vsel %vm547, %v559, %v561
        %v563 = vrot.slane %v305, 1
        %v564 = vsel %vm547, %v561, %v563
        %v568 = vunpack.c.l.b16 %v541
        %v569 = vunpack.c.l.b16 %v542
        %v570 = vunpack.c.l.b16 %v543
        %v571 = vpack.c.b16 %v569, %v568
        %v572 = vpack.c.b16 %v570, %v570
        %v575 = vsel %vm384, %v550, 0
        %v578 = vsel %vm384, %v552, 0
        %v581 = vsel %vm384, %v554, 0
        %v584 = vsel %vm384, %v556, 0
        %v587 = vsel %vm384, %v558, 0
        %v590 = vsel %vm384, %v560, 0
        %v593 = vsel %vm384, %v562, 0
        %v596 = vsel %vm384, %v564, 0
        %v599 = vsel %vm409, %v572, 0
        %601 = vmatpush.bf16.msra.mxu0 0
        %602 = vmatpush.bf16.msra.mxu0 0
        %603 = vmatpush.bf16.msra.mxu0 0
        %604 = vmatpush.bf16.msra.mxu0 0
        %605 = vmatpush.bf16.msra.mxu0 0
        %606 = vmatpush.bf16.msra.mxu0 0
        %607 = vmatpush.bf16.msra.mxu0 %v599
        %608 = vmatpush.bf16.msra.mxu0 %v571
        %609 = vmatmul.bf16.gmra.mxu0 %v575
        %v610 = vpop.f32.mrf.mxu0
        %v611 = vadd.f32 0.0, %v610
        %v612 = vpop.f32.mrf.mxu0
        %v613 = vadd.f32 0.0, %v612
        %614 = vmatmul.bf16.gmra.mxu0 %v578
        %v615 = vpop.f32.mrf.mxu0
        %v616 = vadd.f32 0.0, %v615
        %v617 = vpop.f32.mrf.mxu0
        %v618 = vadd.f32 0.0, %v617
        %619 = vmatmul.bf16.gmra.mxu0 %v581
        %v620 = vpop.f32.mrf.mxu0
        %v621 = vadd.f32 0.0, %v620
        %v622 = vpop.f32.mrf.mxu0
        %v623 = vadd.f32 0.0, %v622
        %624 = vmatmul.bf16.gmra.mxu0 %v584
        %v625 = vpop.f32.mrf.mxu0
        %v626 = vadd.f32 0.0, %v625
        %v627 = vpop.f32.mrf.mxu0
        %v628 = vadd.f32 0.0, %v627
        %629 = vmatmul.bf16.gmra.mxu0 %v587
        %v630 = vpop.f32.mrf.mxu0
        %v631 = vadd.f32 0.0, %v630
        %v632 = vpop.f32.mrf.mxu0
        %v633 = vadd.f32 0.0, %v632
        %634 = vmatmul.bf16.gmra.mxu0 %v590
        %v635 = vpop.f32.mrf.mxu0
        %v636 = vadd.f32 0.0, %v635
        %v637 = vpop.f32.mrf.mxu0
        %v638 = vadd.f32 0.0, %v637
        %639 = vmatmul.bf16.gmra.mxu0 %v593
        %v640 = vpop.f32.mrf.mxu0
        %v641 = vadd.f32 0.0, %v640
        %v642 = vpop.f32.mrf.mxu0
        %v643 = vadd.f32 0.0, %v642
        %644 = vmatmul.bf16.gmra.mxu0 %v596
        %v645 = vpop.f32.mrf.mxu0
        %v646 = vadd.f32 0.0, %v645
        %v647 = vpop.f32.mrf.mxu0
        %v648 = vadd.f32 0.0, %v647
        %649 = vdwg.mxu0
        %v650 = vadd.f32 %v500, %v611
        %v651 = vadd.f32 %v502, %v613
        %v652 = vadd.f32 %v505, %v616
        %v653 = vadd.f32 %v507, %v618
        %v654 = vadd.f32 %v510, %v621
        %v655 = vadd.f32 %v512, %v623
        %v656 = vadd.f32 %v515, %v626
        %v657 = vadd.f32 %v517, %v628
        %v658 = vadd.f32 %v520, %v631
        %v659 = vadd.f32 %v522, %v633
        %v660 = vadd.f32 %v525, %v636
        %v661 = vadd.f32 %v527, %v638
        %v662 = vadd.f32 %v530, %v641
        %v663 = vadd.f32 %v532, %v643
        %v664 = vadd.f32 %v535, %v646
        %v665 = vadd.f32 %v537, %v648
        %v666 = vld [vmem:[%s229 + $0xc] sm:$0xf]
        %v667 = vld [vmem:[%s229 + $0x10] sm:$0xf]
        %v668 = vld [vmem:[%s229 + $0x14] sm:$0xf]
        %v669 = vld [vmem:[%s229 + $0x18] sm:$0xf]
        %v670 = vld [vmem:[%s229 + $0x1c] sm:$0xf]
        %v671 = vld [vmem:[%s229 + $0x20] sm:$0xf]
        %v672 = vld [vmem:[%s229 + $0x24] sm:$0xf]
        %v673 = vld [vmem:[%s229 + $0x28] sm:$0xf]
        %v674 = vld [vmem:[%s229 + $0x2c] sm:$0xf]
        %v675 = vld [vmem:[%s229 + $0x30] sm:$0xf]
        %v676 = vld [vmem:[%s229 + $0x34] sm:$0xf]
        %v677 = vld [vmem:[%s229 + $0x38] sm:$0xf]
        %v678 = vld [vmem:[%s229 + $0x3c] sm:$0xf]
        %v679 = vld [vmem:[%s229 + $0x40] sm:$0xf]
        %v680 = vld [vmem:[%s229 + $0x44] sm:$0xf]
        %v681 = vld [vmem:[%s229 + $0x48] sm:$0xf]
        %s682 = scalar_lea.vmem %s233, 36
        %v683 = vld [vmem:[%s682] sm:$0xf]
        %v684 = vld [vmem:[%s682 + $0x4] sm:$0xf]
        %v685 = vld [vmem:[%s682 + $0x8] sm:$0xf]
        %v702 = vunpack.c.l.b16 %v666
        %v703 = vunpack.c.l.b16 %v667
        %v704 = vunpack.c.l.b16 %v668
        %v705 = vunpack.c.l.b16 %v669
        %v706 = vunpack.c.l.b16 %v670
        %v707 = vunpack.c.l.b16 %v671
        %v708 = vunpack.c.l.b16 %v672
        %v709 = vunpack.c.l.b16 %v673
        %v710 = vunpack.c.l.b16 %v674
        %v711 = vunpack.c.l.b16 %v675
        %v712 = vunpack.c.l.b16 %v676
        %v713 = vunpack.c.l.b16 %v677
        %v714 = vunpack.c.l.b16 %v678
        %v715 = vunpack.c.l.b16 %v679
        %v716 = vunpack.c.l.b16 %v680
        %v717 = vunpack.c.l.b16 %v681
        %v718 = vpack.c.b16 %v703, %v702
        %v719 = vpack.c.b16 %v705, %v704
        %v720 = vpack.c.b16 %v707, %v706
        %v721 = vpack.c.b16 %v709, %v708
        %v722 = vpack.c.b16 %v711, %v710
        %v723 = vpack.c.b16 %v713, %v712
        %v724 = vpack.c.b16 %v715, %v714
        %v725 = vpack.c.b16 %v717, %v716
        %v729 = vunpack.c.l.b16 %v683
        %v730 = vunpack.c.l.b16 %v684
        %v731 = vunpack.c.l.b16 %v685
        %v732 = vpack.c.b16 %v730, %v729
        %v733 = vpack.c.b16 %v731, %v731
        %v736 = vsel %vm384, %v718, 0
        %v739 = vsel %vm384, %v719, 0
        %v742 = vsel %vm384, %v720, 0
        %v745 = vsel %vm384, %v721, 0
        %v748 = vsel %vm384, %v722, 0
        %v751 = vsel %vm384, %v723, 0
        %v754 = vsel %vm384, %v724, 0
        %v757 = vsel %vm384, %v725, 0
        %v760 = vsel %vm409, %v733, 0
        %762 = vmatpush.bf16.msra.mxu0 0
        %763 = vmatpush.bf16.msra.mxu0 0
        %764 = vmatpush.bf16.msra.mxu0 0
        %765 = vmatpush.bf16.msra.mxu0 0
        %766 = vmatpush.bf16.msra.mxu0 0
        %767 = vmatpush.bf16.msra.mxu0 0
        %768 = vmatpush.bf16.msra.mxu0 %v760
        %769 = vmatpush.bf16.msra.mxu0 %v732
        %770 = vmatmul.bf16.gmra.mxu0 %v736
        %v771 = vpop.f32.mrf.mxu0
        %v772 = vadd.f32 0.0, %v771
        %v773 = vpop.f32.mrf.mxu0
        %v774 = vadd.f32 0.0, %v773
        %775 = vmatmul.bf16.gmra.mxu0 %v739
        %v776 = vpop.f32.mrf.mxu0
        %v777 = vadd.f32 0.0, %v776
        %v778 = vpop.f32.mrf.mxu0
        %v779 = vadd.f32 0.0, %v778
        %780 = vmatmul.bf16.gmra.mxu0 %v742
        %v781 = vpop.f32.mrf.mxu0
        %v782 = vadd.f32 0.0, %v781
        %v783 = vpop.f32.mrf.mxu0
        %v784 = vadd.f32 0.0, %v783
        %785 = vmatmul.bf16.gmra.mxu0 %v745
        %v786 = vpop.f32.mrf.mxu0
        %v787 = vadd.f32 0.0, %v786
        %v788 = vpop.f32.mrf.mxu0
        %v789 = vadd.f32 0.0, %v788
        %790 = vmatmul.bf16.gmra.mxu0 %v748
        %v791 = vpop.f32.mrf.mxu0
        %v792 = vadd.f32 0.0, %v791
        %v793 = vpop.f32.mrf.mxu0
        %v794 = vadd.f32 0.0, %v793
        %795 = vmatmul.bf16.gmra.mxu0 %v751
        %v796 = vpop.f32.mrf.mxu0
        %v797 = vadd.f32 0.0, %v796
        %v798 = vpop.f32.mrf.mxu0
        %v799 = vadd.f32 0.0, %v798
        %800 = vmatmul.bf16.gmra.mxu0 %v754
        %v801 = vpop.f32.mrf.mxu0
        %v802 = vadd.f32 0.0, %v801
        %v803 = vpop.f32.mrf.mxu0
        %v804 = vadd.f32 0.0, %v803
        %805 = vmatmul.bf16.gmra.mxu0 %v757
        %v806 = vpop.f32.mrf.mxu0
        %v807 = vadd.f32 0.0, %v806
        %v808 = vpop.f32.mrf.mxu0
        %v809 = vadd.f32 0.0, %v808
        %810 = vdwg.mxu0
        %v811 = vadd.f32 %v650, %v772
        %v812 = vadd.f32 %v651, %v774
        %v813 = vadd.f32 %v652, %v777
        %v814 = vadd.f32 %v653, %v779
        %v815 = vadd.f32 %v654, %v782
        %v816 = vadd.f32 %v655, %v784
        %v817 = vadd.f32 %v656, %v787
        %v818 = vadd.f32 %v657, %v789
        %v819 = vadd.f32 %v658, %v792
        %v820 = vadd.f32 %v659, %v794
        %v821 = vadd.f32 %v660, %v797
        %v822 = vadd.f32 %v661, %v799
        %v823 = vadd.f32 %v662, %v802
        %v824 = vadd.f32 %v663, %v804
        %v825 = vadd.f32 %v664, %v807
        %v826 = vadd.f32 %v665, %v809
        %v827 = vld [vmem:[%s229 + $0xc] sm:$0xf]
        %v828 = vld [vmem:[%s229 + $0x10] sm:$0xf]
        %v829 = vld [vmem:[%s229 + $0x14] sm:$0xf]
        %v830 = vld [vmem:[%s229 + $0x18] sm:$0xf]
        %v831 = vld [vmem:[%s229 + $0x1c] sm:$0xf]
        %v832 = vld [vmem:[%s229 + $0x20] sm:$0xf]
        %v833 = vld [vmem:[%s229 + $0x24] sm:$0xf]
        %v834 = vld [vmem:[%s229 + $0x28] sm:$0xf]
        %v835 = vld [vmem:[%s229 + $0x2c] sm:$0xf]
        %v836 = vld [vmem:[%s229 + $0x30] sm:$0xf]
        %v837 = vld [vmem:[%s229 + $0x34] sm:$0xf]
        %v838 = vld [vmem:[%s229 + $0x38] sm:$0xf]
        %v839 = vld [vmem:[%s229 + $0x3c] sm:$0xf]
        %v840 = vld [vmem:[%s229 + $0x40] sm:$0xf]
        %v841 = vld [vmem:[%s229 + $0x44] sm:$0xf]
        %v842 = vld [vmem:[%s229 + $0x48] sm:$0xf]
        %v843 = vld [vmem:[%s229 + $0x4c] sm:$0x1]
        %s844 = scalar_lea.vmem %s233, 48
        %v845 = vld [vmem:[%s844] sm:$0xf]
        %v846 = vld [vmem:[%s844 + $0x4] sm:$0xf]
        %v847 = vld [vmem:[%s844 + $0x8] sm:$0xf]
        %v865 = vunpack.c.l.b16 %v827
        %v866 = vunpack.c.l.b16 %v828
        %v867 = vunpack.c.l.b16 %v829
        %v868 = vunpack.c.l.b16 %v830
        %v869 = vunpack.c.l.b16 %v831
        %v870 = vunpack.c.l.b16 %v832
        %v871 = vunpack.c.l.b16 %v833
        %v872 = vunpack.c.l.b16 %v834
        %v873 = vunpack.c.l.b16 %v835
        %v874 = vunpack.c.l.b16 %v836
        %v875 = vunpack.c.l.b16 %v837
        %v876 = vunpack.c.l.b16 %v838
        %v877 = vunpack.c.l.b16 %v839
        %v878 = vunpack.c.l.b16 %v840
        %v879 = vunpack.c.l.b16 %v841
        %v880 = vunpack.c.l.b16 %v842
        %v881 = vunpack.c.l.b16 %v843
        %v882 = vpack.c.b16 %v866, %v865
        %v883 = vpack.c.b16 %v868, %v867
        %v884 = vpack.c.b16 %v870, %v869
        %v885 = vpack.c.b16 %v872, %v871
        %v886 = vpack.c.b16 %v874, %v873
        %v887 = vpack.c.b16 %v876, %v875
        %v888 = vpack.c.b16 %v878, %v877
        %v889 = vpack.c.b16 %v880, %v879
        %v890 = vpack.c.b16 %v881, %v881
        %v892 = vshrl.u32 %v882, 16
        %v894 = vshll.u32 %v882, 16
        %v896 = vrot.slane %v894, 1
        %v897 = vor.u32 %v892, %v896
        %v899 = vshll.u32 %v883, 16
        %v901 = vrot.slane %v899, 1
        %v902 = vsel %vm306, %v897, %v901
        %v903 = vshrl.u32 %v883, 16
        %v905 = vor.u32 %v903, %v901
        %v907 = vshll.u32 %v884, 16
        %v909 = vrot.slane %v907, 1
        %v910 = vsel %vm306, %v905, %v909
        %v911 = vshrl.u32 %v884, 16
        %v913 = vor.u32 %v911, %v909
        %v915 = vshll.u32 %v885, 16
        %v917 = vrot.slane %v915, 1
        %v918 = vsel %vm306, %v913, %v917
        %v919 = vshrl.u32 %v885, 16
        %v921 = vor.u32 %v919, %v917
        %v923 = vshll.u32 %v886, 16
        %v925 = vrot.slane %v923, 1
        %v926 = vsel %vm306, %v921, %v925
        %v927 = vshrl.u32 %v886, 16
        %v929 = vor.u32 %v927, %v925
        %v931 = vshll.u32 %v887, 16
        %v933 = vrot.slane %v931, 1
        %v934 = vsel %vm306, %v929, %v933
        %v935 = vshrl.u32 %v887, 16
        %v937 = vor.u32 %v935, %v933
        %v939 = vshll.u32 %v888, 16
        %v941 = vrot.slane %v939, 1
        %v942 = vsel %vm306, %v937, %v941
        %v943 = vshrl.u32 %v888, 16
        %v945 = vor.u32 %v943, %v941
        %v947 = vshll.u32 %v889, 16
        %v949 = vrot.slane %v947, 1
        %v950 = vsel %vm306, %v945, %v949
        %v951 = vshrl.u32 %v889, 16
        %v953 = vor.u32 %v951, %v949
        %v955 = vshll.u32 %v890, 16
        %v957 = vrot.slane %v955, 1
        %v958 = vsel %vm306, %v953, %v957
        %v962 = vunpack.c.l.b16 %v845
        %v963 = vunpack.c.l.b16 %v846
        %v964 = vunpack.c.l.b16 %v847
        %v965 = vpack.c.b16 %v963, %v962
        %v966 = vpack.c.b16 %v964, %v964
        %v969 = vsel %vm384, %v902, 0
        %v972 = vsel %vm384, %v910, 0
        %v975 = vsel %vm384, %v918, 0
        %v978 = vsel %vm384, %v926, 0
        %v981 = vsel %vm384, %v934, 0
        %v984 = vsel %vm384, %v942, 0
        %v987 = vsel %vm384, %v950, 0
        %v990 = vsel %vm384, %v958, 0
        %v993 = vsel %vm409, %v966, 0
        %995 = vmatpush.bf16.msra.mxu0 0
        %996 = vmatpush.bf16.msra.mxu0 0
        %997 = vmatpush.bf16.msra.mxu0 0
        %998 = vmatpush.bf16.msra.mxu0 0
        %999 = vmatpush.bf16.msra.mxu0 0
        %1000 = vmatpush.bf16.msra.mxu0 0
        %1001 = vmatpush.bf16.msra.mxu0 %v993
        %1002 = vmatpush.bf16.msra.mxu0 %v965
        %1003 = vmatmul.bf16.gmra.mxu0 %v969
        %v1004 = vpop.f32.mrf.mxu0
        %v1005 = vadd.f32 0.0, %v1004
        %v1006 = vpop.f32.mrf.mxu0
        %v1007 = vadd.f32 0.0, %v1006
        %1008 = vmatmul.bf16.gmra.mxu0 %v972
        %v1009 = vpop.f32.mrf.mxu0
        %v1010 = vadd.f32 0.0, %v1009
        %v1011 = vpop.f32.mrf.mxu0
        %v1012 = vadd.f32 0.0, %v1011
        %1013 = vmatmul.bf16.gmra.mxu0 %v975
        %v1014 = vpop.f32.mrf.mxu0
        %v1015 = vadd.f32 0.0, %v1014
        %v1016 = vpop.f32.mrf.mxu0
        %v1017 = vadd.f32 0.0, %v1016
        %1018 = vmatmul.bf16.gmra.mxu0 %v978
        %v1019 = vpop.f32.mrf.mxu0
        %v1020 = vadd.f32 0.0, %v1019
        %v1021 = vpop.f32.mrf.mxu0
        %v1022 = vadd.f32 0.0, %v1021
        %1023 = vmatmul.bf16.gmra.mxu0 %v981
        %v1024 = vpop.f32.mrf.mxu0
        %v1025 = vadd.f32 0.0, %v1024
        %v1026 = vpop.f32.mrf.mxu0
        %v1027 = vadd.f32 0.0, %v1026
        %1028 = vmatmul.bf16.gmra.mxu0 %v984
        %v1029 = vpop.f32.mrf.mxu0
        %v1030 = vadd.f32 0.0, %v1029
        %v1031 = vpop.f32.mrf.mxu0
        %v1032 = vadd.f32 0.0, %v1031
        %1033 = vmatmul.bf16.gmra.mxu0 %v987
        %v1034 = vpop.f32.mrf.mxu0
        %v1035 = vadd.f32 0.0, %v1034
        %v1036 = vpop.f32.mrf.mxu0
        %v1037 = vadd.f32 0.0, %v1036
        %1038 = vmatmul.bf16.gmra.mxu0 %v990
        %v1039 = vpop.f32.mrf.mxu0
        %v1040 = vadd.f32 0.0, %v1039
        %v1041 = vpop.f32.mrf.mxu0
        %v1042 = vadd.f32 0.0, %v1041
        %1043 = vdwg.mxu0
        %v1044 = vadd.f32 %v811, %v1005
        %v1045 = vadd.f32 %v812, %v1007
        %v1046 = vadd.f32 %v813, %v1010
        %v1047 = vadd.f32 %v814, %v1012
        %v1048 = vadd.f32 %v815, %v1015
        %v1049 = vadd.f32 %v816, %v1017
        %v1050 = vadd.f32 %v817, %v1020
        %v1051 = vadd.f32 %v818, %v1022
        %v1052 = vadd.f32 %v819, %v1025
        %v1053 = vadd.f32 %v820, %v1027
        %v1054 = vadd.f32 %v821, %v1030
        %v1055 = vadd.f32 %v822, %v1032
        %v1056 = vadd.f32 %v823, %v1035
        %v1057 = vadd.f32 %v824, %v1037
        %v1058 = vadd.f32 %v825, %v1040
        %v1059 = vadd.f32 %v826, %v1042
        %v1060 = vld [vmem:[%s229 + $0xc] sm:$0xe]
        %s1061 = scalar_lea.vmem %s233, 60
        %v1062 = vld [vmem:[%s1061] sm:$0xf]
        %v1063 = vld [vmem:[%s1061 + $0x4] sm:$0xf]
        %v1064 = vld [vmem:[%s1061 + $0x8] sm:$0xf]
        %v1066 = vunpack.c.l.b16 %v1060
        %v1067 = vpack.c.b16 %v866, %v1066
        %v1068 = vrot.slane %v1067, 1
        %v1069 = vrot.slane %v883, 1
        %v1070 = vsel %vm547, %v1068, %v1069
        %v1071 = vrot.slane %v884, 1
        %v1072 = vsel %vm547, %v1069, %v1071
        %v1073 = vrot.slane %v885, 1
        %v1074 = vsel %vm547, %v1071, %v1073
        %v1075 = vrot.slane %v886, 1
        %v1076 = vsel %vm547, %v1073, %v1075
        %v1077 = vrot.slane %v887, 1
        %v1078 = vsel %vm547, %v1075, %v1077
        %v1079 = vrot.slane %v888, 1
        %v1080 = vsel %vm547, %v1077, %v1079
        %v1081 = vrot.slane %v889, 1
        %v1082 = vsel %vm547, %v1079, %v1081
        %v1083 = vrot.slane %v890, 1
        %v1084 = vsel %vm547, %v1081, %v1083
        %v1088 = vunpack.c.l.b16 %v1062
        %v1089 = vunpack.c.l.b16 %v1063
        %v1090 = vunpack.c.l.b16 %v1064
        %v1091 = vpack.c.b16 %v1089, %v1088
        %v1092 = vpack.c.b16 %v1090, %v1090
        %v1095 = vsel %vm384, %v1070, 0
        %v1098 = vsel %vm384, %v1072, 0
        %v1101 = vsel %vm384, %v1074, 0
        %v1104 = vsel %vm384, %v1076, 0
        %v1107 = vsel %vm384, %v1078, 0
        %v1110 = vsel %vm384, %v1080, 0
        %v1113 = vsel %vm384, %v1082, 0
        %v1116 = vsel %vm384, %v1084, 0
        %v1119 = vsel %vm409, %v1092, 0
        %1121 = vmatpush.bf16.msra.mxu0 0
        %1122 = vmatpush.bf16.msra.mxu0 0
        %1123 = vmatpush.bf16.msra.mxu0 0
        %1124 = vmatpush.bf16.msra.mxu0 0
        %1125 = vmatpush.bf16.msra.mxu0 0
        %1126 = vmatpush.bf16.msra.mxu0 0
        %1127 = vmatpush.bf16.msra.mxu0 %v1119
        %1128 = vmatpush.bf16.msra.mxu0 %v1091
        %1129 = vmatmul.bf16.gmra.mxu0 %v1095
        %v1130 = vpop.f32.mrf.mxu0
        %v1131 = vadd.f32 0.0, %v1130
        %v1132 = vpop.f32.mrf.mxu0
        %v1133 = vadd.f32 0.0, %v1132
        %1134 = vmatmul.bf16.gmra.mxu0 %v1098
        %v1135 = vpop.f32.mrf.mxu0
        %v1136 = vadd.f32 0.0, %v1135
        %v1137 = vpop.f32.mrf.mxu0
        %v1138 = vadd.f32 0.0, %v1137
        %1139 = vmatmul.bf16.gmra.mxu0 %v1101
        %v1140 = vpop.f32.mrf.mxu0
        %v1141 = vadd.f32 0.0, %v1140
        %v1142 = vpop.f32.mrf.mxu0
        %v1143 = vadd.f32 0.0, %v1142
        %1144 = vmatmul.bf16.gmra.mxu0 %v1104
        %v1145 = vpop.f32.mrf.mxu0
        %v1146 = vadd.f32 0.0, %v1145
        %v1147 = vpop.f32.mrf.mxu0
        %v1148 = vadd.f32 0.0, %v1147
        %1149 = vmatmul.bf16.gmra.mxu0 %v1107
        %v1150 = vpop.f32.mrf.mxu0
        %v1151 = vadd.f32 0.0, %v1150
        %v1152 = vpop.f32.mrf.mxu0
        %v1153 = vadd.f32 0.0, %v1152
        %1154 = vmatmul.bf16.gmra.mxu0 %v1110
        %v1155 = vpop.f32.mrf.mxu0
        %v1156 = vadd.f32 0.0, %v1155
        %v1157 = vpop.f32.mrf.mxu0
        %v1158 = vadd.f32 0.0, %v1157
        %1159 = vmatmul.bf16.gmra.mxu0 %v1113
        %v1160 = vpop.f32.mrf.mxu0
        %v1161 = vadd.f32 0.0, %v1160
        %v1162 = vpop.f32.mrf.mxu0
        %v1163 = vadd.f32 0.0, %v1162
        %1164 = vmatmul.bf16.gmra.mxu0 %v1116
        %v1165 = vpop.f32.mrf.mxu0
        %v1166 = vadd.f32 0.0, %v1165
        %v1167 = vpop.f32.mrf.mxu0
        %v1168 = vadd.f32 0.0, %v1167
        %1169 = vdwg.mxu0
        %v1170 = vadd.f32 %v1044, %v1131
        %v1171 = vadd.f32 %v1045, %v1133
        %v1172 = vadd.f32 %v1046, %v1136
        %v1173 = vadd.f32 %v1047, %v1138
        %v1174 = vadd.f32 %v1048, %v1141
        %v1175 = vadd.f32 %v1049, %v1143
        %v1176 = vadd.f32 %v1050, %v1146
        %v1177 = vadd.f32 %v1051, %v1148
        %v1178 = vadd.f32 %v1052, %v1151
        %v1179 = vadd.f32 %v1053, %v1153
        %v1180 = vadd.f32 %v1054, %v1156
        %v1181 = vadd.f32 %v1055, %v1158
        %v1182 = vadd.f32 %v1056, %v1161
        %v1183 = vadd.f32 %v1057, %v1163
        %v1184 = vadd.f32 %v1058, %v1166
        %v1185 = vadd.f32 %v1059, %v1168
        %v1186 = vld [vmem:[%s229 + $0x18] sm:$0xf]
        %v1187 = vld [vmem:[%s229 + $0x1c] sm:$0xf]
        %v1188 = vld [vmem:[%s229 + $0x20] sm:$0xf]
        %v1189 = vld [vmem:[%s229 + $0x24] sm:$0xf]
        %v1190 = vld [vmem:[%s229 + $0x28] sm:$0xf]
        %v1191 = vld [vmem:[%s229 + $0x2c] sm:$0xf]
        %v1192 = vld [vmem:[%s229 + $0x30] sm:$0xf]
        %v1193 = vld [vmem:[%s229 + $0x34] sm:$0xf]
        %v1194 = vld [vmem:[%s229 + $0x38] sm:$0xf]
        %v1195 = vld [vmem:[%s229 + $0x3c] sm:$0xf]
        %v1196 = vld [vmem:[%s229 + $0x40] sm:$0xf]
        %v1197 = vld [vmem:[%s229 + $0x44] sm:$0xf]
        %v1198 = vld [vmem:[%s229 + $0x48] sm:$0xf]
        %v1199 = vld [vmem:[%s229 + $0x4c] sm:$0xf]
        %v1200 = vld [vmem:[%s229 + $0x50] sm:$0xf]
        %v1201 = vld [vmem:[%s229 + $0x54] sm:$0xf]
        %s1202 = scalar_lea.vmem %s233, 72
        %v1203 = vld [vmem:[%s1202] sm:$0xf]
        %v1204 = vld [vmem:[%s1202 + $0x4] sm:$0xf]
        %v1205 = vld [vmem:[%s1202 + $0x8] sm:$0xf]
        %v1222 = vunpack.c.l.b16 %v1186
        %v1223 = vunpack.c.l.b16 %v1187
        %v1224 = vunpack.c.l.b16 %v1188
        %v1225 = vunpack.c.l.b16 %v1189
        %v1226 = vunpack.c.l.b16 %v1190
        %v1227 = vunpack.c.l.b16 %v1191
        %v1228 = vunpack.c.l.b16 %v1192
        %v1229 = vunpack.c.l.b16 %v1193
        %v1230 = vunpack.c.l.b16 %v1194
        %v1231 = vunpack.c.l.b16 %v1195
        %v1232 = vunpack.c.l.b16 %v1196
        %v1233 = vunpack.c.l.b16 %v1197
        %v1234 = vunpack.c.l.b16 %v1198
        %v1235 = vunpack.c.l.b16 %v1199
        %v1236 = vunpack.c.l.b16 %v1200
        %v1237 = vunpack.c.l.b16 %v1201
        %v1238 = vpack.c.b16 %v1223, %v1222
        %v1239 = vpack.c.b16 %v1225, %v1224
        %v1240 = vpack.c.b16 %v1227, %v1226
        %v1241 = vpack.c.b16 %v1229, %v1228
        %v1242 = vpack.c.b16 %v1231, %v1230
        %v1243 = vpack.c.b16 %v1233, %v1232
        %v1244 = vpack.c.b16 %v1235, %v1234
        %v1245 = vpack.c.b16 %v1237, %v1236
        %v1249 = vunpack.c.l.b16 %v1203
        %v1250 = vunpack.c.l.b16 %v1204
        %v1251 = vunpack.c.l.b16 %v1205
        %v1252 = vpack.c.b16 %v1250, %v1249
        %v1253 = vpack.c.b16 %v1251, %v1251
        %v1256 = vsel %vm384, %v1238, 0
        %v1259 = vsel %vm384, %v1239, 0
        %v1262 = vsel %vm384, %v1240, 0
        %v1265 = vsel %vm384, %v1241, 0
        %v1268 = vsel %vm384, %v1242, 0
        %v1271 = vsel %vm384, %v1243, 0
        %v1274 = vsel %vm384, %v1244, 0
        %v1277 = vsel %vm384, %v1245, 0
        %v1280 = vsel %vm409, %v1253, 0
        %1282 = vmatpush.bf16.msra.mxu0 0
        %1283 = vmatpush.bf16.msra.mxu0 0
        %1284 = vmatpush.bf16.msra.mxu0 0
        %1285 = vmatpush.bf16.msra.mxu0 0
        %1286 = vmatpush.bf16.msra.mxu0 0
        %1287 = vmatpush.bf16.msra.mxu0 0
        %1288 = vmatpush.bf16.msra.mxu0 %v1280
        %1289 = vmatpush.bf16.msra.mxu0 %v1252
        %1290 = vmatmul.bf16.gmra.mxu0 %v1256
        %v1291 = vpop.f32.mrf.mxu0
        %v1292 = vadd.f32 0.0, %v1291
        %v1293 = vpop.f32.mrf.mxu0
        %v1294 = vadd.f32 0.0, %v1293
        %1295 = vmatmul.bf16.gmra.mxu0 %v1259
        %v1296 = vpop.f32.mrf.mxu0
        %v1297 = vadd.f32 0.0, %v1296
        %v1298 = vpop.f32.mrf.mxu0
        %v1299 = vadd.f32 0.0, %v1298
        %1300 = vmatmul.bf16.gmra.mxu0 %v1262
        %v1301 = vpop.f32.mrf.mxu0
        %v1302 = vadd.f32 0.0, %v1301
        %v1303 = vpop.f32.mrf.mxu0
        %v1304 = vadd.f32 0.0, %v1303
        %1305 = vmatmul.bf16.gmra.mxu0 %v1265
        %v1306 = vpop.f32.mrf.mxu0
        %v1307 = vadd.f32 0.0, %v1306
        %v1308 = vpop.f32.mrf.mxu0
        %v1309 = vadd.f32 0.0, %v1308
        %1310 = vmatmul.bf16.gmra.mxu0 %v1268
        %v1311 = vpop.f32.mrf.mxu0
        %v1312 = vadd.f32 0.0, %v1311
        %v1313 = vpop.f32.mrf.mxu0
        %v1314 = vadd.f32 0.0, %v1313
        %1315 = vmatmul.bf16.gmra.mxu0 %v1271
        %v1316 = vpop.f32.mrf.mxu0
        %v1317 = vadd.f32 0.0, %v1316
        %v1318 = vpop.f32.mrf.mxu0
        %v1319 = vadd.f32 0.0, %v1318
        %1320 = vmatmul.bf16.gmra.mxu0 %v1274
        %v1321 = vpop.f32.mrf.mxu0
        %v1322 = vadd.f32 0.0, %v1321
        %v1323 = vpop.f32.mrf.mxu0
        %v1324 = vadd.f32 0.0, %v1323
        %1325 = vmatmul.bf16.gmra.mxu0 %v1277
        %v1326 = vpop.f32.mrf.mxu0
        %v1327 = vadd.f32 0.0, %v1326
        %v1328 = vpop.f32.mrf.mxu0
        %v1329 = vadd.f32 0.0, %v1328
        %1330 = vdwg.mxu0
        %v1331 = vadd.f32 %v1170, %v1292
        %v1332 = vadd.f32 %v1171, %v1294
        %v1333 = vadd.f32 %v1172, %v1297
        %v1334 = vadd.f32 %v1173, %v1299
        %v1335 = vadd.f32 %v1174, %v1302
        %v1336 = vadd.f32 %v1175, %v1304
        %v1337 = vadd.f32 %v1176, %v1307
        %v1338 = vadd.f32 %v1177, %v1309
        %v1339 = vadd.f32 %v1178, %v1312
        %v1340 = vadd.f32 %v1179, %v1314
        %v1341 = vadd.f32 %v1180, %v1317
        %v1342 = vadd.f32 %v1181, %v1319
        %v1343 = vadd.f32 %v1182, %v1322
        %v1344 = vadd.f32 %v1183, %v1324
        %v1345 = vadd.f32 %v1184, %v1327
        %v1346 = vadd.f32 %v1185, %v1329
        %v1347 = vld [vmem:[%s229 + $0x18] sm:$0xf]
        %v1348 = vld [vmem:[%s229 + $0x1c] sm:$0xf]
        %v1349 = vld [vmem:[%s229 + $0x20] sm:$0xf]
        %v1350 = vld [vmem:[%s229 + $0x24] sm:$0xf]
        %v1351 = vld [vmem:[%s229 + $0x28] sm:$0xf]
        %v1352 = vld [vmem:[%s229 + $0x2c] sm:$0xf]
        %v1353 = vld [vmem:[%s229 + $0x30] sm:$0xf]
        %v1354 = vld [vmem:[%s229 + $0x34] sm:$0xf]
        %v1355 = vld [vmem:[%s229 + $0x38] sm:$0xf]
        %v1356 = vld [vmem:[%s229 + $0x3c] sm:$0xf]
        %v1357 = vld [vmem:[%s229 + $0x40] sm:$0xf]
        %v1358 = vld [vmem:[%s229 + $0x44] sm:$0xf]
        %v1359 = vld [vmem:[%s229 + $0x48] sm:$0xf]
        %v1360 = vld [vmem:[%s229 + $0x4c] sm:$0xf]
        %v1361 = vld [vmem:[%s229 + $0x50] sm:$0xf]
        %v1362 = vld [vmem:[%s229 + $0x54] sm:$0xf]
        %v1363 = vld [vmem:[%s229 + $0x58] sm:$0x1]
        %s1364 = scalar_lea.vmem %s233, 84
        %v1365 = vld [vmem:[%s1364] sm:$0xf]
        %v1366 = vld [vmem:[%s1364 + $0x4] sm:$0xf]
        %v1367 = vld [vmem:[%s1364 + $0x8] sm:$0xf]
        %v1385 = vunpack.c.l.b16 %v1347
        %v1386 = vunpack.c.l.b16 %v1348
        %v1387 = vunpack.c.l.b16 %v1349
        %v1388 = vunpack.c.l.b16 %v1350
        %v1389 = vunpack.c.l.b16 %v1351
        %v1390 = vunpack.c.l.b16 %v1352
        %v1391 = vunpack.c.l.b16 %v1353
        %v1392 = vunpack.c.l.b16 %v1354
        %v1393 = vunpack.c.l.b16 %v1355
        %v1394 = vunpack.c.l.b16 %v1356
        %v1395 = vunpack.c.l.b16 %v1357
        %v1396 = vunpack.c.l.b16 %v1358
        %v1397 = vunpack.c.l.b16 %v1359
        %v1398 = vunpack.c.l.b16 %v1360
        %v1399 = vunpack.c.l.b16 %v1361
        %v1400 = vunpack.c.l.b16 %v1362
        %v1401 = vunpack.c.l.b16 %v1363
        %v1402 = vpack.c.b16 %v1386, %v1385
        %v1403 = vpack.c.b16 %v1388, %v1387
        %v1404 = vpack.c.b16 %v1390, %v1389
        %v1405 = vpack.c.b16 %v1392, %v1391
        %v1406 = vpack.c.b16 %v1394, %v1393
        %v1407 = vpack.c.b16 %v1396, %v1395
        %v1408 = vpack.c.b16 %v1398, %v1397
        %v1409 = vpack.c.b16 %v1400, %v1399
        %v1410 = vpack.c.b16 %v1401, %v1401
        %v1412 = vshrl.u32 %v1402, 16
        %v1414 = vshll.u32 %v1402, 16
        %v1416 = vrot.slane %v1414, 1
        %v1417 = vor.u32 %v1412, %v1416
        %v1419 = vshll.u32 %v1403, 16
        %v1421 = vrot.slane %v1419, 1
        %v1422 = vsel %vm306, %v1417, %v1421
        %v1423 = vshrl.u32 %v1403, 16
        %v1425 = vor.u32 %v1423, %v1421
        %v1427 = vshll.u32 %v1404, 16
        %v1429 = vrot.slane %v1427, 1
        %v1430 = vsel %vm306, %v1425, %v1429
        %v1431 = vshrl.u32 %v1404, 16
        %v1433 = vor.u32 %v1431, %v1429
        %v1435 = vshll.u32 %v1405, 16
        %v1437 = vrot.slane %v1435, 1
        %v1438 = vsel %vm306, %v1433, %v1437
        %v1439 = vshrl.u32 %v1405, 16
        %v1441 = vor.u32 %v1439, %v1437
        %v1443 = vshll.u32 %v1406, 16
        %v1445 = vrot.slane %v1443, 1
        %v1446 = vsel %vm306, %v1441, %v1445
        %v1447 = vshrl.u32 %v1406, 16
        %v1449 = vor.u32 %v1447, %v1445
        %v1451 = vshll.u32 %v1407, 16
        %v1453 = vrot.slane %v1451, 1
        %v1454 = vsel %vm306, %v1449, %v1453
        %v1455 = vshrl.u32 %v1407, 16
        %v1457 = vor.u32 %v1455, %v1453
        %v1459 = vshll.u32 %v1408, 16
        %v1461 = vrot.slane %v1459, 1
        %v1462 = vsel %vm306, %v1457, %v1461
        %v1463 = vshrl.u32 %v1408, 16
        %v1465 = vor.u32 %v1463, %v1461
        %v1467 = vshll.u32 %v1409, 16
        %v1469 = vrot.slane %v1467, 1
        %v1470 = vsel %vm306, %v1465, %v1469
        %v1471 = vshrl.u32 %v1409, 16
        %v1473 = vor.u32 %v1471, %v1469
        %v1475 = vshll.u32 %v1410, 16
        %v1477 = vrot.slane %v1475, 1
        %v1478 = vsel %vm306, %v1473, %v1477
        %v1482 = vunpack.c.l.b16 %v1365
        %v1483 = vunpack.c.l.b16 %v1366
        %v1484 = vunpack.c.l.b16 %v1367
        %v1485 = vpack.c.b16 %v1483, %v1482
        %v1486 = vpack.c.b16 %v1484, %v1484
        %v1489 = vsel %vm384, %v1422, 0
        %v1492 = vsel %vm384, %v1430, 0
        %v1495 = vsel %vm384, %v1438, 0
        %v1498 = vsel %vm384, %v1446, 0
        %v1501 = vsel %vm384, %v1454, 0
        %v1504 = vsel %vm384, %v1462, 0
        %v1507 = vsel %vm384, %v1470, 0
        %v1510 = vsel %vm384, %v1478, 0
        %v1513 = vsel %vm409, %v1486, 0
        %1515 = vmatpush.bf16.msra.mxu0 0
        %1516 = vmatpush.bf16.msra.mxu0 0
        %1517 = vmatpush.bf16.msra.mxu0 0
        %1518 = vmatpush.bf16.msra.mxu0 0
        %1519 = vmatpush.bf16.msra.mxu0 0
        %1520 = vmatpush.bf16.msra.mxu0 0
        %1521 = vmatpush.bf16.msra.mxu0 %v1513
        %1522 = vmatpush.bf16.msra.mxu0 %v1485
        %1523 = vmatmul.bf16.gmra.mxu0 %v1489
        %v1524 = vpop.f32.mrf.mxu0
        %v1525 = vadd.f32 0.0, %v1524
        %v1526 = vpop.f32.mrf.mxu0
        %v1527 = vadd.f32 0.0, %v1526
        %1528 = vmatmul.bf16.gmra.mxu0 %v1492
        %v1529 = vpop.f32.mrf.mxu0
        %v1530 = vadd.f32 0.0, %v1529
        %v1531 = vpop.f32.mrf.mxu0
        %v1532 = vadd.f32 0.0, %v1531
        %1533 = vmatmul.bf16.gmra.mxu0 %v1495
        %v1534 = vpop.f32.mrf.mxu0
        %v1535 = vadd.f32 0.0, %v1534
        %v1536 = vpop.f32.mrf.mxu0
        %v1537 = vadd.f32 0.0, %v1536
        %1538 = vmatmul.bf16.gmra.mxu0 %v1498
        %v1539 = vpop.f32.mrf.mxu0
        %v1540 = vadd.f32 0.0, %v1539
        %v1541 = vpop.f32.mrf.mxu0
        %v1542 = vadd.f32 0.0, %v1541
        %1543 = vmatmul.bf16.gmra.mxu0 %v1501
        %v1544 = vpop.f32.mrf.mxu0
        %v1545 = vadd.f32 0.0, %v1544
        %v1546 = vpop.f32.mrf.mxu0
        %v1547 = vadd.f32 0.0, %v1546
        %1548 = vmatmul.bf16.gmra.mxu0 %v1504
        %v1549 = vpop.f32.mrf.mxu0
        %v1550 = vadd.f32 0.0, %v1549
        %v1551 = vpop.f32.mrf.mxu0
        %v1552 = vadd.f32 0.0, %v1551
        %1553 = vmatmul.bf16.gmra.mxu0 %v1507
        %v1554 = vpop.f32.mrf.mxu0
        %v1555 = vadd.f32 0.0, %v1554
        %v1556 = vpop.f32.mrf.mxu0
        %v1557 = vadd.f32 0.0, %v1556
        %1558 = vmatmul.bf16.gmra.mxu0 %v1510
        %v1559 = vpop.f32.mrf.mxu0
        %v1560 = vadd.f32 0.0, %v1559
        %v1561 = vpop.f32.mrf.mxu0
        %v1562 = vadd.f32 0.0, %v1561
        %1563 = vdwg.mxu0
        %v1564 = vadd.f32 %v1331, %v1525
        %v1565 = vadd.f32 %v1332, %v1527
        %v1566 = vadd.f32 %v1333, %v1530
        %v1567 = vadd.f32 %v1334, %v1532
        %v1568 = vadd.f32 %v1335, %v1535
        %v1569 = vadd.f32 %v1336, %v1537
        %v1570 = vadd.f32 %v1337, %v1540
        %v1571 = vadd.f32 %v1338, %v1542
        %v1572 = vadd.f32 %v1339, %v1545
        %v1573 = vadd.f32 %v1340, %v1547
        %v1574 = vadd.f32 %v1341, %v1550
        %v1575 = vadd.f32 %v1342, %v1552
        %v1576 = vadd.f32 %v1343, %v1555
        %v1577 = vadd.f32 %v1344, %v1557
        %v1578 = vadd.f32 %v1345, %v1560
        %v1579 = vadd.f32 %v1346, %v1562
        %v1580 = vld [vmem:[%s229 + $0x18] sm:$0xe]
        %s1581 = scalar_lea.vmem %s233, 96
        %v1582 = vld [vmem:[%s1581] sm:$0xf]
        %v1583 = vld [vmem:[%s1581 + $0x4] sm:$0xf]
        %v1584 = vld [vmem:[%s1581 + $0x8] sm:$0xf]
        %v1586 = vunpack.c.l.b16 %v1580
        %v1587 = vpack.c.b16 %v1386, %v1586
        %v1588 = vrot.slane %v1587, 1
        %v1589 = vrot.slane %v1403, 1
        %v1590 = vsel %vm547, %v1588, %v1589
        %v1591 = vrot.slane %v1404, 1
        %v1592 = vsel %vm547, %v1589, %v1591
        %v1593 = vrot.slane %v1405, 1
        %v1594 = vsel %vm547, %v1591, %v1593
        %v1595 = vrot.slane %v1406, 1
        %v1596 = vsel %vm547, %v1593, %v1595
        %v1597 = vrot.slane %v1407, 1
        %v1598 = vsel %vm547, %v1595, %v1597
        %v1599 = vrot.slane %v1408, 1
        %v1600 = vsel %vm547, %v1597, %v1599
        %v1601 = vrot.slane %v1409, 1
        %v1602 = vsel %vm547, %v1599, %v1601
        %v1603 = vrot.slane %v1410, 1
        %v1604 = vsel %vm547, %v1601, %v1603
        %v1608 = vunpack.c.l.b16 %v1582
        %v1609 = vunpack.c.l.b16 %v1583
        %v1610 = vunpack.c.l.b16 %v1584
        %v1611 = vpack.c.b16 %v1609, %v1608
        %v1612 = vpack.c.b16 %v1610, %v1610
        %v1615 = vsel %vm384, %v1590, 0
        %v1618 = vsel %vm384, %v1592, 0
        %v1621 = vsel %vm384, %v1594, 0
        %v1624 = vsel %vm384, %v1596, 0
        %v1627 = vsel %vm384, %v1598, 0
        %v1630 = vsel %vm384, %v1600, 0
        %v1633 = vsel %vm384, %v1602, 0
        %v1636 = vsel %vm384, %v1604, 0
        %v1639 = vsel %vm409, %v1612, 0
        %1641 = vmatpush.bf16.msra.mxu0 0
        %1642 = vmatpush.bf16.msra.mxu0 0
        %1643 = vmatpush.bf16.msra.mxu0 0
        %1644 = vmatpush.bf16.msra.mxu0 0
        %1645 = vmatpush.bf16.msra.mxu0 0
        %1646 = vmatpush.bf16.msra.mxu0 0
        %1647 = vmatpush.bf16.msra.mxu0 %v1639
        %1648 = vmatpush.bf16.msra.mxu0 %v1611
        %1649 = vmatmul.bf16.gmra.mxu0 %v1615
        %v1650 = vpop.f32.mrf.mxu0
        %v1651 = vadd.f32 0.0, %v1650
        %v1652 = vpop.f32.mrf.mxu0
        %v1653 = vadd.f32 0.0, %v1652
        %1654 = vmatmul.bf16.gmra.mxu0 %v1618
        %v1655 = vpop.f32.mrf.mxu0
        %v1656 = vadd.f32 0.0, %v1655
        %v1657 = vpop.f32.mrf.mxu0
        %v1658 = vadd.f32 0.0, %v1657
        %1659 = vmatmul.bf16.gmra.mxu0 %v1621
        %v1660 = vpop.f32.mrf.mxu0
        %v1661 = vadd.f32 0.0, %v1660
        %v1662 = vpop.f32.mrf.mxu0
        %v1663 = vadd.f32 0.0, %v1662
        %1664 = vmatmul.bf16.gmra.mxu0 %v1624
        %v1665 = vpop.f32.mrf.mxu0
        %v1666 = vadd.f32 0.0, %v1665
        %v1667 = vpop.f32.mrf.mxu0
        %v1668 = vadd.f32 0.0, %v1667
        %1669 = vmatmul.bf16.gmra.mxu0 %v1627
        %v1670 = vpop.f32.mrf.mxu0
        %v1671 = vadd.f32 0.0, %v1670
        %v1672 = vpop.f32.mrf.mxu0
        %v1673 = vadd.f32 0.0, %v1672
        %1674 = vmatmul.bf16.gmra.mxu0 %v1630
        %v1675 = vpop.f32.mrf.mxu0
        %v1676 = vadd.f32 0.0, %v1675
        %v1677 = vpop.f32.mrf.mxu0
        %v1678 = vadd.f32 0.0, %v1677
        %1679 = vmatmul.bf16.gmra.mxu0 %v1633
        %v1680 = vpop.f32.mrf.mxu0
        %v1681 = vadd.f32 0.0, %v1680
        %v1682 = vpop.f32.mrf.mxu0
        %v1683 = vadd.f32 0.0, %v1682
        %1684 = vmatmul.bf16.gmra.mxu0 %v1636
        %v1685 = vpop.f32.mrf.mxu0
        %v1686 = vadd.f32 0.0, %v1685
        %v1687 = vpop.f32.mrf.mxu0
        %v1688 = vadd.f32 0.0, %v1687
        %1689 = vdwg.mxu0
        %v1690 = vadd.f32 %v1564, %v1651
        %v1691 = vadd.f32 %v1565, %v1653
        %v1692 = vadd.f32 %v1566, %v1656
        %v1693 = vadd.f32 %v1567, %v1658
        %v1694 = vadd.f32 %v1568, %v1661
        %v1695 = vadd.f32 %v1569, %v1663
        %v1696 = vadd.f32 %v1570, %v1666
        %v1697 = vadd.f32 %v1571, %v1668
        %v1698 = vadd.f32 %v1572, %v1671
        %v1699 = vadd.f32 %v1573, %v1673
        %v1700 = vadd.f32 %v1574, %v1676
        %v1701 = vadd.f32 %v1575, %v1678
        %v1702 = vadd.f32 %v1576, %v1681
        %v1703 = vadd.f32 %v1577, %v1683
        %v1704 = vadd.f32 %v1578, %v1686
        %v1705 = vadd.f32 %v1579, %v1688
        %v1707 = vperm.slane %v238, 0
        %v1709 = vadd.f32 %v1690, %v1707
        %v1710 = vadd.f32 %v1691, %v1707
        %v1711 = vadd.f32 %v1692, %v1707
        %v1712 = vadd.f32 %v1693, %v1707
        %v1713 = vadd.f32 %v1694, %v1707
        %v1714 = vadd.f32 %v1695, %v1707
        %v1715 = vadd.f32 %v1696, %v1707
        %v1716 = vadd.f32 %v1697, %v1707
        %v1717 = vadd.f32 %v1698, %v1707
        %v1718 = vadd.f32 %v1699, %v1707
        %v1719 = vadd.f32 %v1700, %v1707
        %v1720 = vadd.f32 %v1701, %v1707
        %v1721 = vadd.f32 %v1702, %v1707
        %v1722 = vadd.f32 %v1703, %v1707
        %v1723 = vadd.f32 %v1704, %v1707
        %v1724 = vadd.f32 %v1705, %v1707
        %v1725 = vmax.f32 %v1709, 0.0
        %v1726 = vmax.f32 %v1710, 0.0
        %v1727 = vmax.f32 %v1711, 0.0
        %v1728 = vmax.f32 %v1712, 0.0
        %v1729 = vmax.f32 %v1713, 0.0
        %v1730 = vmax.f32 %v1714, 0.0
        %v1731 = vmax.f32 %v1715, 0.0
        %v1732 = vmax.f32 %v1716, 0.0
        %v1733 = vmax.f32 %v1717, 0.0
        %v1734 = vmax.f32 %v1718, 0.0
        %v1735 = vmax.f32 %v1719, 0.0
        %v1736 = vmax.f32 %v1720, 0.0
        %v1737 = vmax.f32 %v1721, 0.0
        %v1738 = vmax.f32 %v1722, 0.0
        %v1739 = vmax.f32 %v1723, 0.0
        %v1740 = vmax.f32 %v1724, 0.0
        %v1741 = vpack.c.bf16 %v1725, %v1725
        %v1742 = vpack.c.bf16 %v1726, %v1726
        %v1743 = vpack.c.bf16 %v1727, %v1727
        %v1744 = vpack.c.bf16 %v1728, %v1728
        %v1745 = vpack.c.bf16 %v1729, %v1729
        %v1746 = vpack.c.bf16 %v1730, %v1730
        %v1747 = vpack.c.bf16 %v1731, %v1731
        %v1748 = vpack.c.bf16 %v1732, %v1732
        %v1749 = vpack.c.bf16 %v1733, %v1733
        %v1750 = vpack.c.bf16 %v1734, %v1734
        %v1751 = vpack.c.bf16 %v1735, %v1735
        %v1752 = vpack.c.bf16 %v1736, %v1736
        %v1753 = vpack.c.bf16 %v1737, %v1737
        %v1754 = vpack.c.bf16 %v1738, %v1738
        %v1755 = vpack.c.bf16 %v1739, %v1739
        %v1756 = vpack.c.bf16 %v1740, %v1740
        %1757 = vst [vmem:[%s220] sm:$0xf] %v1741
        %1758 = vst [vmem:[%s220 + $0x4] sm:$0xf] %v1742
        %1759 = vst [vmem:[%s220 + $0x8] sm:$0xf] %v1743
        %1760 = vst [vmem:[%s220 + $0xc] sm:$0xf] %v1744
        %1761 = vst [vmem:[%s220 + $0x10] sm:$0xf] %v1745
        %1762 = vst [vmem:[%s220 + $0x14] sm:$0xf] %v1746
        %1763 = vst [vmem:[%s220 + $0x18] sm:$0xf] %v1747
        %1764 = vst [vmem:[%s220 + $0x1c] sm:$0xf] %v1748
        %1765 = vst [vmem:[%s220 + $0x20] sm:$0xf] %v1749
        %1766 = vst [vmem:[%s220 + $0x24] sm:$0xf] %v1750
        %1767 = vst [vmem:[%s220 + $0x28] sm:$0xf] %v1751
        %1768 = vst [vmem:[%s220 + $0x2c] sm:$0xf] %v1752
        %1769 = vst [vmem:[%s220 + $0x30] sm:$0xf] %v1753
        %1770 = vst [vmem:[%s220 + $0x34] sm:$0xf] %v1754
        %1771 = vst [vmem:[%s220 + $0x38] sm:$0xf] %v1755
        %1772 = vst [vmem:[%s220 + $0x3c] sm:$0xf] %v1756
        %v1773 = vld [vmem:[%s229 + $0x40] sm:$0xf]
        %v1774 = vld [vmem:[%s229 + $0x44] sm:$0xf]
        %v1775 = vld [vmem:[%s229 + $0x48] sm:$0xf]
        %v1776 = vld [vmem:[%s229 + $0x4c] sm:$0xf]
        %v1777 = vld [vmem:[%s229 + $0x50] sm:$0xf]
        %v1778 = vld [vmem:[%s229 + $0x54] sm:$0xf]
        %v1779 = vld [vmem:[%s229 + $0x58] sm:$0xf]
        %v1780 = vld [vmem:[%s229 + $0x5c] sm:$0xf]
        %v1781 = vld [vmem:[%s229 + $0x60] sm:$0xf]
        %v1782 = vld [vmem:[%s229 + $0x64] sm:$0xf]
        %v1783 = vld [vmem:[%s229 + $0x68] sm:$0xf]
        %v1784 = vld [vmem:[%s229 + $0x6c] sm:$0xf]
        %v1785 = vld [vmem:[%s229 + $0x70] sm:$0xf]
        %v1786 = vld [vmem:[%s229 + $0x74] sm:$0xf]
        %v1787 = vld [vmem:[%s229 + $0x78] sm:$0xf]
        %v1788 = vld [vmem:[%s229 + $0x7c] sm:$0xf]
        %v1789 = vld [vmem:[%s233] sm:$0xf]
        %v1790 = vld [vmem:[%s233 + $0x4] sm:$0xf]
        %v1791 = vld [vmem:[%s233 + $0x8] sm:$0xf]
        %v1792 = vld [vmem:[%s229 + $0x80] sm:$0x1]
        %v1793 = vld [vmem:[%s259] sm:$0xf]
        %v1794 = vld [vmem:[%s259 + $0x4] sm:$0xf]
        %v1795 = vld [vmem:[%s259 + $0x8] sm:$0xf]
        %v1813 = vunpack.c.l.b16 %v1773
        %v1814 = vunpack.c.l.b16 %v1774
        %v1815 = vunpack.c.l.b16 %v1775
        %v1816 = vunpack.c.l.b16 %v1776
        %v1817 = vunpack.c.l.b16 %v1777
        %v1818 = vunpack.c.l.b16 %v1778
        %v1819 = vunpack.c.l.b16 %v1779
        %v1820 = vunpack.c.l.b16 %v1780
        %v1821 = vunpack.c.l.b16 %v1781
        %v1822 = vunpack.c.l.b16 %v1782
        %v1823 = vunpack.c.l.b16 %v1783
        %v1824 = vunpack.c.l.b16 %v1784
        %v1825 = vunpack.c.l.b16 %v1785
        %v1826 = vunpack.c.l.b16 %v1786
        %v1827 = vunpack.c.l.b16 %v1787
        %v1828 = vunpack.c.l.b16 %v1788
        %v1829 = vunpack.c.l.b16 %v1792
        %v1830 = vpack.c.b16 %v1814, %v1813
        %v1831 = vpack.c.b16 %v1816, %v1815
        %v1832 = vpack.c.b16 %v1818, %v1817
        %v1833 = vpack.c.b16 %v1820, %v1819
        %v1834 = vpack.c.b16 %v1822, %v1821
        %v1835 = vpack.c.b16 %v1824, %v1823
        %v1836 = vpack.c.b16 %v1826, %v1825
        %v1837 = vpack.c.b16 %v1828, %v1827
        %v1838 = vpack.c.b16 %v1829, %v1829
        %v1840 = vshrl.u32 %v1830, 16
        %v1842 = vshll.u32 %v1830, 16
        %v1844 = vrot.slane %v1842, 1
        %v1845 = vor.u32 %v1840, %v1844
        %v1847 = vshll.u32 %v1831, 16
        %v1849 = vrot.slane %v1847, 1
        %v1850 = vsel %vm306, %v1845, %v1849
        %v1851 = vshrl.u32 %v1831, 16
        %v1853 = vor.u32 %v1851, %v1849
        %v1855 = vshll.u32 %v1832, 16
        %v1857 = vrot.slane %v1855, 1
        %v1858 = vsel %vm306, %v1853, %v1857
        %v1859 = vshrl.u32 %v1832, 16
        %v1861 = vor.u32 %v1859, %v1857
        %v1863 = vshll.u32 %v1833, 16
        %v1865 = vrot.slane %v1863, 1
        %v1866 = vsel %vm306, %v1861, %v1865
        %v1867 = vshrl.u32 %v1833, 16
        %v1869 = vor.u32 %v1867, %v1865
        %v1871 = vshll.u32 %v1834, 16
        %v1873 = vrot.slane %v1871, 1
        %v1874 = vsel %vm306, %v1869, %v1873
        %v1875 = vshrl.u32 %v1834, 16
        %v1877 = vor.u32 %v1875, %v1873
        %v1879 = vshll.u32 %v1835, 16
        %v1881 = vrot.slane %v1879, 1
        %v1882 = vsel %vm306, %v1877, %v1881
        %v1883 = vshrl.u32 %v1835, 16
        %v1885 = vor.u32 %v1883, %v1881
        %v1887 = vshll.u32 %v1836, 16
        %v1889 = vrot.slane %v1887, 1
        %v1890 = vsel %vm306, %v1885, %v1889
        %v1891 = vshrl.u32 %v1836, 16
        %v1893 = vor.u32 %v1891, %v1889
        %v1895 = vshll.u32 %v1837, 16
        %v1897 = vrot.slane %v1895, 1
        %v1898 = vsel %vm306, %v1893, %v1897
        %v1899 = vshrl.u32 %v1837, 16
        %v1901 = vor.u32 %v1899, %v1897
        %v1903 = vshll.u32 %v1838, 16
        %v1905 = vrot.slane %v1903, 1
        %v1906 = vsel %vm306, %v1901, %v1905
        %v1910 = vunpack.c.l.b16 %v1793
        %v1911 = vunpack.c.l.b16 %v1794
        %v1912 = vunpack.c.l.b16 %v1795
        %v1913 = vpack.c.b16 %v1911, %v1910
        %v1914 = vpack.c.b16 %v1912, %v1912
        %v1917 = vsel %vm384, %v1850, 0
        %v1920 = vsel %vm384, %v1858, 0
        %v1923 = vsel %vm384, %v1866, 0
        %v1926 = vsel %vm384, %v1874, 0
        %v1929 = vsel %vm384, %v1882, 0
        %v1932 = vsel %vm384, %v1890, 0
        %v1935 = vsel %vm384, %v1898, 0
        %v1938 = vsel %vm384, %v1906, 0
        %v1941 = vsel %vm409, %v1914, 0
        %1943 = vmatpush.bf16.msra.mxu0 0
        %1944 = vmatpush.bf16.msra.mxu0 0
        %1945 = vmatpush.bf16.msra.mxu0 0
        %1946 = vmatpush.bf16.msra.mxu0 0
        %1947 = vmatpush.bf16.msra.mxu0 0
        %1948 = vmatpush.bf16.msra.mxu0 0
        %1949 = vmatpush.bf16.msra.mxu0 %v1941
        %1950 = vmatpush.bf16.msra.mxu0 %v1913
        %1951 = vmatmul.bf16.gmra.mxu0 %v1917
        %v1952 = vpop.f32.mrf.mxu0
        %v1953 = vadd.f32 0.0, %v1952
        %v1954 = vpop.f32.mrf.mxu0
        %v1955 = vadd.f32 0.0, %v1954
        %1956 = vmatmul.bf16.gmra.mxu0 %v1920
        %v1957 = vpop.f32.mrf.mxu0
        %v1958 = vadd.f32 0.0, %v1957
        %v1959 = vpop.f32.mrf.mxu0
        %v1960 = vadd.f32 0.0, %v1959
        %1961 = vmatmul.bf16.gmra.mxu0 %v1923
        %v1962 = vpop.f32.mrf.mxu0
        %v1963 = vadd.f32 0.0, %v1962
        %v1964 = vpop.f32.mrf.mxu0
        %v1965 = vadd.f32 0.0, %v1964
        %1966 = vmatmul.bf16.gmra.mxu0 %v1926
        %v1967 = vpop.f32.mrf.mxu0
        %v1968 = vadd.f32 0.0, %v1967
        %v1969 = vpop.f32.mrf.mxu0
        %v1970 = vadd.f32 0.0, %v1969
        %1971 = vmatmul.bf16.gmra.mxu0 %v1929
        %v1972 = vpop.f32.mrf.mxu0
        %v1973 = vadd.f32 0.0, %v1972
        %v1974 = vpop.f32.mrf.mxu0
        %v1975 = vadd.f32 0.0, %v1974
        %1976 = vmatmul.bf16.gmra.mxu0 %v1932
        %v1977 = vpop.f32.mrf.mxu0
        %v1978 = vadd.f32 0.0, %v1977
        %v1979 = vpop.f32.mrf.mxu0
        %v1980 = vadd.f32 0.0, %v1979
        %1981 = vmatmul.bf16.gmra.mxu0 %v1935
        %v1982 = vpop.f32.mrf.mxu0
        %v1983 = vadd.f32 0.0, %v1982
        %v1984 = vpop.f32.mrf.mxu0
        %v1985 = vadd.f32 0.0, %v1984
        %1986 = vmatmul.bf16.gmra.mxu0 %v1938
        %v1987 = vpop.f32.mrf.mxu0
        %v1988 = vadd.f32 0.0, %v1987
        %v1989 = vpop.f32.mrf.mxu0
        %v1990 = vadd.f32 0.0, %v1989
        %1991 = vdwg.mxu0
        %v1995 = vunpack.c.l.b16 %v1789
        %v1996 = vunpack.c.l.b16 %v1790
        %v1997 = vunpack.c.l.b16 %v1791
        %v1998 = vpack.c.b16 %v1996, %v1995
        %v1999 = vpack.c.b16 %v1997, %v1997
        %v2001 = vsel %vm384, %v1830, 0
        %v2003 = vsel %vm384, %v1831, 0
        %v2005 = vsel %vm384, %v1832, 0
        %v2007 = vsel %vm384, %v1833, 0
        %v2009 = vsel %vm384, %v1834, 0
        %v2011 = vsel %vm384, %v1835, 0
        %v2013 = vsel %vm384, %v1836, 0
        %v2015 = vsel %vm384, %v1837, 0
        %v2018 = vsel %vm409, %v1999, 0
        %2020 = vmatpush.bf16.msra.mxu0 0
        %2021 = vmatpush.bf16.msra.mxu0 0
        %2022 = vmatpush.bf16.msra.mxu0 0
        %2023 = vmatpush.bf16.msra.mxu0 0
        %2024 = vmatpush.bf16.msra.mxu0 0
        %2025 = vmatpush.bf16.msra.mxu0 0
        %2026 = vmatpush.bf16.msra.mxu0 %v2018
        %2027 = vmatpush.bf16.msra.mxu0 %v1998
        %2028 = vmatmul.bf16.gmra.mxu0 %v2001
        %v2029 = vpop.f32.mrf.mxu0
        %v2030 = vadd.f32 %v1953, %v2029
        %v2031 = vpop.f32.mrf.mxu0
        %v2032 = vadd.f32 %v1955, %v2031
        %2033 = vmatmul.bf16.gmra.mxu0 %v2003
        %v2034 = vpop.f32.mrf.mxu0
        %v2035 = vadd.f32 %v1958, %v2034
        %v2036 = vpop.f32.mrf.mxu0
        %v2037 = vadd.f32 %v1960, %v2036
        %2038 = vmatmul.bf16.gmra.mxu0 %v2005
        %v2039 = vpop.f32.mrf.mxu0
        %v2040 = vadd.f32 %v1963, %v2039
        %v2041 = vpop.f32.mrf.mxu0
        %v2042 = vadd.f32 %v1965, %v2041
        %2043 = vmatmul.bf16.gmra.mxu0 %v2007
        %v2044 = vpop.f32.mrf.mxu0
        %v2045 = vadd.f32 %v1968, %v2044
        %v2046 = vpop.f32.mrf.mxu0
        %v2047 = vadd.f32 %v1970, %v2046
        %2048 = vmatmul.bf16.gmra.mxu0 %v2009
        %v2049 = vpop.f32.mrf.mxu0
        %v2050 = vadd.f32 %v1973, %v2049
        %v2051 = vpop.f32.mrf.mxu0
        %v2052 = vadd.f32 %v1975, %v2051
        %2053 = vmatmul.bf16.gmra.mxu0 %v2011
        %v2054 = vpop.f32.mrf.mxu0
        %v2055 = vadd.f32 %v1978, %v2054
        %v2056 = vpop.f32.mrf.mxu0
        %v2057 = vadd.f32 %v1980, %v2056
        %2058 = vmatmul.bf16.gmra.mxu0 %v2013
        %v2059 = vpop.f32.mrf.mxu0
        %v2060 = vadd.f32 %v1983, %v2059
        %v2061 = vpop.f32.mrf.mxu0
        %v2062 = vadd.f32 %v1985, %v2061
        %2063 = vmatmul.bf16.gmra.mxu0 %v2015
        %v2064 = vpop.f32.mrf.mxu0
        %v2065 = vadd.f32 %v1988, %v2064
        %v2066 = vpop.f32.mrf.mxu0
        %v2067 = vadd.f32 %v1990, %v2066
        %2068 = vdwg.mxu0
        %v2069 = vld [vmem:[%s229 + $0x40] sm:$0xe]
        %v2070 = vld [vmem:[%s540] sm:$0xf]
        %v2071 = vld [vmem:[%s540 + $0x4] sm:$0xf]
        %v2072 = vld [vmem:[%s540 + $0x8] sm:$0xf]
        %v2074 = vunpack.c.l.b16 %v2069
        %v2075 = vpack.c.b16 %v1814, %v2074
        %v2076 = vrot.slane %v2075, 1
        %v2077 = vrot.slane %v1831, 1
        %v2078 = vsel %vm547, %v2076, %v2077
        %v2079 = vrot.slane %v1832, 1
        %v2080 = vsel %vm547, %v2077, %v2079
        %v2081 = vrot.slane %v1833, 1
        %v2082 = vsel %vm547, %v2079, %v2081
        %v2083 = vrot.slane %v1834, 1
        %v2084 = vsel %vm547, %v2081, %v2083
        %v2085 = vrot.slane %v1835, 1
        %v2086 = vsel %vm547, %v2083, %v2085
        %v2087 = vrot.slane %v1836, 1
        %v2088 = vsel %vm547, %v2085, %v2087
        %v2089 = vrot.slane %v1837, 1
        %v2090 = vsel %vm547, %v2087, %v2089
        %v2091 = vrot.slane %v1838, 1
        %v2092 = vsel %vm547, %v2089, %v2091
        %v2096 = vunpack.c.l.b16 %v2070
        %v2097 = vunpack.c.l.b16 %v2071
        %v2098 = vunpack.c.l.b16 %v2072
        %v2099 = vpack.c.b16 %v2097, %v2096
        %v2100 = vpack.c.b16 %v2098, %v2098
        %v2103 = vsel %vm384, %v2078, 0
        %v2106 = vsel %vm384, %v2080, 0
        %v2109 = vsel %vm384, %v2082, 0
        %v2112 = vsel %vm384, %v2084, 0
        %v2115 = vsel %vm384, %v2086, 0
        %v2118 = vsel %vm384, %v2088, 0
        %v2121 = vsel %vm384, %v2090, 0
        %v2124 = vsel %vm384, %v2092, 0
        %v2127 = vsel %vm409, %v2100, 0
        %2129 = vmatpush.bf16.msra.mxu0 0
        %2130 = vmatpush.bf16.msra.mxu0 0
        %2131 = vmatpush.bf16.msra.mxu0 0
        %2132 = vmatpush.bf16.msra.mxu0 0
        %2133 = vmatpush.bf16.msra.mxu0 0
        %2134 = vmatpush.bf16.msra.mxu0 0
        %2135 = vmatpush.bf16.msra.mxu0 %v2127
        %2136 = vmatpush.bf16.msra.mxu0 %v2099
        %2137 = vmatmul.bf16.gmra.mxu0 %v2103
        %v2138 = vpop.f32.mrf.mxu0
        %v2139 = vadd.f32 0.0, %v2138
        %v2140 = vpop.f32.mrf.mxu0
        %v2141 = vadd.f32 0.0, %v2140
        %2142 = vmatmul.bf16.gmra.mxu0 %v2106
        %v2143 = vpop.f32.mrf.mxu0
        %v2144 = vadd.f32 0.0, %v2143
        %v2145 = vpop.f32.mrf.mxu0
        %v2146 = vadd.f32 0.0, %v2145
        %2147 = vmatmul.bf16.gmra.mxu0 %v2109
        %v2148 = vpop.f32.mrf.mxu0
        %v2149 = vadd.f32 0.0, %v2148
        %v2150 = vpop.f32.mrf.mxu0
        %v2151 = vadd.f32 0.0, %v2150
        %2152 = vmatmul.bf16.gmra.mxu0 %v2112
        %v2153 = vpop.f32.mrf.mxu0
        %v2154 = vadd.f32 0.0, %v2153
        %v2155 = vpop.f32.mrf.mxu0
        %v2156 = vadd.f32 0.0, %v2155
        %2157 = vmatmul.bf16.gmra.mxu0 %v2115
        %v2158 = vpop.f32.mrf.mxu0
        %v2159 = vadd.f32 0.0, %v2158
        %v2160 = vpop.f32.mrf.mxu0
        %v2161 = vadd.f32 0.0, %v2160
        %2162 = vmatmul.bf16.gmra.mxu0 %v2118
        %v2163 = vpop.f32.mrf.mxu0
        %v2164 = vadd.f32 0.0, %v2163
        %v2165 = vpop.f32.mrf.mxu0
        %v2166 = vadd.f32 0.0, %v2165
        %2167 = vmatmul.bf16.gmra.mxu0 %v2121
        %v2168 = vpop.f32.mrf.mxu0
        %v2169 = vadd.f32 0.0, %v2168
        %v2170 = vpop.f32.mrf.mxu0
        %v2171 = vadd.f32 0.0, %v2170
        %2172 = vmatmul.bf16.gmra.mxu0 %v2124
        %v2173 = vpop.f32.mrf.mxu0
        %v2174 = vadd.f32 0.0, %v2173
        %v2175 = vpop.f32.mrf.mxu0
        %v2176 = vadd.f32 0.0, %v2175
        %2177 = vdwg.mxu0
        %v2178 = vadd.f32 %v2030, %v2139
        %v2179 = vadd.f32 %v2032, %v2141
        %v2180 = vadd.f32 %v2035, %v2144
        %v2181 = vadd.f32 %v2037, %v2146
        %v2182 = vadd.f32 %v2040, %v2149
        %v2183 = vadd.f32 %v2042, %v2151
        %v2184 = vadd.f32 %v2045, %v2154
        %v2185 = vadd.f32 %v2047, %v2156
        %v2186 = vadd.f32 %v2050, %v2159
        %v2187 = vadd.f32 %v2052, %v2161
        %v2188 = vadd.f32 %v2055, %v2164
        %v2189 = vadd.f32 %v2057, %v2166
        %v2190 = vadd.f32 %v2060, %v2169
        %v2191 = vadd.f32 %v2062, %v2171
        %v2192 = vadd.f32 %v2065, %v2174
        %v2193 = vadd.f32 %v2067, %v2176
        %v2194 = vld [vmem:[%s229 + $0x4c] sm:$0xf]
        %v2195 = vld [vmem:[%s229 + $0x50] sm:$0xf]
        %v2196 = vld [vmem:[%s229 + $0x54] sm:$0xf]
        %v2197 = vld [vmem:[%s229 + $0x58] sm:$0xf]
        %v2198 = vld [vmem:[%s229 + $0x5c] sm:$0xf]
        %v2199 = vld [vmem:[%s229 + $0x60] sm:$0xf]
        %v2200 = vld [vmem:[%s229 + $0x64] sm:$0xf]
        %v2201 = vld [vmem:[%s229 + $0x68] sm:$0xf]
        %v2202 = vld [vmem:[%s229 + $0x6c] sm:$0xf]
        %v2203 = vld [vmem:[%s229 + $0x70] sm:$0xf]
        %v2204 = vld [vmem:[%s229 + $0x74] sm:$0xf]
        %v2205 = vld [vmem:[%s229 + $0x78] sm:$0xf]
        %v2206 = vld [vmem:[%s229 + $0x7c] sm:$0xf]
        %v2207 = vld [vmem:[%s229 + $0x80] sm:$0xf]
        %v2208 = vld [vmem:[%s229 + $0x84] sm:$0xf]
        %v2209 = vld [vmem:[%s229 + $0x88] sm:$0xf]
        %v2210 = vld [vmem:[%s682] sm:$0xf]
        %v2211 = vld [vmem:[%s682 + $0x4] sm:$0xf]
        %v2212 = vld [vmem:[%s682 + $0x8] sm:$0xf]
        %v2229 = vunpack.c.l.b16 %v2194
        %v2230 = vunpack.c.l.b16 %v2195
        %v2231 = vunpack.c.l.b16 %v2196
        %v2232 = vunpack.c.l.b16 %v2197
        %v2233 = vunpack.c.l.b16 %v2198
        %v2234 = vunpack.c.l.b16 %v2199
        %v2235 = vunpack.c.l.b16 %v2200
        %v2236 = vunpack.c.l.b16 %v2201
        %v2237 = vunpack.c.l.b16 %v2202
        %v2238 = vunpack.c.l.b16 %v2203
        %v2239 = vunpack.c.l.b16 %v2204
        %v2240 = vunpack.c.l.b16 %v2205
        %v2241 = vunpack.c.l.b16 %v2206
        %v2242 = vunpack.c.l.b16 %v2207
        %v2243 = vunpack.c.l.b16 %v2208
        %v2244 = vunpack.c.l.b16 %v2209
        %v2245 = vpack.c.b16 %v2230, %v2229
        %v2246 = vpack.c.b16 %v2232, %v2231
        %v2247 = vpack.c.b16 %v2234, %v2233
        %v2248 = vpack.c.b16 %v2236, %v2235
        %v2249 = vpack.c.b16 %v2238, %v2237
        %v2250 = vpack.c.b16 %v2240, %v2239
        %v2251 = vpack.c.b16 %v2242, %v2241
        %v2252 = vpack.c.b16 %v2244, %v2243
        %v2256 = vunpack.c.l.b16 %v2210
        %v2257 = vunpack.c.l.b16 %v2211
        %v2258 = vunpack.c.l.b16 %v2212
        %v2259 = vpack.c.b16 %v2257, %v2256
        %v2260 = vpack.c.b16 %v2258, %v2258
        %v2263 = vsel %vm384, %v2245, 0
        %v2266 = vsel %vm384, %v2246, 0
        %v2269 = vsel %vm384, %v2247, 0
        %v2272 = vsel %vm384, %v2248, 0
        %v2275 = vsel %vm384, %v2249, 0
        %v2278 = vsel %vm384, %v2250, 0
        %v2281 = vsel %vm384, %v2251, 0
        %v2284 = vsel %vm384, %v2252, 0
        %v2287 = vsel %vm409, %v2260, 0
        %2289 = vmatpush.bf16.msra.mxu0 0
        %2290 = vmatpush.bf16.msra.mxu0 0
        %2291 = vmatpush.bf16.msra.mxu0 0
        %2292 = vmatpush.bf16.msra.mxu0 0
        %2293 = vmatpush.bf16.msra.mxu0 0
        %2294 = vmatpush.bf16.msra.mxu0 0
        %2295 = vmatpush.bf16.msra.mxu0 %v2287
        %2296 = vmatpush.bf16.msra.mxu0 %v2259
        %2297 = vmatmul.bf16.gmra.mxu0 %v2263
        %v2298 = vpop.f32.mrf.mxu0
        %v2299 = vadd.f32 0.0, %v2298
        %v2300 = vpop.f32.mrf.mxu0
        %v2301 = vadd.f32 0.0, %v2300
        %2302 = vmatmul.bf16.gmra.mxu0 %v2266
        %v2303 = vpop.f32.mrf.mxu0
        %v2304 = vadd.f32 0.0, %v2303
        %v2305 = vpop.f32.mrf.mxu0
        %v2306 = vadd.f32 0.0, %v2305
        %2307 = vmatmul.bf16.gmra.mxu0 %v2269
        %v2308 = vpop.f32.mrf.mxu0
        %v2309 = vadd.f32 0.0, %v2308
        %v2310 = vpop.f32.mrf.mxu0
        %v2311 = vadd.f32 0.0, %v2310
        %2312 = vmatmul.bf16.gmra.mxu0 %v2272
        %v2313 = vpop.f32.mrf.mxu0
        %v2314 = vadd.f32 0.0, %v2313
        %v2315 = vpop.f32.mrf.mxu0
        %v2316 = vadd.f32 0.0, %v2315
        %2317 = vmatmul.bf16.gmra.mxu0 %v2275
        %v2318 = vpop.f32.mrf.mxu0
        %v2319 = vadd.f32 0.0, %v2318
        %v2320 = vpop.f32.mrf.mxu0
        %v2321 = vadd.f32 0.0, %v2320
        %2322 = vmatmul.bf16.gmra.mxu0 %v2278
        %v2323 = vpop.f32.mrf.mxu0
        %v2324 = vadd.f32 0.0, %v2323
        %v2325 = vpop.f32.mrf.mxu0
        %v2326 = vadd.f32 0.0, %v2325
        %2327 = vmatmul.bf16.gmra.mxu0 %v2281
        %v2328 = vpop.f32.mrf.mxu0
        %v2329 = vadd.f32 0.0, %v2328
        %v2330 = vpop.f32.mrf.mxu0
        %v2331 = vadd.f32 0.0, %v2330
        %2332 = vmatmul.bf16.gmra.mxu0 %v2284
        %v2333 = vpop.f32.mrf.mxu0
        %v2334 = vadd.f32 0.0, %v2333
        %v2335 = vpop.f32.mrf.mxu0
        %v2336 = vadd.f32 0.0, %v2335
        %2337 = vdwg.mxu0
        %v2338 = vadd.f32 %v2178, %v2299
        %v2339 = vadd.f32 %v2179, %v2301
        %v2340 = vadd.f32 %v2180, %v2304
        %v2341 = vadd.f32 %v2181, %v2306
        %v2342 = vadd.f32 %v2182, %v2309
        %v2343 = vadd.f32 %v2183, %v2311
        %v2344 = vadd.f32 %v2184, %v2314
        %v2345 = vadd.f32 %v2185, %v2316
        %v2346 = vadd.f32 %v2186, %v2319
        %v2347 = vadd.f32 %v2187, %v2321
        %v2348 = vadd.f32 %v2188, %v2324
        %v2349 = vadd.f32 %v2189, %v2326
        %v2350 = vadd.f32 %v2190, %v2329
        %v2351 = vadd.f32 %v2191, %v2331
        %v2352 = vadd.f32 %v2192, %v2334
        %v2353 = vadd.f32 %v2193, %v2336
        %v2354 = vld [vmem:[%s229 + $0x4c] sm:$0xf]
        %v2355 = vld [vmem:[%s229 + $0x50] sm:$0xf]
        %v2356 = vld [vmem:[%s229 + $0x54] sm:$0xf]
        %v2357 = vld [vmem:[%s229 + $0x58] sm:$0xf]
        %v2358 = vld [vmem:[%s229 + $0x5c] sm:$0xf]
        %v2359 = vld [vmem:[%s229 + $0x60] sm:$0xf]
        %v2360 = vld [vmem:[%s229 + $0x64] sm:$0xf]
        %v2361 = vld [vmem:[%s229 + $0x68] sm:$0xf]
        %v2362 = vld [vmem:[%s229 + $0x6c] sm:$0xf]
        %v2363 = vld [vmem:[%s229 + $0x70] sm:$0xf]
        %v2364 = vld [vmem:[%s229 + $0x74] sm:$0xf]
        %v2365 = vld [vmem:[%s229 + $0x78] sm:$0xf]
        %v2366 = vld [vmem:[%s229 + $0x7c] sm:$0xf]
        %v2367 = vld [vmem:[%s229 + $0x80] sm:$0xf]
        %v2368 = vld [vmem:[%s229 + $0x84] sm:$0xf]
        %v2369 = vld [vmem:[%s229 + $0x88] sm:$0xf]
        %v2370 = vld [vmem:[%s229 + $0x8c] sm:$0x1]
        %v2371 = vld [vmem:[%s844] sm:$0xf]
        %v2372 = vld [vmem:[%s844 + $0x4] sm:$0xf]
        %v2373 = vld [vmem:[%s844 + $0x8] sm:$0xf]
        %v2391 = vunpack.c.l.b16 %v2354
        %v2392 = vunpack.c.l.b16 %v2355
        %v2393 = vunpack.c.l.b16 %v2356
        %v2394 = vunpack.c.l.b16 %v2357
        %v2395 = vunpack.c.l.b16 %v2358
        %v2396 = vunpack.c.l.b16 %v2359
        %v2397 = vunpack.c.l.b16 %v2360
        %v2398 = vunpack.c.l.b16 %v2361
        %v2399 = vunpack.c.l.b16 %v2362
        %v2400 = vunpack.c.l.b16 %v2363
        %v2401 = vunpack.c.l.b16 %v2364
        %v2402 = vunpack.c.l.b16 %v2365
        %v2403 = vunpack.c.l.b16 %v2366
        %v2404 = vunpack.c.l.b16 %v2367
        %v2405 = vunpack.c.l.b16 %v2368
        %v2406 = vunpack.c.l.b16 %v2369
        %v2407 = vunpack.c.l.b16 %v2370
        %v2408 = vpack.c.b16 %v2392, %v2391
        %v2409 = vpack.c.b16 %v2394, %v2393
        %v2410 = vpack.c.b16 %v2396, %v2395
        %v2411 = vpack.c.b16 %v2398, %v2397
        %v2412 = vpack.c.b16 %v2400, %v2399
        %v2413 = vpack.c.b16 %v2402, %v2401
        %v2414 = vpack.c.b16 %v2404, %v2403
        %v2415 = vpack.c.b16 %v2406, %v2405
        %v2416 = vpack.c.b16 %v2407, %v2407
        %v2418 = vshrl.u32 %v2408, 16
        %v2420 = vshll.u32 %v2408, 16
        %v2422 = vrot.slane %v2420, 1
        %v2423 = vor.u32 %v2418, %v2422
        %v2425 = vshll.u32 %v2409, 16
        %v2427 = vrot.slane %v2425, 1
        %v2428 = vsel %vm306, %v2423, %v2427
        %v2429 = vshrl.u32 %v2409, 16
        %v2431 = vor.u32 %v2429, %v2427
        %v2433 = vshll.u32 %v2410, 16
        %v2435 = vrot.slane %v2433, 1
        %v2436 = vsel %vm306, %v2431, %v2435
        %v2437 = vshrl.u32 %v2410, 16
        %v2439 = vor.u32 %v2437, %v2435
        %v2441 = vshll.u32 %v2411, 16
        %v2443 = vrot.slane %v2441, 1
        %v2444 = vsel %vm306, %v2439, %v2443
        %v2445 = vshrl.u32 %v2411, 16
        %v2447 = vor.u32 %v2445, %v2443
        %v2449 = vshll.u32 %v2412, 16
        %v2451 = vrot.slane %v2449, 1
        %v2452 = vsel %vm306, %v2447, %v2451
        %v2453 = vshrl.u32 %v2412, 16
        %v2455 = vor.u32 %v2453, %v2451
        %v2457 = vshll.u32 %v2413, 16
        %v2459 = vrot.slane %v2457, 1
        %v2460 = vsel %vm306, %v2455, %v2459
        %v2461 = vshrl.u32 %v2413, 16
        %v2463 = vor.u32 %v2461, %v2459
        %v2465 = vshll.u32 %v2414, 16
        %v2467 = vrot.slane %v2465, 1
        %v2468 = vsel %vm306, %v2463, %v2467
        %v2469 = vshrl.u32 %v2414, 16
        %v2471 = vor.u32 %v2469, %v2467
        %v2473 = vshll.u32 %v2415, 16
        %v2475 = vrot.slane %v2473, 1
        %v2476 = vsel %vm306, %v2471, %v2475
        %v2477 = vshrl.u32 %v2415, 16
        %v2479 = vor.u32 %v2477, %v2475
        %v2481 = vshll.u32 %v2416, 16
        %v2483 = vrot.slane %v2481, 1
        %v2484 = vsel %vm306, %v2479, %v2483
        %v2488 = vunpack.c.l.b16 %v2371
        %v2489 = vunpack.c.l.b16 %v2372
        %v2490 = vunpack.c.l.b16 %v2373
        %v2491 = vpack.c.b16 %v2489, %v2488
        %v2492 = vpack.c.b16 %v2490, %v2490
        %v2495 = vsel %vm384, %v2428, 0
        %v2498 = vsel %vm384, %v2436, 0
        %v2501 = vsel %vm384, %v2444, 0
        %v2504 = vsel %vm384, %v2452, 0
        %v2507 = vsel %vm384, %v2460, 0
        %v2510 = vsel %vm384, %v2468, 0
        %v2513 = vsel %vm384, %v2476, 0
        %v2516 = vsel %vm384, %v2484, 0
        %v2519 = vsel %vm409, %v2492, 0
        %2521 = vmatpush.bf16.msra.mxu0 0
        %2522 = vmatpush.bf16.msra.mxu0 0
        %2523 = vmatpush.bf16.msra.mxu0 0
        %2524 = vmatpush.bf16.msra.mxu0 0
        %2525 = vmatpush.bf16.msra.mxu0 0
        %2526 = vmatpush.bf16.msra.mxu0 0
        %2527 = vmatpush.bf16.msra.mxu0 %v2519
        %2528 = vmatpush.bf16.msra.mxu0 %v2491
        %2529 = vmatmul.bf16.gmra.mxu0 %v2495
        %v2530 = vpop.f32.mrf.mxu0
        %v2531 = vadd.f32 0.0, %v2530
        %v2532 = vpop.f32.mrf.mxu0
        %v2533 = vadd.f32 0.0, %v2532
        %2534 = vmatmul.bf16.gmra.mxu0 %v2498
        %v2535 = vpop.f32.mrf.mxu0
        %v2536 = vadd.f32 0.0, %v2535
        %v2537 = vpop.f32.mrf.mxu0
        %v2538 = vadd.f32 0.0, %v2537
        %2539 = vmatmul.bf16.gmra.mxu0 %v2501
        %v2540 = vpop.f32.mrf.mxu0
        %v2541 = vadd.f32 0.0, %v2540
        %v2542 = vpop.f32.mrf.mxu0
        %v2543 = vadd.f32 0.0, %v2542
        %2544 = vmatmul.bf16.gmra.mxu0 %v2504
        %v2545 = vpop.f32.mrf.mxu0
        %v2546 = vadd.f32 0.0, %v2545
        %v2547 = vpop.f32.mrf.mxu0
        %v2548 = vadd.f32 0.0, %v2547
        %2549 = vmatmul.bf16.gmra.mxu0 %v2507
        %v2550 = vpop.f32.mrf.mxu0
        %v2551 = vadd.f32 0.0, %v2550
        %v2552 = vpop.f32.mrf.mxu0
        %v2553 = vadd.f32 0.0, %v2552
        %2554 = vmatmul.bf16.gmra.mxu0 %v2510
        %v2555 = vpop.f32.mrf.mxu0
        %v2556 = vadd.f32 0.0, %v2555
        %v2557 = vpop.f32.mrf.mxu0
        %v2558 = vadd.f32 0.0, %v2557
        %2559 = vmatmul.bf16.gmra.mxu0 %v2513
        %v2560 = vpop.f32.mrf.mxu0
        %v2561 = vadd.f32 0.0, %v2560
        %v2562 = vpop.f32.mrf.mxu0
        %v2563 = vadd.f32 0.0, %v2562
        %2564 = vmatmul.bf16.gmra.mxu0 %v2516
        %v2565 = vpop.f32.mrf.mxu0
        %v2566 = vadd.f32 0.0, %v2565
        %v2567 = vpop.f32.mrf.mxu0
        %v2568 = vadd.f32 0.0, %v2567
        %2569 = vdwg.mxu0
        %v2570 = vadd.f32 %v2338, %v2531
        %v2571 = vadd.f32 %v2339, %v2533
        %v2572 = vadd.f32 %v2340, %v2536
        %v2573 = vadd.f32 %v2341, %v2538
        %v2574 = vadd.f32 %v2342, %v2541
        %v2575 = vadd.f32 %v2343, %v2543
        %v2576 = vadd.f32 %v2344, %v2546
        %v2577 = vadd.f32 %v2345, %v2548
        %v2578 = vadd.f32 %v2346, %v2551
        %v2579 = vadd.f32 %v2347, %v2553
        %v2580 = vadd.f32 %v2348, %v2556
        %v2581 = vadd.f32 %v2349, %v2558
        %v2582 = vadd.f32 %v2350, %v2561
        %v2583 = vadd.f32 %v2351, %v2563
        %v2584 = vadd.f32 %v2352, %v2566
        %v2585 = vadd.f32 %v2353, %v2568
        %v2586 = vld [vmem:[%s229 + $0x4c] sm:$0xe]
        %v2587 = vld [vmem:[%s1061] sm:$0xf]
        %v2588 = vld [vmem:[%s1061 + $0x4] sm:$0xf]
        %v2589 = vld [vmem:[%s1061 + $0x8] sm:$0xf]
        %v2591 = vunpack.c.l.b16 %v2586
        %v2592 = vpack.c.b16 %v2392, %v2591
        %v2593 = vrot.slane %v2592, 1
        %v2594 = vrot.slane %v2409, 1
        %v2595 = vsel %vm547, %v2593, %v2594
        %v2596 = vrot.slane %v2410, 1
        %v2597 = vsel %vm547, %v2594, %v2596
        %v2598 = vrot.slane %v2411, 1
        %v2599 = vsel %vm547, %v2596, %v2598
        %v2600 = vrot.slane %v2412, 1
        %v2601 = vsel %vm547, %v2598, %v2600
        %v2602 = vrot.slane %v2413, 1
        %v2603 = vsel %vm547, %v2600, %v2602
        %v2604 = vrot.slane %v2414, 1
        %v2605 = vsel %vm547, %v2602, %v2604
        %v2606 = vrot.slane %v2415, 1
        %v2607 = vsel %vm547, %v2604, %v2606
        %v2608 = vrot.slane %v2416, 1
        %v2609 = vsel %vm547, %v2606, %v2608
        %v2613 = vunpack.c.l.b16 %v2587
        %v2614 = vunpack.c.l.b16 %v2588
        %v2615 = vunpack.c.l.b16 %v2589
        %v2616 = vpack.c.b16 %v2614, %v2613
        %v2617 = vpack.c.b16 %v2615, %v2615
        %v2620 = vsel %vm384, %v2595, 0
        %v2623 = vsel %vm384, %v2597, 0
        %v2626 = vsel %vm384, %v2599, 0
        %v2629 = vsel %vm384, %v2601, 0
        %v2632 = vsel %vm384, %v2603, 0
        %v2635 = vsel %vm384, %v2605, 0
        %v2638 = vsel %vm384, %v2607, 0
        %v2641 = vsel %vm384, %v2609, 0
        %v2644 = vsel %vm409, %v2617, 0
        %2646 = vmatpush.bf16.msra.mxu0 0
        %2647 = vmatpush.bf16.msra.mxu0 0
        %2648 = vmatpush.bf16.msra.mxu0 0
        %2649 = vmatpush.bf16.msra.mxu0 0
        %2650 = vmatpush.bf16.msra.mxu0 0
        %2651 = vmatpush.bf16.msra.mxu0 0
        %2652 = vmatpush.bf16.msra.mxu0 %v2644
        %2653 = vmatpush.bf16.msra.mxu0 %v2616
        %2654 = vmatmul.bf16.gmra.mxu0 %v2620
        %v2655 = vpop.f32.mrf.mxu0
        %v2656 = vadd.f32 0.0, %v2655
        %v2657 = vpop.f32.mrf.mxu0
        %v2658 = vadd.f32 0.0, %v2657
        %2659 = vmatmul.bf16.gmra.mxu0 %v2623
        %v2660 = vpop.f32.mrf.mxu0
        %v2661 = vadd.f32 0.0, %v2660
        %v2662 = vpop.f32.mrf.mxu0
        %v2663 = vadd.f32 0.0, %v2662
        %2664 = vmatmul.bf16.gmra.mxu0 %v2626
        %v2665 = vpop.f32.mrf.mxu0
        %v2666 = vadd.f32 0.0, %v2665
        %v2667 = vpop.f32.mrf.mxu0
        %v2668 = vadd.f32 0.0, %v2667
        %2669 = vmatmul.bf16.gmra.mxu0 %v2629
        %v2670 = vpop.f32.mrf.mxu0
        %v2671 = vadd.f32 0.0, %v2670
        %v2672 = vpop.f32.mrf.mxu0
        %v2673 = vadd.f32 0.0, %v2672
        %2674 = vmatmul.bf16.gmra.mxu0 %v2632
        %v2675 = vpop.f32.mrf.mxu0
        %v2676 = vadd.f32 0.0, %v2675
        %v2677 = vpop.f32.mrf.mxu0
        %v2678 = vadd.f32 0.0, %v2677
        %2679 = vmatmul.bf16.gmra.mxu0 %v2635
        %v2680 = vpop.f32.mrf.mxu0
        %v2681 = vadd.f32 0.0, %v2680
        %v2682 = vpop.f32.mrf.mxu0
        %v2683 = vadd.f32 0.0, %v2682
        %2684 = vmatmul.bf16.gmra.mxu0 %v2638
        %v2685 = vpop.f32.mrf.mxu0
        %v2686 = vadd.f32 0.0, %v2685
        %v2687 = vpop.f32.mrf.mxu0
        %v2688 = vadd.f32 0.0, %v2687
        %2689 = vmatmul.bf16.gmra.mxu0 %v2641
        %v2690 = vpop.f32.mrf.mxu0
        %v2691 = vadd.f32 0.0, %v2690
        %v2692 = vpop.f32.mrf.mxu0
        %v2693 = vadd.f32 0.0, %v2692
        %2694 = vdwg.mxu0
        %v2695 = vadd.f32 %v2570, %v2656
        %v2696 = vadd.f32 %v2571, %v2658
        %v2697 = vadd.f32 %v2572, %v2661
        %v2698 = vadd.f32 %v2573, %v2663
        %v2699 = vadd.f32 %v2574, %v2666
        %v2700 = vadd.f32 %v2575, %v2668
        %v2701 = vadd.f32 %v2576, %v2671
        %v2702 = vadd.f32 %v2577, %v2673
        %v2703 = vadd.f32 %v2578, %v2676
        %v2704 = vadd.f32 %v2579, %v2678
        %v2705 = vadd.f32 %v2580, %v2681
        %v2706 = vadd.f32 %v2581, %v2683
        %v2707 = vadd.f32 %v2582, %v2686
        %v2708 = vadd.f32 %v2583, %v2688
        %v2709 = vadd.f32 %v2584, %v2691
        %v2710 = vadd.f32 %v2585, %v2693
        %v2711 = vld [vmem:[%s229 + $0x58] sm:$0xf]
        %v2712 = vld [vmem:[%s229 + $0x5c] sm:$0xf]
        %v2713 = vld [vmem:[%s229 + $0x60] sm:$0xf]
        %v2714 = vld [vmem:[%s229 + $0x64] sm:$0xf]
        %v2715 = vld [vmem:[%s229 + $0x68] sm:$0xf]
        %v2716 = vld [vmem:[%s229 + $0x6c] sm:$0xf]
        %v2717 = vld [vmem:[%s229 + $0x70] sm:$0xf]
        %v2718 = vld [vmem:[%s229 + $0x74] sm:$0xf]
        %v2719 = vld [vmem:[%s229 + $0x78] sm:$0xf]
        %v2720 = vld [vmem:[%s229 + $0x7c] sm:$0xf]
        %v2721 = vld [vmem:[%s229 + $0x80] sm:$0xf]
        %v2722 = vld [vmem:[%s229 + $0x84] sm:$0xf]
        %v2723 = vld [vmem:[%s229 + $0x88] sm:$0xf]
        %v2724 = vld [vmem:[%s229 + $0x8c] sm:$0xf]
        %v2725 = vld [vmem:[%s229 + $0x90] sm:$0xf]
        %v2726 = vld [vmem:[%s229 + $0x94] sm:$0xf]
        %v2727 = vld [vmem:[%s1202] sm:$0xf]
        %v2728 = vld [vmem:[%s1202 + $0x4] sm:$0xf]
        %v2729 = vld [vmem:[%s1202 + $0x8] sm:$0xf]
        %v2746 = vunpack.c.l.b16 %v2711
        %v2747 = vunpack.c.l.b16 %v2712
        %v2748 = vunpack.c.l.b16 %v2713
        %v2749 = vunpack.c.l.b16 %v2714
        %v2750 = vunpack.c.l.b16 %v2715
        %v2751 = vunpack.c.l.b16 %v2716
        %v2752 = vunpack.c.l.b16 %v2717
        %v2753 = vunpack.c.l.b16 %v2718
        %v2754 = vunpack.c.l.b16 %v2719
        %v2755 = vunpack.c.l.b16 %v2720
        %v2756 = vunpack.c.l.b16 %v2721
        %v2757 = vunpack.c.l.b16 %v2722
        %v2758 = vunpack.c.l.b16 %v2723
        %v2759 = vunpack.c.l.b16 %v2724
        %v2760 = vunpack.c.l.b16 %v2725
        %v2761 = vunpack.c.l.b16 %v2726
        %v2762 = vpack.c.b16 %v2747, %v2746
        %v2763 = vpack.c.b16 %v2749, %v2748
        %v2764 = vpack.c.b16 %v2751, %v2750
        %v2765 = vpack.c.b16 %v2753, %v2752
        %v2766 = vpack.c.b16 %v2755, %v2754
        %v2767 = vpack.c.b16 %v2757, %v2756
        %v2768 = vpack.c.b16 %v2759, %v2758
        %v2769 = vpack.c.b16 %v2761, %v2760
        %v2773 = vunpack.c.l.b16 %v2727
        %v2774 = vunpack.c.l.b16 %v2728
        %v2775 = vunpack.c.l.b16 %v2729
        %v2776 = vpack.c.b16 %v2774, %v2773
        %v2777 = vpack.c.b16 %v2775, %v2775
        %v2780 = vsel %vm384, %v2762, 0
        %v2783 = vsel %vm384, %v2763, 0
        %v2786 = vsel %vm384, %v2764, 0
        %v2789 = vsel %vm384, %v2765, 0
        %v2792 = vsel %vm384, %v2766, 0
        %v2795 = vsel %vm384, %v2767, 0
        %v2798 = vsel %vm384, %v2768, 0
        %v2801 = vsel %vm384, %v2769, 0
        %v2804 = vsel %vm409, %v2777, 0
        %2806 = vmatpush.bf16.msra.mxu0 0
        %2807 = vmatpush.bf16.msra.mxu0 0
        %2808 = vmatpush.bf16.msra.mxu0 0
        %2809 = vmatpush.bf16.msra.mxu0 0
        %2810 = vmatpush.bf16.msra.mxu0 0
        %2811 = vmatpush.bf16.msra.mxu0 0
        %2812 = vmatpush.bf16.msra.mxu0 %v2804
        %2813 = vmatpush.bf16.msra.mxu0 %v2776
        %2814 = vmatmul.bf16.gmra.mxu0 %v2780
        %v2815 = vpop.f32.mrf.mxu0
        %v2816 = vadd.f32 0.0, %v2815
        %v2817 = vpop.f32.mrf.mxu0
        %v2818 = vadd.f32 0.0, %v2817
        %2819 = vmatmul.bf16.gmra.mxu0 %v2783
        %v2820 = vpop.f32.mrf.mxu0
        %v2821 = vadd.f32 0.0, %v2820
        %v2822 = vpop.f32.mrf.mxu0
        %v2823 = vadd.f32 0.0, %v2822
        %2824 = vmatmul.bf16.gmra.mxu0 %v2786
        %v2825 = vpop.f32.mrf.mxu0
        %v2826 = vadd.f32 0.0, %v2825
        %v2827 = vpop.f32.mrf.mxu0
        %v2828 = vadd.f32 0.0, %v2827
        %2829 = vmatmul.bf16.gmra.mxu0 %v2789
        %v2830 = vpop.f32.mrf.mxu0
        %v2831 = vadd.f32 0.0, %v2830
        %v2832 = vpop.f32.mrf.mxu0
        %v2833 = vadd.f32 0.0, %v2832
        %2834 = vmatmul.bf16.gmra.mxu0 %v2792
        %v2835 = vpop.f32.mrf.mxu0
        %v2836 = vadd.f32 0.0, %v2835
        %v2837 = vpop.f32.mrf.mxu0
        %v2838 = vadd.f32 0.0, %v2837
        %2839 = vmatmul.bf16.gmra.mxu0 %v2795
        %v2840 = vpop.f32.mrf.mxu0
        %v2841 = vadd.f32 0.0, %v2840
        %v2842 = vpop.f32.mrf.mxu0
        %v2843 = vadd.f32 0.0, %v2842
        %2844 = vmatmul.bf16.gmra.mxu0 %v2798
        %v2845 = vpop.f32.mrf.mxu0
        %v2846 = vadd.f32 0.0, %v2845
        %v2847 = vpop.f32.mrf.mxu0
        %v2848 = vadd.f32 0.0, %v2847
        %2849 = vmatmul.bf16.gmra.mxu0 %v2801
        %v2850 = vpop.f32.mrf.mxu0
        %v2851 = vadd.f32 0.0, %v2850
        %v2852 = vpop.f32.mrf.mxu0
        %v2853 = vadd.f32 0.0, %v2852
        %2854 = vdwg.mxu0
        %v2855 = vadd.f32 %v2695, %v2816
        %v2856 = vadd.f32 %v2696, %v2818
        %v2857 = vadd.f32 %v2697, %v2821
        %v2858 = vadd.f32 %v2698, %v2823
        %v2859 = vadd.f32 %v2699, %v2826
        %v2860 = vadd.f32 %v2700, %v2828
        %v2861 = vadd.f32 %v2701, %v2831
        %v2862 = vadd.f32 %v2702, %v2833
        %v2863 = vadd.f32 %v2703, %v2836
        %v2864 = vadd.f32 %v2704, %v2838
        %v2865 = vadd.f32 %v2705, %v2841
        %v2866 = vadd.f32 %v2706, %v2843
        %v2867 = vadd.f32 %v2707, %v2846
        %v2868 = vadd.f32 %v2708, %v2848
        %v2869 = vadd.f32 %v2709, %v2851
        %v2870 = vadd.f32 %v2710, %v2853
        %v2871 = vld [vmem:[%s229 + $0x58] sm:$0xf]
        %v2872 = vld [vmem:[%s229 + $0x5c] sm:$0xf]
        %v2873 = vld [vmem:[%s229 + $0x60] sm:$0xf]
        %v2874 = vld [vmem:[%s229 + $0x64] sm:$0xf]
        %v2875 = vld [vmem:[%s229 + $0x68] sm:$0xf]
        %v2876 = vld [vmem:[%s229 + $0x6c] sm:$0xf]
        %v2877 = vld [vmem:[%s229 + $0x70] sm:$0xf]
        %v2878 = vld [vmem:[%s229 + $0x74] sm:$0xf]
        %v2879 = vld [vmem:[%s229 + $0x78] sm:$0xf]
        %v2880 = vld [vmem:[%s229 + $0x7c] sm:$0xf]
        %v2881 = vld [vmem:[%s229 + $0x80] sm:$0xf]
        %v2882 = vld [vmem:[%s229 + $0x84] sm:$0xf]
        %v2883 = vld [vmem:[%s229 + $0x88] sm:$0xf]
        %v2884 = vld [vmem:[%s229 + $0x8c] sm:$0xf]
        %v2885 = vld [vmem:[%s229 + $0x90] sm:$0xf]
        %v2886 = vld [vmem:[%s229 + $0x94] sm:$0xf]
        %v2887 = vld [vmem:[%s229 + $0x98] sm:$0x1]
        %v2888 = vld [vmem:[%s1364] sm:$0xf]
        %v2889 = vld [vmem:[%s1364 + $0x4] sm:$0xf]
        %v2890 = vld [vmem:[%s1364 + $0x8] sm:$0xf]
        %v2908 = vunpack.c.l.b16 %v2871
        %v2909 = vunpack.c.l.b16 %v2872
        %v2910 = vunpack.c.l.b16 %v2873
        %v2911 = vunpack.c.l.b16 %v2874
        %v2912 = vunpack.c.l.b16 %v2875
        %v2913 = vunpack.c.l.b16 %v2876
        %v2914 = vunpack.c.l.b16 %v2877
        %v2915 = vunpack.c.l.b16 %v2878
        %v2916 = vunpack.c.l.b16 %v2879
        %v2917 = vunpack.c.l.b16 %v2880
        %v2918 = vunpack.c.l.b16 %v2881
        %v2919 = vunpack.c.l.b16 %v2882
        %v2920 = vunpack.c.l.b16 %v2883
        %v2921 = vunpack.c.l.b16 %v2884
        %v2922 = vunpack.c.l.b16 %v2885
        %v2923 = vunpack.c.l.b16 %v2886
        %v2924 = vunpack.c.l.b16 %v2887
        %v2925 = vpack.c.b16 %v2909, %v2908
        %v2926 = vpack.c.b16 %v2911, %v2910
        %v2927 = vpack.c.b16 %v2913, %v2912
        %v2928 = vpack.c.b16 %v2915, %v2914
        %v2929 = vpack.c.b16 %v2917, %v2916
        %v2930 = vpack.c.b16 %v2919, %v2918
        %v2931 = vpack.c.b16 %v2921, %v2920
        %v2932 = vpack.c.b16 %v2923, %v2922
        %v2933 = vpack.c.b16 %v2924, %v2924
        %v2935 = vshrl.u32 %v2925, 16
        %v2937 = vshll.u32 %v2925, 16
        %v2939 = vrot.slane %v2937, 1
        %v2940 = vor.u32 %v2935, %v2939
        %v2942 = vshll.u32 %v2926, 16
        %v2944 = vrot.slane %v2942, 1
        %v2945 = vsel %vm306, %v2940, %v2944
        %v2946 = vshrl.u32 %v2926, 16
        %v2948 = vor.u32 %v2946, %v2944
        %v2950 = vshll.u32 %v2927, 16
        %v2952 = vrot.slane %v2950, 1
        %v2953 = vsel %vm306, %v2948, %v2952
        %v2954 = vshrl.u32 %v2927, 16
        %v2956 = vor.u32 %v2954, %v2952
        %v2958 = vshll.u32 %v2928, 16
        %v2960 = vrot.slane %v2958, 1
        %v2961 = vsel %vm306, %v2956, %v2960
        %v2962 = vshrl.u32 %v2928, 16
        %v2964 = vor.u32 %v2962, %v2960
        %v2966 = vshll.u32 %v2929, 16
        %v2968 = vrot.slane %v2966, 1
        %v2969 = vsel %vm306, %v2964, %v2968
        %v2970 = vshrl.u32 %v2929, 16
        %v2972 = vor.u32 %v2970, %v2968
        %v2974 = vshll.u32 %v2930, 16
        %v2976 = vrot.slane %v2974, 1
        %v2977 = vsel %vm306, %v2972, %v2976
        %v2978 = vshrl.u32 %v2930, 16
        %v2980 = vor.u32 %v2978, %v2976
        %v2982 = vshll.u32 %v2931, 16
        %v2984 = vrot.slane %v2982, 1
        %v2985 = vsel %vm306, %v2980, %v2984
        %v2986 = vshrl.u32 %v2931, 16
        %v2988 = vor.u32 %v2986, %v2984
        %v2990 = vshll.u32 %v2932, 16
        %v2992 = vrot.slane %v2990, 1
        %v2993 = vsel %vm306, %v2988, %v2992
        %v2994 = vshrl.u32 %v2932, 16
        %v2996 = vor.u32 %v2994, %v2992
        %v2998 = vshll.u32 %v2933, 16
        %v3000 = vrot.slane %v2998, 1
        %v3001 = vsel %vm306, %v2996, %v3000
        %v3005 = vunpack.c.l.b16 %v2888
        %v3006 = vunpack.c.l.b16 %v2889
        %v3007 = vunpack.c.l.b16 %v2890
        %v3008 = vpack.c.b16 %v3006, %v3005
        %v3009 = vpack.c.b16 %v3007, %v3007
        %v3012 = vsel %vm384, %v2945, 0
        %v3015 = vsel %vm384, %v2953, 0
        %v3018 = vsel %vm384, %v2961, 0
        %v3021 = vsel %vm384, %v2969, 0
        %v3024 = vsel %vm384, %v2977, 0
        %v3027 = vsel %vm384, %v2985, 0
        %v3030 = vsel %vm384, %v2993, 0
        %v3033 = vsel %vm384, %v3001, 0
        %v3036 = vsel %vm409, %v3009, 0
        %3038 = vmatpush.bf16.msra.mxu0 0
        %3039 = vmatpush.bf16.msra.mxu0 0
        %3040 = vmatpush.bf16.msra.mxu0 0
        %3041 = vmatpush.bf16.msra.mxu0 0
        %3042 = vmatpush.bf16.msra.mxu0 0
        %3043 = vmatpush.bf16.msra.mxu0 0
        %3044 = vmatpush.bf16.msra.mxu0 %v3036
        %3045 = vmatpush.bf16.msra.mxu0 %v3008
        %3046 = vmatmul.bf16.gmra.mxu0 %v3012
        %v3047 = vpop.f32.mrf.mxu0
        %v3048 = vadd.f32 0.0, %v3047
        %v3049 = vpop.f32.mrf.mxu0
        %v3050 = vadd.f32 0.0, %v3049
        %3051 = vmatmul.bf16.gmra.mxu0 %v3015
        %v3052 = vpop.f32.mrf.mxu0
        %v3053 = vadd.f32 0.0, %v3052
        %v3054 = vpop.f32.mrf.mxu0
        %v3055 = vadd.f32 0.0, %v3054
        %3056 = vmatmul.bf16.gmra.mxu0 %v3018
        %v3057 = vpop.f32.mrf.mxu0
        %v3058 = vadd.f32 0.0, %v3057
        %v3059 = vpop.f32.mrf.mxu0
        %v3060 = vadd.f32 0.0, %v3059
        %3061 = vmatmul.bf16.gmra.mxu0 %v3021
        %v3062 = vpop.f32.mrf.mxu0
        %v3063 = vadd.f32 0.0, %v3062
        %v3064 = vpop.f32.mrf.mxu0
        %v3065 = vadd.f32 0.0, %v3064
        %3066 = vmatmul.bf16.gmra.mxu0 %v3024
        %v3067 = vpop.f32.mrf.mxu0
        %v3068 = vadd.f32 0.0, %v3067
        %v3069 = vpop.f32.mrf.mxu0
        %v3070 = vadd.f32 0.0, %v3069
        %3071 = vmatmul.bf16.gmra.mxu0 %v3027
        %v3072 = vpop.f32.mrf.mxu0
        %v3073 = vadd.f32 0.0, %v3072
        %v3074 = vpop.f32.mrf.mxu0
        %v3075 = vadd.f32 0.0, %v3074
        %3076 = vmatmul.bf16.gmra.mxu0 %v3030
        %v3077 = vpop.f32.mrf.mxu0
        %v3078 = vadd.f32 0.0, %v3077
        %v3079 = vpop.f32.mrf.mxu0
        %v3080 = vadd.f32 0.0, %v3079
        %3081 = vmatmul.bf16.gmra.mxu0 %v3033
        %v3082 = vpop.f32.mrf.mxu0
        %v3083 = vadd.f32 0.0, %v3082
        %v3084 = vpop.f32.mrf.mxu0
        %v3085 = vadd.f32 0.0, %v3084
        %3086 = vdwg.mxu0
        %v3087 = vadd.f32 %v2855, %v3048
        %v3088 = vadd.f32 %v2856, %v3050
        %v3089 = vadd.f32 %v2857, %v3053
        %v3090 = vadd.f32 %v2858, %v3055
        %v3091 = vadd.f32 %v2859, %v3058
        %v3092 = vadd.f32 %v2860, %v3060
        %v3093 = vadd.f32 %v2861, %v3063
        %v3094 = vadd.f32 %v2862, %v3065
        %v3095 = vadd.f32 %v2863, %v3068
        %v3096 = vadd.f32 %v2864, %v3070
        %v3097 = vadd.f32 %v2865, %v3073
        %v3098 = vadd.f32 %v2866, %v3075
        %v3099 = vadd.f32 %v2867, %v3078
        %v3100 = vadd.f32 %v2868, %v3080
        %v3101 = vadd.f32 %v2869, %v3083
        %v3102 = vadd.f32 %v2870, %v3085
        %v3103 = vld [vmem:[%s229 + $0x58] sm:$0xe]
        %v3104 = vld [vmem:[%s1581] sm:$0xf]
        %v3105 = vld [vmem:[%s1581 + $0x4] sm:$0xf]
        %v3106 = vld [vmem:[%s1581 + $0x8] sm:$0xf]
        %v3108 = vunpack.c.l.b16 %v3103
        %v3109 = vpack.c.b16 %v2909, %v3108
        %v3110 = vrot.slane %v3109, 1
        %v3111 = vrot.slane %v2926, 1
        %v3112 = vsel %vm547, %v3110, %v3111
        %v3113 = vrot.slane %v2927, 1
        %v3114 = vsel %vm547, %v3111, %v3113
        %v3115 = vrot.slane %v2928, 1
        %v3116 = vsel %vm547, %v3113, %v3115
        %v3117 = vrot.slane %v2929, 1
        %v3118 = vsel %vm547, %v3115, %v3117
        %v3119 = vrot.slane %v2930, 1
        %v3120 = vsel %vm547, %v3117, %v3119
        %v3121 = vrot.slane %v2931, 1
        %v3122 = vsel %vm547, %v3119, %v3121
        %v3123 = vrot.slane %v2932, 1
        %v3124 = vsel %vm547, %v3121, %v3123
        %v3125 = vrot.slane %v2933, 1
        %v3126 = vsel %vm547, %v3123, %v3125
        %v3130 = vunpack.c.l.b16 %v3104
        %v3131 = vunpack.c.l.b16 %v3105
        %v3132 = vunpack.c.l.b16 %v3106
        %v3133 = vpack.c.b16 %v3131, %v3130
        %v3134 = vpack.c.b16 %v3132, %v3132
        %v3137 = vsel %vm384, %v3112, 0
        %v3140 = vsel %vm384, %v3114, 0
        %v3143 = vsel %vm384, %v3116, 0
        %v3146 = vsel %vm384, %v3118, 0
        %v3149 = vsel %vm384, %v3120, 0
        %v3152 = vsel %vm384, %v3122, 0
        %v3155 = vsel %vm384, %v3124, 0
        %v3158 = vsel %vm384, %v3126, 0
        %v3161 = vsel %vm409, %v3134, 0
        %3163 = vmatpush.bf16.msra.mxu0 0
        %3164 = vmatpush.bf16.msra.mxu0 0
        %3165 = vmatpush.bf16.msra.mxu0 0
        %3166 = vmatpush.bf16.msra.mxu0 0
        %3167 = vmatpush.bf16.msra.mxu0 0
        %3168 = vmatpush.bf16.msra.mxu0 0
        %3169 = vmatpush.bf16.msra.mxu0 %v3161
        %3170 = vmatpush.bf16.msra.mxu0 %v3133
        %3171 = vmatmul.bf16.gmra.mxu0 %v3137
        %v3172 = vpop.f32.mrf.mxu0
        %v3173 = vadd.f32 0.0, %v3172
        %v3174 = vpop.f32.mrf.mxu0
        %v3175 = vadd.f32 0.0, %v3174
        %3176 = vmatmul.bf16.gmra.mxu0 %v3140
        %v3177 = vpop.f32.mrf.mxu0
        %v3178 = vadd.f32 0.0, %v3177
        %v3179 = vpop.f32.mrf.mxu0
        %v3180 = vadd.f32 0.0, %v3179
        %3181 = vmatmul.bf16.gmra.mxu0 %v3143
        %v3182 = vpop.f32.mrf.mxu0
        %v3183 = vadd.f32 0.0, %v3182
        %v3184 = vpop.f32.mrf.mxu0
        %v3185 = vadd.f32 0.0, %v3184
        %3186 = vmatmul.bf16.gmra.mxu0 %v3146
        %v3187 = vpop.f32.mrf.mxu0
        %v3188 = vadd.f32 0.0, %v3187
        %v3189 = vpop.f32.mrf.mxu0
        %v3190 = vadd.f32 0.0, %v3189
        %3191 = vmatmul.bf16.gmra.mxu0 %v3149
        %v3192 = vpop.f32.mrf.mxu0
        %v3193 = vadd.f32 0.0, %v3192
        %v3194 = vpop.f32.mrf.mxu0
        %v3195 = vadd.f32 0.0, %v3194
        %3196 = vmatmul.bf16.gmra.mxu0 %v3152
        %v3197 = vpop.f32.mrf.mxu0
        %v3198 = vadd.f32 0.0, %v3197
        %v3199 = vpop.f32.mrf.mxu0
        %v3200 = vadd.f32 0.0, %v3199
        %3201 = vmatmul.bf16.gmra.mxu0 %v3155
        %v3202 = vpop.f32.mrf.mxu0
        %v3203 = vadd.f32 0.0, %v3202
        %v3204 = vpop.f32.mrf.mxu0
        %v3205 = vadd.f32 0.0, %v3204
        %3206 = vmatmul.bf16.gmra.mxu0 %v3158
        %v3207 = vpop.f32.mrf.mxu0
        %v3208 = vadd.f32 0.0, %v3207
        %v3209 = vpop.f32.mrf.mxu0
        %v3210 = vadd.f32 0.0, %v3209
        %3211 = vdwg.mxu0
        %v3212 = vadd.f32 %v3087, %v3173
        %v3213 = vadd.f32 %v3088, %v3175
        %v3214 = vadd.f32 %v3089, %v3178
        %v3215 = vadd.f32 %v3090, %v3180
        %v3216 = vadd.f32 %v3091, %v3183
        %v3217 = vadd.f32 %v3092, %v3185
        %v3218 = vadd.f32 %v3093, %v3188
        %v3219 = vadd.f32 %v3094, %v3190
        %v3220 = vadd.f32 %v3095, %v3193
        %v3221 = vadd.f32 %v3096, %v3195
        %v3222 = vadd.f32 %v3097, %v3198
        %v3223 = vadd.f32 %v3098, %v3200
        %v3224 = vadd.f32 %v3099, %v3203
        %v3225 = vadd.f32 %v3100, %v3205
        %v3226 = vadd.f32 %v3101, %v3208
        %v3227 = vadd.f32 %v3102, %v3210
        %v3228 = vadd.f32 %v3212, %v1707
        %v3229 = vadd.f32 %v3213, %v1707
        %v3230 = vadd.f32 %v3214, %v1707
        %v3231 = vadd.f32 %v3215, %v1707
        %v3232 = vadd.f32 %v3216, %v1707
        %v3233 = vadd.f32 %v3217, %v1707
        %v3234 = vadd.f32 %v3218, %v1707
        %v3235 = vadd.f32 %v3219, %v1707
        %v3236 = vadd.f32 %v3220, %v1707
        %v3237 = vadd.f32 %v3221, %v1707
        %v3238 = vadd.f32 %v3222, %v1707
        %v3239 = vadd.f32 %v3223, %v1707
        %v3240 = vadd.f32 %v3224, %v1707
        %v3241 = vadd.f32 %v3225, %v1707
        %v3242 = vadd.f32 %v3226, %v1707
        %v3243 = vadd.f32 %v3227, %v1707
        %v3244 = vmax.f32 %v3228, 0.0
        %v3245 = vmax.f32 %v3229, 0.0
        %v3246 = vmax.f32 %v3230, 0.0
        %v3247 = vmax.f32 %v3231, 0.0
        %v3248 = vmax.f32 %v3232, 0.0
        %v3249 = vmax.f32 %v3233, 0.0
        %v3250 = vmax.f32 %v3234, 0.0
        %v3251 = vmax.f32 %v3235, 0.0
        %v3252 = vmax.f32 %v3236, 0.0
        %v3253 = vmax.f32 %v3237, 0.0
        %v3254 = vmax.f32 %v3238, 0.0
        %v3255 = vmax.f32 %v3239, 0.0
        %v3256 = vmax.f32 %v3240, 0.0
        %v3257 = vmax.f32 %v3241, 0.0
        %v3258 = vmax.f32 %v3242, 0.0
        %v3259 = vmax.f32 %v3243, 0.0
        %v3260 = vpack.c.bf16 %v3244, %v3244
        %v3261 = vpack.c.bf16 %v3245, %v3245
        %v3262 = vpack.c.bf16 %v3246, %v3246
        %v3263 = vpack.c.bf16 %v3247, %v3247
        %v3264 = vpack.c.bf16 %v3248, %v3248
        %v3265 = vpack.c.bf16 %v3249, %v3249
        %v3266 = vpack.c.bf16 %v3250, %v3250
        %v3267 = vpack.c.bf16 %v3251, %v3251
        %v3268 = vpack.c.bf16 %v3252, %v3252
        %v3269 = vpack.c.bf16 %v3253, %v3253
        %v3270 = vpack.c.bf16 %v3254, %v3254
        %v3271 = vpack.c.bf16 %v3255, %v3255
        %v3272 = vpack.c.bf16 %v3256, %v3256
        %v3273 = vpack.c.bf16 %v3257, %v3257
        %v3274 = vpack.c.bf16 %v3258, %v3258
        %v3275 = vpack.c.bf16 %v3259, %v3259
        %3276 = vst [vmem:[%s220 + $0x40] sm:$0xf] %v3260
        %3277 = vst [vmem:[%s220 + $0x44] sm:$0xf] %v3261
        %3278 = vst [vmem:[%s220 + $0x48] sm:$0xf] %v3262
        %3279 = vst [vmem:[%s220 + $0x4c] sm:$0xf] %v3263
        %3280 = vst [vmem:[%s220 + $0x50] sm:$0xf] %v3264
        %3281 = vst [vmem:[%s220 + $0x54] sm:$0xf] %v3265
        %3282 = vst [vmem:[%s220 + $0x58] sm:$0xf] %v3266
        %3283 = vst [vmem:[%s220 + $0x5c] sm:$0xf] %v3267
        %3284 = vst [vmem:[%s220 + $0x60] sm:$0xf] %v3268
        %3285 = vst [vmem:[%s220 + $0x64] sm:$0xf] %v3269
        %3286 = vst [vmem:[%s220 + $0x68] sm:$0xf] %v3270
        %3287 = vst [vmem:[%s220 + $0x6c] sm:$0xf] %v3271
        %3288 = vst [vmem:[%s220 + $0x70] sm:$0xf] %v3272
        %3289 = vst [vmem:[%s220 + $0x74] sm:$0xf] %v3273
        %3290 = vst [vmem:[%s220 + $0x78] sm:$0xf] %v3274
        %3291 = vst [vmem:[%s220 + $0x7c] sm:$0xf] %v3275
        %v3292 = vld [vmem:[%s229 + $0x80] sm:$0xf]
        %v3293 = vld [vmem:[%s229 + $0x84] sm:$0xf]
        %v3294 = vld [vmem:[%s229 + $0x88] sm:$0xf]
        %v3295 = vld [vmem:[%s229 + $0x8c] sm:$0xf]
        %v3296 = vld [vmem:[%s229 + $0x90] sm:$0xf]
        %v3297 = vld [vmem:[%s229 + $0x94] sm:$0xf]
        %v3298 = vld [vmem:[%s229 + $0x98] sm:$0xf]
        %v3299 = vld [vmem:[%s229 + $0x9c] sm:$0xf]
        %v3300 = vld [vmem:[%s229 + $0xa0] sm:$0xf]
        %v3301 = vld [vmem:[%s229 + $0xa4] sm:$0xf]
        %v3302 = vld [vmem:[%s229 + $0xa8] sm:$0xf]
        %v3303 = vld [vmem:[%s229 + $0xac] sm:$0xf]
        %v3304 = vld [vmem:[%s229 + $0xb0] sm:$0xf]
        %v3305 = vld [vmem:[%s229 + $0xb4] sm:$0xf]
        %v3306 = vld [vmem:[%s229 + $0xb8] sm:$0xf]
        %v3307 = vld [vmem:[%s229 + $0xbc] sm:$0xf]
        %v3308 = vld [vmem:[%s233] sm:$0xf]
        %v3309 = vld [vmem:[%s233 + $0x4] sm:$0xf]
        %v3310 = vld [vmem:[%s233 + $0x8] sm:$0xf]
        %v3311 = vld [vmem:[%s229 + $0xc0] sm:$0x1]
        %v3312 = vld [vmem:[%s259] sm:$0xf]
        %v3313 = vld [vmem:[%s259 + $0x4] sm:$0xf]
        %v3314 = vld [vmem:[%s259 + $0x8] sm:$0xf]
        %v3332 = vunpack.c.l.b16 %v3292
        %v3333 = vunpack.c.l.b16 %v3293
        %v3334 = vunpack.c.l.b16 %v3294
        %v3335 = vunpack.c.l.b16 %v3295
        %v3336 = vunpack.c.l.b16 %v3296
        %v3337 = vunpack.c.l.b16 %v3297
        %v3338 = vunpack.c.l.b16 %v3298
        %v3339 = vunpack.c.l.b16 %v3299
        %v3340 = vunpack.c.l.b16 %v3300
        %v3341 = vunpack.c.l.b16 %v3301
        %v3342 = vunpack.c.l.b16 %v3302
        %v3343 = vunpack.c.l.b16 %v3303
        %v3344 = vunpack.c.l.b16 %v3304
        %v3345 = vunpack.c.l.b16 %v3305
        %v3346 = vunpack.c.l.b16 %v3306
        %v3347 = vunpack.c.l.b16 %v3307
        %v3348 = vunpack.c.l.b16 %v3311
        %v3349 = vpack.c.b16 %v3333, %v3332
        %v3350 = vpack.c.b16 %v3335, %v3334
        %v3351 = vpack.c.b16 %v3337, %v3336
        %v3352 = vpack.c.b16 %v3339, %v3338
        %v3353 = vpack.c.b16 %v3341, %v3340
        %v3354 = vpack.c.b16 %v3343, %v3342
        %v3355 = vpack.c.b16 %v3345, %v3344
        %v3356 = vpack.c.b16 %v3347, %v3346
        %v3357 = vpack.c.b16 %v3348, %v3348
        %v3359 = vshrl.u32 %v3349, 16
        %v3361 = vshll.u32 %v3349, 16
        %v3363 = vrot.slane %v3361, 1
        %v3364 = vor.u32 %v3359, %v3363
        %v3366 = vshll.u32 %v3350, 16
        %v3368 = vrot.slane %v3366, 1
        %v3369 = vsel %vm306, %v3364, %v3368
        %v3370 = vshrl.u32 %v3350, 16
        %v3372 = vor.u32 %v3370, %v3368
        %v3374 = vshll.u32 %v3351, 16
        %v3376 = vrot.slane %v3374, 1
        %v3377 = vsel %vm306, %v3372, %v3376
        %v3378 = vshrl.u32 %v3351, 16
        %v3380 = vor.u32 %v3378, %v3376
        %v3382 = vshll.u32 %v3352, 16
        %v3384 = vrot.slane %v3382, 1
        %v3385 = vsel %vm306, %v3380, %v3384
        %v3386 = vshrl.u32 %v3352, 16
        %v3388 = vor.u32 %v3386, %v3384
        %v3390 = vshll.u32 %v3353, 16
        %v3392 = vrot.slane %v3390, 1
        %v3393 = vsel %vm306, %v3388, %v3392
        %v3394 = vshrl.u32 %v3353, 16
        %v3396 = vor.u32 %v3394, %v3392
        %v3398 = vshll.u32 %v3354, 16
        %v3400 = vrot.slane %v3398, 1
        %v3401 = vsel %vm306, %v3396, %v3400
        %v3402 = vshrl.u32 %v3354, 16
        %v3404 = vor.u32 %v3402, %v3400
        %v3406 = vshll.u32 %v3355, 16
        %v3408 = vrot.slane %v3406, 1
        %v3409 = vsel %vm306, %v3404, %v3408
        %v3410 = vshrl.u32 %v3355, 16
        %v3412 = vor.u32 %v3410, %v3408
        %v3414 = vshll.u32 %v3356, 16
        %v3416 = vrot.slane %v3414, 1
        %v3417 = vsel %vm306, %v3412, %v3416
        %v3418 = vshrl.u32 %v3356, 16
        %v3420 = vor.u32 %v3418, %v3416
        %v3422 = vshll.u32 %v3357, 16
        %v3424 = vrot.slane %v3422, 1
        %v3425 = vsel %vm306, %v3420, %v3424
        %v3429 = vunpack.c.l.b16 %v3312
        %v3430 = vunpack.c.l.b16 %v3313
        %v3431 = vunpack.c.l.b16 %v3314
        %v3432 = vpack.c.b16 %v3430, %v3429
        %v3433 = vpack.c.b16 %v3431, %v3431
        %v3436 = vsel %vm384, %v3369, 0
        %v3439 = vsel %vm384, %v3377, 0
        %v3442 = vsel %vm384, %v3385, 0
        %v3445 = vsel %vm384, %v3393, 0
        %v3448 = vsel %vm384, %v3401, 0
        %v3451 = vsel %vm384, %v3409, 0
        %v3454 = vsel %vm384, %v3417, 0
        %v3457 = vsel %vm384, %v3425, 0
        %v3460 = vsel %vm409, %v3433, 0
        %3462 = vmatpush.bf16.msra.mxu0 0
        %3463 = vmatpush.bf16.msra.mxu0 0
        %3464 = vmatpush.bf16.msra.mxu0 0
        %3465 = vmatpush.bf16.msra.mxu0 0
        %3466 = vmatpush.bf16.msra.mxu0 0
        %3467 = vmatpush.bf16.msra.mxu0 0
        %3468 = vmatpush.bf16.msra.mxu0 %v3460
        %3469 = vmatpush.bf16.msra.mxu0 %v3432
        %3470 = vmatmul.bf16.gmra.mxu0 %v3436
        %v3471 = vpop.f32.mrf.mxu0
        %v3472 = vadd.f32 0.0, %v3471
        %v3473 = vpop.f32.mrf.mxu0
        %v3474 = vadd.f32 0.0, %v3473
        %3475 = vmatmul.bf16.gmra.mxu0 %v3439
        %v3476 = vpop.f32.mrf.mxu0
        %v3477 = vadd.f32 0.0, %v3476
        %v3478 = vpop.f32.mrf.mxu0
        %v3479 = vadd.f32 0.0, %v3478
        %3480 = vmatmul.bf16.gmra.mxu0 %v3442
        %v3481 = vpop.f32.mrf.mxu0
        %v3482 = vadd.f32 0.0, %v3481
        %v3483 = vpop.f32.mrf.mxu0
        %v3484 = vadd.f32 0.0, %v3483
        %3485 = vmatmul.bf16.gmra.mxu0 %v3445
        %v3486 = vpop.f32.mrf.mxu0
        %v3487 = vadd.f32 0.0, %v3486
        %v3488 = vpop.f32.mrf.mxu0
        %v3489 = vadd.f32 0.0, %v3488
        %3490 = vmatmul.bf16.gmra.mxu0 %v3448
        %v3491 = vpop.f32.mrf.mxu0
        %v3492 = vadd.f32 0.0, %v3491
        %v3493 = vpop.f32.mrf.mxu0
        %v3494 = vadd.f32 0.0, %v3493
        %3495 = vmatmul.bf16.gmra.mxu0 %v3451
        %v3496 = vpop.f32.mrf.mxu0
        %v3497 = vadd.f32 0.0, %v3496
        %v3498 = vpop.f32.mrf.mxu0
        %v3499 = vadd.f32 0.0, %v3498
        %3500 = vmatmul.bf16.gmra.mxu0 %v3454
        %v3501 = vpop.f32.mrf.mxu0
        %v3502 = vadd.f32 0.0, %v3501
        %v3503 = vpop.f32.mrf.mxu0
        %v3504 = vadd.f32 0.0, %v3503
        %3505 = vmatmul.bf16.gmra.mxu0 %v3457
        %v3506 = vpop.f32.mrf.mxu0
        %v3507 = vadd.f32 0.0, %v3506
        %v3508 = vpop.f32.mrf.mxu0
        %v3509 = vadd.f32 0.0, %v3508
        %3510 = vdwg.mxu0
        %v3514 = vunpack.c.l.b16 %v3308
        %v3515 = vunpack.c.l.b16 %v3309
        %v3516 = vunpack.c.l.b16 %v3310
        %v3517 = vpack.c.b16 %v3515, %v3514
        %v3518 = vpack.c.b16 %v3516, %v3516
        %v3520 = vsel %vm384, %v3349, 0
        %v3522 = vsel %vm384, %v3350, 0
        %v3524 = vsel %vm384, %v3351, 0
        %v3526 = vsel %vm384, %v3352, 0
        %v3528 = vsel %vm384, %v3353, 0
        %v3530 = vsel %vm384, %v3354, 0
        %v3532 = vsel %vm384, %v3355, 0
        %v3534 = vsel %vm384, %v3356, 0
        %v3537 = vsel %vm409, %v3518, 0
        %3539 = vmatpush.bf16.msra.mxu0 0
        %3540 = vmatpush.bf16.msra.mxu0 0
        %3541 = vmatpush.bf16.msra.mxu0 0
        %3542 = vmatpush.bf16.msra.mxu0 0
        %3543 = vmatpush.bf16.msra.mxu0 0
        %3544 = vmatpush.bf16.msra.mxu0 0
        %3545 = vmatpush.bf16.msra.mxu0 %v3537
        %3546 = vmatpush.bf16.msra.mxu0 %v3517
        %3547 = vmatmul.bf16.gmra.mxu0 %v3520
        %v3548 = vpop.f32.mrf.mxu0
        %v3549 = vadd.f32 %v3472, %v3548
        %v3550 = vpop.f32.mrf.mxu0
        %v3551 = vadd.f32 %v3474, %v3550
        %3552 = vmatmul.bf16.gmra.mxu0 %v3522
        %v3553 = vpop.f32.mrf.mxu0
        %v3554 = vadd.f32 %v3477, %v3553
        %v3555 = vpop.f32.mrf.mxu0
        %v3556 = vadd.f32 %v3479, %v3555
        %3557 = vmatmul.bf16.gmra.mxu0 %v3524
        %v3558 = vpop.f32.mrf.mxu0
        %v3559 = vadd.f32 %v3482, %v3558
        %v3560 = vpop.f32.mrf.mxu0
        %v3561 = vadd.f32 %v3484, %v3560
        %3562 = vmatmul.bf16.gmra.mxu0 %v3526
        %v3563 = vpop.f32.mrf.mxu0
        %v3564 = vadd.f32 %v3487, %v3563
        %v3565 = vpop.f32.mrf.mxu0
        %v3566 = vadd.f32 %v3489, %v3565
        %3567 = vmatmul.bf16.gmra.mxu0 %v3528
        %v3568 = vpop.f32.mrf.mxu0
        %v3569 = vadd.f32 %v3492, %v3568
        %v3570 = vpop.f32.mrf.mxu0
        %v3571 = vadd.f32 %v3494, %v3570
        %3572 = vmatmul.bf16.gmra.mxu0 %v3530
        %v3573 = vpop.f32.mrf.mxu0
        %v3574 = vadd.f32 %v3497, %v3573
        %v3575 = vpop.f32.mrf.mxu0
        %v3576 = vadd.f32 %v3499, %v3575
        %3577 = vmatmul.bf16.gmra.mxu0 %v3532
        %v3578 = vpop.f32.mrf.mxu0
        %v3579 = vadd.f32 %v3502, %v3578
        %v3580 = vpop.f32.mrf.mxu0
        %v3581 = vadd.f32 %v3504, %v3580
        %3582 = vmatmul.bf16.gmra.mxu0 %v3534
        %v3583 = vpop.f32.mrf.mxu0
        %v3584 = vadd.f32 %v3507, %v3583
        %v3585 = vpop.f32.mrf.mxu0
        %v3586 = vadd.f32 %v3509, %v3585
        %3587 = vdwg.mxu0
        %v3588 = vld [vmem:[%s229 + $0x80] sm:$0xe]
        %v3589 = vld [vmem:[%s540] sm:$0xf]
        %v3590 = vld [vmem:[%s540 + $0x4] sm:$0xf]
        %v3591 = vld [vmem:[%s540 + $0x8] sm:$0xf]
        %v3593 = vunpack.c.l.b16 %v3588
        %v3594 = vpack.c.b16 %v3333, %v3593
        %v3595 = vrot.slane %v3594, 1
        %v3596 = vrot.slane %v3350, 1
        %v3597 = vsel %vm547, %v3595, %v3596
        %v3598 = vrot.slane %v3351, 1
        %v3599 = vsel %vm547, %v3596, %v3598
        %v3600 = vrot.slane %v3352, 1
        %v3601 = vsel %vm547, %v3598, %v3600
        %v3602 = vrot.slane %v3353, 1
        %v3603 = vsel %vm547, %v3600, %v3602
        %v3604 = vrot.slane %v3354, 1
        %v3605 = vsel %vm547, %v3602, %v3604
        %v3606 = vrot.slane %v3355, 1
        %v3607 = vsel %vm547, %v3604, %v3606
        %v3608 = vrot.slane %v3356, 1
        %v3609 = vsel %vm547, %v3606, %v3608
        %v3610 = vrot.slane %v3357, 1
        %v3611 = vsel %vm547, %v3608, %v3610
        %v3615 = vunpack.c.l.b16 %v3589
        %v3616 = vunpack.c.l.b16 %v3590
        %v3617 = vunpack.c.l.b16 %v3591
        %v3618 = vpack.c.b16 %v3616, %v3615
        %v3619 = vpack.c.b16 %v3617, %v3617
        %v3622 = vsel %vm384, %v3597, 0
        %v3625 = vsel %vm384, %v3599, 0
        %v3628 = vsel %vm384, %v3601, 0
        %v3631 = vsel %vm384, %v3603, 0
        %v3634 = vsel %vm384, %v3605, 0
        %v3637 = vsel %vm384, %v3607, 0
        %v3640 = vsel %vm384, %v3609, 0
        %v3643 = vsel %vm384, %v3611, 0
        %v3646 = vsel %vm409, %v3619, 0
        %3648 = vmatpush.bf16.msra.mxu0 0
        %3649 = vmatpush.bf16.msra.mxu0 0
        %3650 = vmatpush.bf16.msra.mxu0 0
        %3651 = vmatpush.bf16.msra.mxu0 0
        %3652 = vmatpush.bf16.msra.mxu0 0
        %3653 = vmatpush.bf16.msra.mxu0 0
        %3654 = vmatpush.bf16.msra.mxu0 %v3646
        %3655 = vmatpush.bf16.msra.mxu0 %v3618
        %3656 = vmatmul.bf16.gmra.mxu0 %v3622
        %v3657 = vpop.f32.mrf.mxu0
        %v3658 = vadd.f32 0.0, %v3657
        %v3659 = vpop.f32.mrf.mxu0
        %v3660 = vadd.f32 0.0, %v3659
        %3661 = vmatmul.bf16.gmra.mxu0 %v3625
        %v3662 = vpop.f32.mrf.mxu0
        %v3663 = vadd.f32 0.0, %v3662
        %v3664 = vpop.f32.mrf.mxu0
        %v3665 = vadd.f32 0.0, %v3664
        %3666 = vmatmul.bf16.gmra.mxu0 %v3628
        %v3667 = vpop.f32.mrf.mxu0
        %v3668 = vadd.f32 0.0, %v3667
        %v3669 = vpop.f32.mrf.mxu0
        %v3670 = vadd.f32 0.0, %v3669
        %3671 = vmatmul.bf16.gmra.mxu0 %v3631
        %v3672 = vpop.f32.mrf.mxu0
        %v3673 = vadd.f32 0.0, %v3672
        %v3674 = vpop.f32.mrf.mxu0
        %v3675 = vadd.f32 0.0, %v3674
        %3676 = vmatmul.bf16.gmra.mxu0 %v3634
        %v3677 = vpop.f32.mrf.mxu0
        %v3678 = vadd.f32 0.0, %v3677
        %v3679 = vpop.f32.mrf.mxu0
        %v3680 = vadd.f32 0.0, %v3679
        %3681 = vmatmul.bf16.gmra.mxu0 %v3637
        %v3682 = vpop.f32.mrf.mxu0
        %v3683 = vadd.f32 0.0, %v3682
        %v3684 = vpop.f32.mrf.mxu0
        %v3685 = vadd.f32 0.0, %v3684
        %3686 = vmatmul.bf16.gmra.mxu0 %v3640
        %v3687 = vpop.f32.mrf.mxu0
        %v3688 = vadd.f32 0.0, %v3687
        %v3689 = vpop.f32.mrf.mxu0
        %v3690 = vadd.f32 0.0, %v3689
        %3691 = vmatmul.bf16.gmra.mxu0 %v3643
        %v3692 = vpop.f32.mrf.mxu0
        %v3693 = vadd.f32 0.0, %v3692
        %v3694 = vpop.f32.mrf.mxu0
        %v3695 = vadd.f32 0.0, %v3694
        %3696 = vdwg.mxu0
        %v3697 = vadd.f32 %v3549, %v3658
        %v3698 = vadd.f32 %v3551, %v3660
        %v3699 = vadd.f32 %v3554, %v3663
        %v3700 = vadd.f32 %v3556, %v3665
        %v3701 = vadd.f32 %v3559, %v3668
        %v3702 = vadd.f32 %v3561, %v3670
        %v3703 = vadd.f32 %v3564, %v3673
        %v3704 = vadd.f32 %v3566, %v3675
        %v3705 = vadd.f32 %v3569, %v3678
        %v3706 = vadd.f32 %v3571, %v3680
        %v3707 = vadd.f32 %v3574, %v3683
        %v3708 = vadd.f32 %v3576, %v3685
        %v3709 = vadd.f32 %v3579, %v3688
        %v3710 = vadd.f32 %v3581, %v3690
        %v3711 = vadd.f32 %v3584, %v3693
        %v3712 = vadd.f32 %v3586, %v3695
        %v3713 = vld [vmem:[%s229 + $0x8c] sm:$0xf]
        %v3714 = vld [vmem:[%s229 + $0x90] sm:$0xf]
        %v3715 = vld [vmem:[%s229 + $0x94] sm:$0xf]
        %v3716 = vld [vmem:[%s229 + $0x98] sm:$0xf]
        %v3717 = vld [vmem:[%s229 + $0x9c] sm:$0xf]
        %v3718 = vld [vmem:[%s229 + $0xa0] sm:$0xf]
        %v3719 = vld [vmem:[%s229 + $0xa4] sm:$0xf]
        %v3720 = vld [vmem:[%s229 + $0xa8] sm:$0xf]
        %v3721 = vld [vmem:[%s229 + $0xac] sm:$0xf]
        %v3722 = vld [vmem:[%s229 + $0xb0] sm:$0xf]
        %v3723 = vld [vmem:[%s229 + $0xb4] sm:$0xf]
        %v3724 = vld [vmem:[%s229 + $0xb8] sm:$0xf]
        %v3725 = vld [vmem:[%s229 + $0xbc] sm:$0xf]
        %v3726 = vld [vmem:[%s229 + $0xc0] sm:$0xf]
        %v3727 = vld [vmem:[%s229 + $0xc4] sm:$0xf]
        %v3728 = vld [vmem:[%s229 + $0xc8] sm:$0xf]
        %v3729 = vld [vmem:[%s682] sm:$0xf]
        %v3730 = vld [vmem:[%s682 + $0x4] sm:$0xf]
        %v3731 = vld [vmem:[%s682 + $0x8] sm:$0xf]
        %v3748 = vunpack.c.l.b16 %v3713
        %v3749 = vunpack.c.l.b16 %v3714
        %v3750 = vunpack.c.l.b16 %v3715
        %v3751 = vunpack.c.l.b16 %v3716
        %v3752 = vunpack.c.l.b16 %v3717
        %v3753 = vunpack.c.l.b16 %v3718
        %v3754 = vunpack.c.l.b16 %v3719
        %v3755 = vunpack.c.l.b16 %v3720
        %v3756 = vunpack.c.l.b16 %v3721
        %v3757 = vunpack.c.l.b16 %v3722
        %v3758 = vunpack.c.l.b16 %v3723
        %v3759 = vunpack.c.l.b16 %v3724
        %v3760 = vunpack.c.l.b16 %v3725
        %v3761 = vunpack.c.l.b16 %v3726
        %v3762 = vunpack.c.l.b16 %v3727
        %v3763 = vunpack.c.l.b16 %v3728
        %v3764 = vpack.c.b16 %v3749, %v3748
        %v3765 = vpack.c.b16 %v3751, %v3750
        %v3766 = vpack.c.b16 %v3753, %v3752
        %v3767 = vpack.c.b16 %v3755, %v3754
        %v3768 = vpack.c.b16 %v3757, %v3756
        %v3769 = vpack.c.b16 %v3759, %v3758
        %v3770 = vpack.c.b16 %v3761, %v3760
        %v3771 = vpack.c.b16 %v3763, %v3762
        %v3775 = vunpack.c.l.b16 %v3729
        %v3776 = vunpack.c.l.b16 %v3730
        %v3777 = vunpack.c.l.b16 %v3731
        %v3778 = vpack.c.b16 %v3776, %v3775
        %v3779 = vpack.c.b16 %v3777, %v3777
        %v3782 = vsel %vm384, %v3764, 0
        %v3785 = vsel %vm384, %v3765, 0
        %v3788 = vsel %vm384, %v3766, 0
        %v3791 = vsel %vm384, %v3767, 0
        %v3794 = vsel %vm384, %v3768, 0
        %v3797 = vsel %vm384, %v3769, 0
        %v3800 = vsel %vm384, %v3770, 0
        %v3803 = vsel %vm384, %v3771, 0
        %v3806 = vsel %vm409, %v3779, 0
        %3808 = vmatpush.bf16.msra.mxu0 0
        %3809 = vmatpush.bf16.msra.mxu0 0
        %3810 = vmatpush.bf16.msra.mxu0 0
        %3811 = vmatpush.bf16.msra.mxu0 0
        %3812 = vmatpush.bf16.msra.mxu0 0
        %3813 = vmatpush.bf16.msra.mxu0 0
        %3814 = vmatpush.bf16.msra.mxu0 %v3806
        %3815 = vmatpush.bf16.msra.mxu0 %v3778
        %3816 = vmatmul.bf16.gmra.mxu0 %v3782
        %v3817 = vpop.f32.mrf.mxu0
        %v3818 = vadd.f32 0.0, %v3817
        %v3819 = vpop.f32.mrf.mxu0
        %v3820 = vadd.f32 0.0, %v3819
        %3821 = vmatmul.bf16.gmra.mxu0 %v3785
        %v3822 = vpop.f32.mrf.mxu0
        %v3823 = vadd.f32 0.0, %v3822
        %v3824 = vpop.f32.mrf.mxu0
        %v3825 = vadd.f32 0.0, %v3824
        %3826 = vmatmul.bf16.gmra.mxu0 %v3788
        %v3827 = vpop.f32.mrf.mxu0
        %v3828 = vadd.f32 0.0, %v3827
        %v3829 = vpop.f32.mrf.mxu0
        %v3830 = vadd.f32 0.0, %v3829
        %3831 = vmatmul.bf16.gmra.mxu0 %v3791
        %v3832 = vpop.f32.mrf.mxu0
        %v3833 = vadd.f32 0.0, %v3832
        %v3834 = vpop.f32.mrf.mxu0
        %v3835 = vadd.f32 0.0, %v3834
        %3836 = vmatmul.bf16.gmra.mxu0 %v3794
        %v3837 = vpop.f32.mrf.mxu0
        %v3838 = vadd.f32 0.0, %v3837
        %v3839 = vpop.f32.mrf.mxu0
        %v3840 = vadd.f32 0.0, %v3839
        %3841 = vmatmul.bf16.gmra.mxu0 %v3797
        %v3842 = vpop.f32.mrf.mxu0
        %v3843 = vadd.f32 0.0, %v3842
        %v3844 = vpop.f32.mrf.mxu0
        %v3845 = vadd.f32 0.0, %v3844
        %3846 = vmatmul.bf16.gmra.mxu0 %v3800
        %v3847 = vpop.f32.mrf.mxu0
        %v3848 = vadd.f32 0.0, %v3847
        %v3849 = vpop.f32.mrf.mxu0
        %v3850 = vadd.f32 0.0, %v3849
        %3851 = vmatmul.bf16.gmra.mxu0 %v3803
        %v3852 = vpop.f32.mrf.mxu0
        %v3853 = vadd.f32 0.0, %v3852
        %v3854 = vpop.f32.mrf.mxu0
        %v3855 = vadd.f32 0.0, %v3854
        %3856 = vdwg.mxu0
        %v3857 = vadd.f32 %v3697, %v3818
        %v3858 = vadd.f32 %v3698, %v3820
        %v3859 = vadd.f32 %v3699, %v3823
        %v3860 = vadd.f32 %v3700, %v3825
        %v3861 = vadd.f32 %v3701, %v3828
        %v3862 = vadd.f32 %v3702, %v3830
        %v3863 = vadd.f32 %v3703, %v3833
        %v3864 = vadd.f32 %v3704, %v3835
        %v3865 = vadd.f32 %v3705, %v3838
        %v3866 = vadd.f32 %v3706, %v3840
        %v3867 = vadd.f32 %v3707, %v3843
        %v3868 = vadd.f32 %v3708, %v3845
        %v3869 = vadd.f32 %v3709, %v3848
        %v3870 = vadd.f32 %v3710, %v3850
        %v3871 = vadd.f32 %v3711, %v3853
        %v3872 = vadd.f32 %v3712, %v3855
        %v3873 = vld [vmem:[%s229 + $0x8c] sm:$0xf]
        %v3874 = vld [vmem:[%s229 + $0x90] sm:$0xf]
        %v3875 = vld [vmem:[%s229 + $0x94] sm:$0xf]
        %v3876 = vld [vmem:[%s229 + $0x98] sm:$0xf]
        %v3877 = vld [vmem:[%s229 + $0x9c] sm:$0xf]
        %v3878 = vld [vmem:[%s229 + $0xa0] sm:$0xf]
        %v3879 = vld [vmem:[%s229 + $0xa4] sm:$0xf]
        %v3880 = vld [vmem:[%s229 + $0xa8] sm:$0xf]
        %v3881 = vld [vmem:[%s229 + $0xac] sm:$0xf]
        %v3882 = vld [vmem:[%s229 + $0xb0] sm:$0xf]
        %v3883 = vld [vmem:[%s229 + $0xb4] sm:$0xf]
        %v3884 = vld [vmem:[%s229 + $0xb8] sm:$0xf]
        %v3885 = vld [vmem:[%s229 + $0xbc] sm:$0xf]
        %v3886 = vld [vmem:[%s229 + $0xc0] sm:$0xf]
        %v3887 = vld [vmem:[%s229 + $0xc4] sm:$0xf]
        %v3888 = vld [vmem:[%s229 + $0xc8] sm:$0xf]
        %v3889 = vld [vmem:[%s229 + $0xcc] sm:$0x1]
        %v3890 = vld [vmem:[%s844] sm:$0xf]
        %v3891 = vld [vmem:[%s844 + $0x4] sm:$0xf]
        %v3892 = vld [vmem:[%s844 + $0x8] sm:$0xf]
        %v3910 = vunpack.c.l.b16 %v3873
        %v3911 = vunpack.c.l.b16 %v3874
        %v3912 = vunpack.c.l.b16 %v3875
        %v3913 = vunpack.c.l.b16 %v3876
        %v3914 = vunpack.c.l.b16 %v3877
        %v3915 = vunpack.c.l.b16 %v3878
        %v3916 = vunpack.c.l.b16 %v3879
        %v3917 = vunpack.c.l.b16 %v3880
        %v3918 = vunpack.c.l.b16 %v3881
        %v3919 = vunpack.c.l.b16 %v3882
        %v3920 = vunpack.c.l.b16 %v3883
        %v3921 = vunpack.c.l.b16 %v3884
        %v3922 = vunpack.c.l.b16 %v3885
        %v3923 = vunpack.c.l.b16 %v3886
        %v3924 = vunpack.c.l.b16 %v3887
        %v3925 = vunpack.c.l.b16 %v3888
        %v3926 = vunpack.c.l.b16 %v3889
        %v3927 = vpack.c.b16 %v3911, %v3910
        %v3928 = vpack.c.b16 %v3913, %v3912
        %v3929 = vpack.c.b16 %v3915, %v3914
        %v3930 = vpack.c.b16 %v3917, %v3916
        %v3931 = vpack.c.b16 %v3919, %v3918
        %v3932 = vpack.c.b16 %v3921, %v3920
        %v3933 = vpack.c.b16 %v3923, %v3922
        %v3934 = vpack.c.b16 %v3925, %v3924
        %v3935 = vpack.c.b16 %v3926, %v3926
        %v3937 = vshrl.u32 %v3927, 16
        %v3939 = vshll.u32 %v3927, 16
        %v3941 = vrot.slane %v3939, 1
        %v3942 = vor.u32 %v3937, %v3941
        %v3944 = vshll.u32 %v3928, 16
        %v3946 = vrot.slane %v3944, 1
        %v3947 = vsel %vm306, %v3942, %v3946
        %v3948 = vshrl.u32 %v3928, 16
        %v3950 = vor.u32 %v3948, %v3946
        %v3952 = vshll.u32 %v3929, 16
        %v3954 = vrot.slane %v3952, 1
        %v3955 = vsel %vm306, %v3950, %v3954
        %v3956 = vshrl.u32 %v3929, 16
        %v3958 = vor.u32 %v3956, %v3954
        %v3960 = vshll.u32 %v3930, 16
        %v3962 = vrot.slane %v3960, 1
        %v3963 = vsel %vm306, %v3958, %v3962
        %v3964 = vshrl.u32 %v3930, 16
        %v3966 = vor.u32 %v3964, %v3962
        %v3968 = vshll.u32 %v3931, 16
        %v3970 = vrot.slane %v3968, 1
        %v3971 = vsel %vm306, %v3966, %v3970
        %v3972 = vshrl.u32 %v3931, 16
        %v3974 = vor.u32 %v3972, %v3970
        %v3976 = vshll.u32 %v3932, 16
        %v3978 = vrot.slane %v3976, 1
        %v3979 = vsel %vm306, %v3974, %v3978
        %v3980 = vshrl.u32 %v3932, 16
        %v3982 = vor.u32 %v3980, %v3978
        %v3984 = vshll.u32 %v3933, 16
        %v3986 = vrot.slane %v3984, 1
        %v3987 = vsel %vm306, %v3982, %v3986
        %v3988 = vshrl.u32 %v3933, 16
        %v3990 = vor.u32 %v3988, %v3986
        %v3992 = vshll.u32 %v3934, 16
        %v3994 = vrot.slane %v3992, 1
        %v3995 = vsel %vm306, %v3990, %v3994
        %v3996 = vshrl.u32 %v3934, 16
        %v3998 = vor.u32 %v3996, %v3994
        %v4000 = vshll.u32 %v3935, 16
        %v4002 = vrot.slane %v4000, 1
        %v4003 = vsel %vm306, %v3998, %v4002
        %v4007 = vunpack.c.l.b16 %v3890
        %v4008 = vunpack.c.l.b16 %v3891
        %v4009 = vunpack.c.l.b16 %v3892
        %v4010 = vpack.c.b16 %v4008, %v4007
        %v4011 = vpack.c.b16 %v4009, %v4009
        %v4014 = vsel %vm384, %v3947, 0
        %v4017 = vsel %vm384, %v3955, 0
        %v4020 = vsel %vm384, %v3963, 0
        %v4023 = vsel %vm384, %v3971, 0
        %v4026 = vsel %vm384, %v3979, 0
        %v4029 = vsel %vm384, %v3987, 0
        %v4032 = vsel %vm384, %v3995, 0
        %v4035 = vsel %vm384, %v4003, 0
        %v4038 = vsel %vm409, %v4011, 0
        %4040 = vmatpush.bf16.msra.mxu0 0
        %4041 = vmatpush.bf16.msra.mxu0 0
        %4042 = vmatpush.bf16.msra.mxu0 0
        %4043 = vmatpush.bf16.msra.mxu0 0
        %4044 = vmatpush.bf16.msra.mxu0 0
        %4045 = vmatpush.bf16.msra.mxu0 0
        %4046 = vmatpush.bf16.msra.mxu0 %v4038
        %4047 = vmatpush.bf16.msra.mxu0 %v4010
        %4048 = vmatmul.bf16.gmra.mxu0 %v4014
        %v4049 = vpop.f32.mrf.mxu0
        %v4050 = vadd.f32 0.0, %v4049
        %v4051 = vpop.f32.mrf.mxu0
        %v4052 = vadd.f32 0.0, %v4051
        %4053 = vmatmul.bf16.gmra.mxu0 %v4017
        %v4054 = vpop.f32.mrf.mxu0
        %v4055 = vadd.f32 0.0, %v4054
        %v4056 = vpop.f32.mrf.mxu0
        %v4057 = vadd.f32 0.0, %v4056
        %4058 = vmatmul.bf16.gmra.mxu0 %v4020
        %v4059 = vpop.f32.mrf.mxu0
        %v4060 = vadd.f32 0.0, %v4059
        %v4061 = vpop.f32.mrf.mxu0
        %v4062 = vadd.f32 0.0, %v4061
        %4063 = vmatmul.bf16.gmra.mxu0 %v4023
        %v4064 = vpop.f32.mrf.mxu0
        %v4065 = vadd.f32 0.0, %v4064
        %v4066 = vpop.f32.mrf.mxu0
        %v4067 = vadd.f32 0.0, %v4066
        %4068 = vmatmul.bf16.gmra.mxu0 %v4026
        %v4069 = vpop.f32.mrf.mxu0
        %v4070 = vadd.f32 0.0, %v4069
        %v4071 = vpop.f32.mrf.mxu0
        %v4072 = vadd.f32 0.0, %v4071
        %4073 = vmatmul.bf16.gmra.mxu0 %v4029
        %v4074 = vpop.f32.mrf.mxu0
        %v4075 = vadd.f32 0.0, %v4074
        %v4076 = vpop.f32.mrf.mxu0
        %v4077 = vadd.f32 0.0, %v4076
        %4078 = vmatmul.bf16.gmra.mxu0 %v4032
        %v4079 = vpop.f32.mrf.mxu0
        %v4080 = vadd.f32 0.0, %v4079
        %v4081 = vpop.f32.mrf.mxu0
        %v4082 = vadd.f32 0.0, %v4081
        %4083 = vmatmul.bf16.gmra.mxu0 %v4035
        %v4084 = vpop.f32.mrf.mxu0
        %v4085 = vadd.f32 0.0, %v4084
        %v4086 = vpop.f32.mrf.mxu0
        %v4087 = vadd.f32 0.0, %v4086
        %4088 = vdwg.mxu0
        %v4089 = vadd.f32 %v3857, %v4050
        %v4090 = vadd.f32 %v3858, %v4052
        %v4091 = vadd.f32 %v3859, %v4055
        %v4092 = vadd.f32 %v3860, %v4057
        %v4093 = vadd.f32 %v3861, %v4060
        %v4094 = vadd.f32 %v3862, %v4062
        %v4095 = vadd.f32 %v3863, %v4065
        %v4096 = vadd.f32 %v3864, %v4067
        %v4097 = vadd.f32 %v3865, %v4070
        %v4098 = vadd.f32 %v3866, %v4072
        %v4099 = vadd.f32 %v3867, %v4075
        %v4100 = vadd.f32 %v3868, %v4077
        %v4101 = vadd.f32 %v3869, %v4080
        %v4102 = vadd.f32 %v3870, %v4082
        %v4103 = vadd.f32 %v3871, %v4085
        %v4104 = vadd.f32 %v3872, %v4087
        %v4105 = vld [vmem:[%s229 + $0x8c] sm:$0xe]
        %v4106 = vld [vmem:[%s1061] sm:$0xf]
        %v4107 = vld [vmem:[%s1061 + $0x4] sm:$0xf]
        %v4108 = vld [vmem:[%s1061 + $0x8] sm:$0xf]
        %v4110 = vunpack.c.l.b16 %v4105
        %v4111 = vpack.c.b16 %v3911, %v4110
        %v4112 = vrot.slane %v4111, 1
        %v4113 = vrot.slane %v3928, 1
        %v4114 = vsel %vm547, %v4112, %v4113
        %v4115 = vrot.slane %v3929, 1
        %v4116 = vsel %vm547, %v4113, %v4115
        %v4117 = vrot.slane %v3930, 1
        %v4118 = vsel %vm547, %v4115, %v4117
        %v4119 = vrot.slane %v3931, 1
        %v4120 = vsel %vm547, %v4117, %v4119
        %v4121 = vrot.slane %v3932, 1
        %v4122 = vsel %vm547, %v4119, %v4121
        %v4123 = vrot.slane %v3933, 1
        %v4124 = vsel %vm547, %v4121, %v4123
        %v4125 = vrot.slane %v3934, 1
        %v4126 = vsel %vm547, %v4123, %v4125
        %v4127 = vrot.slane %v3935, 1
        %v4128 = vsel %vm547, %v4125, %v4127
        %v4132 = vunpack.c.l.b16 %v4106
        %v4133 = vunpack.c.l.b16 %v4107
        %v4134 = vunpack.c.l.b16 %v4108
        %v4135 = vpack.c.b16 %v4133, %v4132
        %v4136 = vpack.c.b16 %v4134, %v4134
        %v4139 = vsel %vm384, %v4114, 0
        %v4142 = vsel %vm384, %v4116, 0
        %v4145 = vsel %vm384, %v4118, 0
        %v4148 = vsel %vm384, %v4120, 0
        %v4151 = vsel %vm384, %v4122, 0
        %v4154 = vsel %vm384, %v4124, 0
        %v4157 = vsel %vm384, %v4126, 0
        %v4160 = vsel %vm384, %v4128, 0
        %v4163 = vsel %vm409, %v4136, 0
        %4165 = vmatpush.bf16.msra.mxu0 0
        %4166 = vmatpush.bf16.msra.mxu0 0
        %4167 = vmatpush.bf16.msra.mxu0 0
        %4168 = vmatpush.bf16.msra.mxu0 0
        %4169 = vmatpush.bf16.msra.mxu0 0
        %4170 = vmatpush.bf16.msra.mxu0 0
        %4171 = vmatpush.bf16.msra.mxu0 %v4163
        %4172 = vmatpush.bf16.msra.mxu0 %v4135
        %4173 = vmatmul.bf16.gmra.mxu0 %v4139
        %v4174 = vpop.f32.mrf.mxu0
        %v4175 = vadd.f32 0.0, %v4174
        %v4176 = vpop.f32.mrf.mxu0
        %v4177 = vadd.f32 0.0, %v4176
        %4178 = vmatmul.bf16.gmra.mxu0 %v4142
        %v4179 = vpop.f32.mrf.mxu0
        %v4180 = vadd.f32 0.0, %v4179
        %v4181 = vpop.f32.mrf.mxu0
        %v4182 = vadd.f32 0.0, %v4181
        %4183 = vmatmul.bf16.gmra.mxu0 %v4145
        %v4184 = vpop.f32.mrf.mxu0
        %v4185 = vadd.f32 0.0, %v4184
        %v4186 = vpop.f32.mrf.mxu0
        %v4187 = vadd.f32 0.0, %v4186
        %4188 = vmatmul.bf16.gmra.mxu0 %v4148
        %v4189 = vpop.f32.mrf.mxu0
        %v4190 = vadd.f32 0.0, %v4189
        %v4191 = vpop.f32.mrf.mxu0
        %v4192 = vadd.f32 0.0, %v4191
        %4193 = vmatmul.bf16.gmra.mxu0 %v4151
        %v4194 = vpop.f32.mrf.mxu0
        %v4195 = vadd.f32 0.0, %v4194
        %v4196 = vpop.f32.mrf.mxu0
        %v4197 = vadd.f32 0.0, %v4196
        %4198 = vmatmul.bf16.gmra.mxu0 %v4154
        %v4199 = vpop.f32.mrf.mxu0
        %v4200 = vadd.f32 0.0, %v4199
        %v4201 = vpop.f32.mrf.mxu0
        %v4202 = vadd.f32 0.0, %v4201
        %4203 = vmatmul.bf16.gmra.mxu0 %v4157
        %v4204 = vpop.f32.mrf.mxu0
        %v4205 = vadd.f32 0.0, %v4204
        %v4206 = vpop.f32.mrf.mxu0
        %v4207 = vadd.f32 0.0, %v4206
        %4208 = vmatmul.bf16.gmra.mxu0 %v4160
        %v4209 = vpop.f32.mrf.mxu0
        %v4210 = vadd.f32 0.0, %v4209
        %v4211 = vpop.f32.mrf.mxu0
        %v4212 = vadd.f32 0.0, %v4211
        %4213 = vdwg.mxu0
        %v4214 = vadd.f32 %v4089, %v4175
        %v4215 = vadd.f32 %v4090, %v4177
        %v4216 = vadd.f32 %v4091, %v4180
        %v4217 = vadd.f32 %v4092, %v4182
        %v4218 = vadd.f32 %v4093, %v4185
        %v4219 = vadd.f32 %v4094, %v4187
        %v4220 = vadd.f32 %v4095, %v4190
        %v4221 = vadd.f32 %v4096, %v4192
        %v4222 = vadd.f32 %v4097, %v4195
        %v4223 = vadd.f32 %v4098, %v4197
        %v4224 = vadd.f32 %v4099, %v4200
        %v4225 = vadd.f32 %v4100, %v4202
        %v4226 = vadd.f32 %v4101, %v4205
        %v4227 = vadd.f32 %v4102, %v4207
        %v4228 = vadd.f32 %v4103, %v4210
        %v4229 = vadd.f32 %v4104, %v4212
        %v4230 = vld [vmem:[%s229 + $0x98] sm:$0xf]
        %v4231 = vld [vmem:[%s229 + $0x9c] sm:$0xf]
        %v4232 = vld [vmem:[%s229 + $0xa0] sm:$0xf]
        %v4233 = vld [vmem:[%s229 + $0xa4] sm:$0xf]
        %v4234 = vld [vmem:[%s229 + $0xa8] sm:$0xf]
        %v4235 = vld [vmem:[%s229 + $0xac] sm:$0xf]
        %v4236 = vld [vmem:[%s229 + $0xb0] sm:$0xf]
        %v4237 = vld [vmem:[%s229 + $0xb4] sm:$0xf]
        %v4238 = vld [vmem:[%s229 + $0xb8] sm:$0xf]
        %v4239 = vld [vmem:[%s229 + $0xbc] sm:$0xf]
        %v4240 = vld [vmem:[%s229 + $0xc0] sm:$0xf]
        %v4241 = vld [vmem:[%s229 + $0xc4] sm:$0xf]
        %v4242 = vld [vmem:[%s229 + $0xc8] sm:$0xf]
        %v4243 = vld [vmem:[%s229 + $0xcc] sm:$0xf]
        %v4244 = vld [vmem:[%s229 + $0xd0] sm:$0xf]
        %v4245 = vld [vmem:[%s229 + $0xd4] sm:$0xf]
        %v4246 = vld [vmem:[%s1202] sm:$0xf]
        %v4247 = vld [vmem:[%s1202 + $0x4] sm:$0xf]
        %v4248 = vld [vmem:[%s1202 + $0x8] sm:$0xf]
        %v4265 = vunpack.c.l.b16 %v4230
        %v4266 = vunpack.c.l.b16 %v4231
        %v4267 = vunpack.c.l.b16 %v4232
        %v4268 = vunpack.c.l.b16 %v4233
        %v4269 = vunpack.c.l.b16 %v4234
        %v4270 = vunpack.c.l.b16 %v4235
        %v4271 = vunpack.c.l.b16 %v4236
        %v4272 = vunpack.c.l.b16 %v4237
        %v4273 = vunpack.c.l.b16 %v4238
        %v4274 = vunpack.c.l.b16 %v4239
        %v4275 = vunpack.c.l.b16 %v4240
        %v4276 = vunpack.c.l.b16 %v4241
        %v4277 = vunpack.c.l.b16 %v4242
        %v4278 = vunpack.c.l.b16 %v4243
        %v4279 = vunpack.c.l.b16 %v4244
        %v4280 = vunpack.c.l.b16 %v4245
        %v4281 = vpack.c.b16 %v4266, %v4265
        %v4282 = vpack.c.b16 %v4268, %v4267
        %v4283 = vpack.c.b16 %v4270, %v4269
        %v4284 = vpack.c.b16 %v4272, %v4271
        %v4285 = vpack.c.b16 %v4274, %v4273
        %v4286 = vpack.c.b16 %v4276, %v4275
        %v4287 = vpack.c.b16 %v4278, %v4277
        %v4288 = vpack.c.b16 %v4280, %v4279
        %v4292 = vunpack.c.l.b16 %v4246
        %v4293 = vunpack.c.l.b16 %v4247
        %v4294 = vunpack.c.l.b16 %v4248
        %v4295 = vpack.c.b16 %v4293, %v4292
        %v4296 = vpack.c.b16 %v4294, %v4294
        %v4299 = vsel %vm384, %v4281, 0
        %v4302 = vsel %vm384, %v4282, 0
        %v4305 = vsel %vm384, %v4283, 0
        %v4308 = vsel %vm384, %v4284, 0
        %v4311 = vsel %vm384, %v4285, 0
        %v4314 = vsel %vm384, %v4286, 0
        %v4317 = vsel %vm384, %v4287, 0
        %v4320 = vsel %vm384, %v4288, 0
        %v4323 = vsel %vm409, %v4296, 0
        %4325 = vmatpush.bf16.msra.mxu0 0
        %4326 = vmatpush.bf16.msra.mxu0 0
        %4327 = vmatpush.bf16.msra.mxu0 0
        %4328 = vmatpush.bf16.msra.mxu0 0
        %4329 = vmatpush.bf16.msra.mxu0 0
        %4330 = vmatpush.bf16.msra.mxu0 0
        %4331 = vmatpush.bf16.msra.mxu0 %v4323
        %4332 = vmatpush.bf16.msra.mxu0 %v4295
        %4333 = vmatmul.bf16.gmra.mxu0 %v4299
        %v4334 = vpop.f32.mrf.mxu0
        %v4335 = vadd.f32 0.0, %v4334
        %v4336 = vpop.f32.mrf.mxu0
        %v4337 = vadd.f32 0.0, %v4336
        %4338 = vmatmul.bf16.gmra.mxu0 %v4302
        %v4339 = vpop.f32.mrf.mxu0
        %v4340 = vadd.f32 0.0, %v4339
        %v4341 = vpop.f32.mrf.mxu0
        %v4342 = vadd.f32 0.0, %v4341
        %4343 = vmatmul.bf16.gmra.mxu0 %v4305
        %v4344 = vpop.f32.mrf.mxu0
        %v4345 = vadd.f32 0.0, %v4344
        %v4346 = vpop.f32.mrf.mxu0
        %v4347 = vadd.f32 0.0, %v4346
        %4348 = vmatmul.bf16.gmra.mxu0 %v4308
        %v4349 = vpop.f32.mrf.mxu0
        %v4350 = vadd.f32 0.0, %v4349
        %v4351 = vpop.f32.mrf.mxu0
        %v4352 = vadd.f32 0.0, %v4351
        %4353 = vmatmul.bf16.gmra.mxu0 %v4311
        %v4354 = vpop.f32.mrf.mxu0
        %v4355 = vadd.f32 0.0, %v4354
        %v4356 = vpop.f32.mrf.mxu0
        %v4357 = vadd.f32 0.0, %v4356
        %4358 = vmatmul.bf16.gmra.mxu0 %v4314
        %v4359 = vpop.f32.mrf.mxu0
        %v4360 = vadd.f32 0.0, %v4359
        %v4361 = vpop.f32.mrf.mxu0
        %v4362 = vadd.f32 0.0, %v4361
        %4363 = vmatmul.bf16.gmra.mxu0 %v4317
        %v4364 = vpop.f32.mrf.mxu0
        %v4365 = vadd.f32 0.0, %v4364
        %v4366 = vpop.f32.mrf.mxu0
        %v4367 = vadd.f32 0.0, %v4366
        %4368 = vmatmul.bf16.gmra.mxu0 %v4320
        %v4369 = vpop.f32.mrf.mxu0
        %v4370 = vadd.f32 0.0, %v4369
        %v4371 = vpop.f32.mrf.mxu0
        %v4372 = vadd.f32 0.0, %v4371
        %4373 = vdwg.mxu0
        %v4374 = vadd.f32 %v4214, %v4335
        %v4375 = vadd.f32 %v4215, %v4337
        %v4376 = vadd.f32 %v4216, %v4340
        %v4377 = vadd.f32 %v4217, %v4342
        %v4378 = vadd.f32 %v4218, %v4345
        %v4379 = vadd.f32 %v4219, %v4347
        %v4380 = vadd.f32 %v4220, %v4350
        %v4381 = vadd.f32 %v4221, %v4352
        %v4382 = vadd.f32 %v4222, %v4355
        %v4383 = vadd.f32 %v4223, %v4357
        %v4384 = vadd.f32 %v4224, %v4360
        %v4385 = vadd.f32 %v4225, %v4362
        %v4386 = vadd.f32 %v4226, %v4365
        %v4387 = vadd.f32 %v4227, %v4367
        %v4388 = vadd.f32 %v4228, %v4370
        %v4389 = vadd.f32 %v4229, %v4372
        %v4390 = vld [vmem:[%s229 + $0x98] sm:$0xf]
        %v4391 = vld [vmem:[%s229 + $0x9c] sm:$0xf]
        %v4392 = vld [vmem:[%s229 + $0xa0] sm:$0xf]
        %v4393 = vld [vmem:[%s229 + $0xa4] sm:$0xf]
        %v4394 = vld [vmem:[%s229 + $0xa8] sm:$0xf]
        %v4395 = vld [vmem:[%s229 + $0xac] sm:$0xf]
        %v4396 = vld [vmem:[%s229 + $0xb0] sm:$0xf]
        %v4397 = vld [vmem:[%s229 + $0xb4] sm:$0xf]
        %v4398 = vld [vmem:[%s229 + $0xb8] sm:$0xf]
        %v4399 = vld [vmem:[%s229 + $0xbc] sm:$0xf]
        %v4400 = vld [vmem:[%s229 + $0xc0] sm:$0xf]
        %v4401 = vld [vmem:[%s229 + $0xc4] sm:$0xf]
        %v4402 = vld [vmem:[%s229 + $0xc8] sm:$0xf]
        %v4403 = vld [vmem:[%s229 + $0xcc] sm:$0xf]
        %v4404 = vld [vmem:[%s229 + $0xd0] sm:$0xf]
        %v4405 = vld [vmem:[%s229 + $0xd4] sm:$0xf]
        %v4406 = vld [vmem:[%s229 + $0xd8] sm:$0x1]
        %v4407 = vld [vmem:[%s1364] sm:$0xf]
        %v4408 = vld [vmem:[%s1364 + $0x4] sm:$0xf]
        %v4409 = vld [vmem:[%s1364 + $0x8] sm:$0xf]
        %v4427 = vunpack.c.l.b16 %v4390
        %v4428 = vunpack.c.l.b16 %v4391
        %v4429 = vunpack.c.l.b16 %v4392
        %v4430 = vunpack.c.l.b16 %v4393
        %v4431 = vunpack.c.l.b16 %v4394
        %v4432 = vunpack.c.l.b16 %v4395
        %v4433 = vunpack.c.l.b16 %v4396
        %v4434 = vunpack.c.l.b16 %v4397
        %v4435 = vunpack.c.l.b16 %v4398
        %v4436 = vunpack.c.l.b16 %v4399
        %v4437 = vunpack.c.l.b16 %v4400
        %v4438 = vunpack.c.l.b16 %v4401
        %v4439 = vunpack.c.l.b16 %v4402
        %v4440 = vunpack.c.l.b16 %v4403
        %v4441 = vunpack.c.l.b16 %v4404
        %v4442 = vunpack.c.l.b16 %v4405
        %v4443 = vunpack.c.l.b16 %v4406
        %v4444 = vpack.c.b16 %v4428, %v4427
        %v4445 = vpack.c.b16 %v4430, %v4429
        %v4446 = vpack.c.b16 %v4432, %v4431
        %v4447 = vpack.c.b16 %v4434, %v4433
        %v4448 = vpack.c.b16 %v4436, %v4435
        %v4449 = vpack.c.b16 %v4438, %v4437
        %v4450 = vpack.c.b16 %v4440, %v4439
        %v4451 = vpack.c.b16 %v4442, %v4441
        %v4452 = vpack.c.b16 %v4443, %v4443
        %v4454 = vshrl.u32 %v4444, 16
        %v4456 = vshll.u32 %v4444, 16
        %v4458 = vrot.slane %v4456, 1
        %v4459 = vor.u32 %v4454, %v4458
        %v4461 = vshll.u32 %v4445, 16
        %v4463 = vrot.slane %v4461, 1
        %v4464 = vsel %vm306, %v4459, %v4463
        %v4465 = vshrl.u32 %v4445, 16
        %v4467 = vor.u32 %v4465, %v4463
        %v4469 = vshll.u32 %v4446, 16
        %v4471 = vrot.slane %v4469, 1
        %v4472 = vsel %vm306, %v4467, %v4471
        %v4473 = vshrl.u32 %v4446, 16
        %v4475 = vor.u32 %v4473, %v4471
        %v4477 = vshll.u32 %v4447, 16
        %v4479 = vrot.slane %v4477, 1
        %v4480 = vsel %vm306, %v4475, %v4479
        %v4481 = vshrl.u32 %v4447, 16
        %v4483 = vor.u32 %v4481, %v4479
        %v4485 = vshll.u32 %v4448, 16
        %v4487 = vrot.slane %v4485, 1
        %v4488 = vsel %vm306, %v4483, %v4487
        %v4489 = vshrl.u32 %v4448, 16
        %v4491 = vor.u32 %v4489, %v4487
        %v4493 = vshll.u32 %v4449, 16
        %v4495 = vrot.slane %v4493, 1
        %v4496 = vsel %vm306, %v4491, %v4495
        %v4497 = vshrl.u32 %v4449, 16
        %v4499 = vor.u32 %v4497, %v4495
        %v4501 = vshll.u32 %v4450, 16
        %v4503 = vrot.slane %v4501, 1
        %v4504 = vsel %vm306, %v4499, %v4503
        %v4505 = vshrl.u32 %v4450, 16
        %v4507 = vor.u32 %v4505, %v4503
        %v4509 = vshll.u32 %v4451, 16
        %v4511 = vrot.slane %v4509, 1
        %v4512 = vsel %vm306, %v4507, %v4511
        %v4513 = vshrl.u32 %v4451, 16
        %v4515 = vor.u32 %v4513, %v4511
        %v4517 = vshll.u32 %v4452, 16
        %v4519 = vrot.slane %v4517, 1
        %v4520 = vsel %vm306, %v4515, %v4519
        %v4524 = vunpack.c.l.b16 %v4407
        %v4525 = vunpack.c.l.b16 %v4408
        %v4526 = vunpack.c.l.b16 %v4409
        %v4527 = vpack.c.b16 %v4525, %v4524
        %v4528 = vpack.c.b16 %v4526, %v4526
        %v4531 = vsel %vm384, %v4464, 0
        %v4534 = vsel %vm384, %v4472, 0
        %v4537 = vsel %vm384, %v4480, 0
        %v4540 = vsel %vm384, %v4488, 0
        %v4543 = vsel %vm384, %v4496, 0
        %v4546 = vsel %vm384, %v4504, 0
        %v4549 = vsel %vm384, %v4512, 0
        %v4552 = vsel %vm384, %v4520, 0
        %v4555 = vsel %vm409, %v4528, 0
        %4557 = vmatpush.bf16.msra.mxu0 0
        %4558 = vmatpush.bf16.msra.mxu0 0
        %4559 = vmatpush.bf16.msra.mxu0 0
        %4560 = vmatpush.bf16.msra.mxu0 0
        %4561 = vmatpush.bf16.msra.mxu0 0
        %4562 = vmatpush.bf16.msra.mxu0 0
        %4563 = vmatpush.bf16.msra.mxu0 %v4555
        %4564 = vmatpush.bf16.msra.mxu0 %v4527
        %4565 = vmatmul.bf16.gmra.mxu0 %v4531
        %v4566 = vpop.f32.mrf.mxu0
        %v4567 = vadd.f32 0.0, %v4566
        %v4568 = vpop.f32.mrf.mxu0
        %v4569 = vadd.f32 0.0, %v4568
        %4570 = vmatmul.bf16.gmra.mxu0 %v4534
        %v4571 = vpop.f32.mrf.mxu0
        %v4572 = vadd.f32 0.0, %v4571
        %v4573 = vpop.f32.mrf.mxu0
        %v4574 = vadd.f32 0.0, %v4573
        %4575 = vmatmul.bf16.gmra.mxu0 %v4537
        %v4576 = vpop.f32.mrf.mxu0
        %v4577 = vadd.f32 0.0, %v4576
        %v4578 = vpop.f32.mrf.mxu0
        %v4579 = vadd.f32 0.0, %v4578
        %4580 = vmatmul.bf16.gmra.mxu0 %v4540
        %v4581 = vpop.f32.mrf.mxu0
        %v4582 = vadd.f32 0.0, %v4581
        %v4583 = vpop.f32.mrf.mxu0
        %v4584 = vadd.f32 0.0, %v4583
        %4585 = vmatmul.bf16.gmra.mxu0 %v4543
        %v4586 = vpop.f32.mrf.mxu0
        %v4587 = vadd.f32 0.0, %v4586
        %v4588 = vpop.f32.mrf.mxu0
        %v4589 = vadd.f32 0.0, %v4588
        %4590 = vmatmul.bf16.gmra.mxu0 %v4546
        %v4591 = vpop.f32.mrf.mxu0
        %v4592 = vadd.f32 0.0, %v4591
        %v4593 = vpop.f32.mrf.mxu0
        %v4594 = vadd.f32 0.0, %v4593
        %4595 = vmatmul.bf16.gmra.mxu0 %v4549
        %v4596 = vpop.f32.mrf.mxu0
        %v4597 = vadd.f32 0.0, %v4596
        %v4598 = vpop.f32.mrf.mxu0
        %v4599 = vadd.f32 0.0, %v4598
        %4600 = vmatmul.bf16.gmra.mxu0 %v4552
        %v4601 = vpop.f32.mrf.mxu0
        %v4602 = vadd.f32 0.0, %v4601
        %v4603 = vpop.f32.mrf.mxu0
        %v4604 = vadd.f32 0.0, %v4603
        %4605 = vdwg.mxu0
        %v4606 = vadd.f32 %v4374, %v4567
        %v4607 = vadd.f32 %v4375, %v4569
        %v4608 = vadd.f32 %v4376, %v4572
        %v4609 = vadd.f32 %v4377, %v4574
        %v4610 = vadd.f32 %v4378, %v4577
        %v4611 = vadd.f32 %v4379, %v4579
        %v4612 = vadd.f32 %v4380, %v4582
        %v4613 = vadd.f32 %v4381, %v4584
        %v4614 = vadd.f32 %v4382, %v4587
        %v4615 = vadd.f32 %v4383, %v4589
        %v4616 = vadd.f32 %v4384, %v4592
        %v4617 = vadd.f32 %v4385, %v4594
        %v4618 = vadd.f32 %v4386, %v4597
        %v4619 = vadd.f32 %v4387, %v4599
        %v4620 = vadd.f32 %v4388, %v4602
        %v4621 = vadd.f32 %v4389, %v4604
        %v4622 = vld [vmem:[%s229 + $0x98] sm:$0xe]
        %v4623 = vld [vmem:[%s1581] sm:$0xf]
        %v4624 = vld [vmem:[%s1581 + $0x4] sm:$0xf]
        %v4625 = vld [vmem:[%s1581 + $0x8] sm:$0xf]
        %v4627 = vunpack.c.l.b16 %v4622
        %v4628 = vpack.c.b16 %v4428, %v4627
        %v4629 = vrot.slane %v4628, 1
        %v4630 = vrot.slane %v4445, 1
        %v4631 = vsel %vm547, %v4629, %v4630
        %v4632 = vrot.slane %v4446, 1
        %v4633 = vsel %vm547, %v4630, %v4632
        %v4634 = vrot.slane %v4447, 1
        %v4635 = vsel %vm547, %v4632, %v4634
        %v4636 = vrot.slane %v4448, 1
        %v4637 = vsel %vm547, %v4634, %v4636
        %v4638 = vrot.slane %v4449, 1
        %v4639 = vsel %vm547, %v4636, %v4638
        %v4640 = vrot.slane %v4450, 1
        %v4641 = vsel %vm547, %v4638, %v4640
        %v4642 = vrot.slane %v4451, 1
        %v4643 = vsel %vm547, %v4640, %v4642
        %v4644 = vrot.slane %v4452, 1
        %v4645 = vsel %vm547, %v4642, %v4644
        %v4649 = vunpack.c.l.b16 %v4623
        %v4650 = vunpack.c.l.b16 %v4624
        %v4651 = vunpack.c.l.b16 %v4625
        %v4652 = vpack.c.b16 %v4650, %v4649
        %v4653 = vpack.c.b16 %v4651, %v4651
        %v4656 = vsel %vm384, %v4631, 0
        %v4659 = vsel %vm384, %v4633, 0
        %v4662 = vsel %vm384, %v4635, 0
        %v4665 = vsel %vm384, %v4637, 0
        %v4668 = vsel %vm384, %v4639, 0
        %v4671 = vsel %vm384, %v4641, 0
        %v4674 = vsel %vm384, %v4643, 0
        %v4677 = vsel %vm384, %v4645, 0
        %v4680 = vsel %vm409, %v4653, 0
        %4682 = vmatpush.bf16.msra.mxu0 0
        %4683 = vmatpush.bf16.msra.mxu0 0
        %4684 = vmatpush.bf16.msra.mxu0 0
        %4685 = vmatpush.bf16.msra.mxu0 0
        %4686 = vmatpush.bf16.msra.mxu0 0
        %4687 = vmatpush.bf16.msra.mxu0 0
        %4688 = vmatpush.bf16.msra.mxu0 %v4680
        %4689 = vmatpush.bf16.msra.mxu0 %v4652
        %4690 = vmatmul.bf16.gmra.mxu0 %v4656
        %v4691 = vpop.f32.mrf.mxu0
        %v4692 = vadd.f32 0.0, %v4691
        %v4693 = vpop.f32.mrf.mxu0
        %v4694 = vadd.f32 0.0, %v4693
        %4695 = vmatmul.bf16.gmra.mxu0 %v4659
        %v4696 = vpop.f32.mrf.mxu0
        %v4697 = vadd.f32 0.0, %v4696
        %v4698 = vpop.f32.mrf.mxu0
        %v4699 = vadd.f32 0.0, %v4698
        %4700 = vmatmul.bf16.gmra.mxu0 %v4662
        %v4701 = vpop.f32.mrf.mxu0
        %v4702 = vadd.f32 0.0, %v4701
        %v4703 = vpop.f32.mrf.mxu0
        %v4704 = vadd.f32 0.0, %v4703
        %4705 = vmatmul.bf16.gmra.mxu0 %v4665
        %v4706 = vpop.f32.mrf.mxu0
        %v4707 = vadd.f32 0.0, %v4706
        %v4708 = vpop.f32.mrf.mxu0
        %v4709 = vadd.f32 0.0, %v4708
        %4710 = vmatmul.bf16.gmra.mxu0 %v4668
        %v4711 = vpop.f32.mrf.mxu0
        %v4712 = vadd.f32 0.0, %v4711
        %v4713 = vpop.f32.mrf.mxu0
        %v4714 = vadd.f32 0.0, %v4713
        %4715 = vmatmul.bf16.gmra.mxu0 %v4671
        %v4716 = vpop.f32.mrf.mxu0
        %v4717 = vadd.f32 0.0, %v4716
        %v4718 = vpop.f32.mrf.mxu0
        %v4719 = vadd.f32 0.0, %v4718
        %4720 = vmatmul.bf16.gmra.mxu0 %v4674
        %v4721 = vpop.f32.mrf.mxu0
        %v4722 = vadd.f32 0.0, %v4721
        %v4723 = vpop.f32.mrf.mxu0
        %v4724 = vadd.f32 0.0, %v4723
        %4725 = vmatmul.bf16.gmra.mxu0 %v4677
        %v4726 = vpop.f32.mrf.mxu0
        %v4727 = vadd.f32 0.0, %v4726
        %v4728 = vpop.f32.mrf.mxu0
        %v4729 = vadd.f32 0.0, %v4728
        %4730 = vdwg.mxu0
        %v4731 = vadd.f32 %v4606, %v4692
        %v4732 = vadd.f32 %v4607, %v4694
        %v4733 = vadd.f32 %v4608, %v4697
        %v4734 = vadd.f32 %v4609, %v4699
        %v4735 = vadd.f32 %v4610, %v4702
        %v4736 = vadd.f32 %v4611, %v4704
        %v4737 = vadd.f32 %v4612, %v4707
        %v4738 = vadd.f32 %v4613, %v4709
        %v4739 = vadd.f32 %v4614, %v4712
        %v4740 = vadd.f32 %v4615, %v4714
        %v4741 = vadd.f32 %v4616, %v4717
        %v4742 = vadd.f32 %v4617, %v4719
        %v4743 = vadd.f32 %v4618, %v4722
        %v4744 = vadd.f32 %v4619, %v4724
        %v4745 = vadd.f32 %v4620, %v4727
        %v4746 = vadd.f32 %v4621, %v4729
        %v4747 = vadd.f32 %v4731, %v1707
        %v4748 = vadd.f32 %v4732, %v1707
        %v4749 = vadd.f32 %v4733, %v1707
        %v4750 = vadd.f32 %v4734, %v1707
        %v4751 = vadd.f32 %v4735, %v1707
        %v4752 = vadd.f32 %v4736, %v1707
        %v4753 = vadd.f32 %v4737, %v1707
        %v4754 = vadd.f32 %v4738, %v1707
        %v4755 = vadd.f32 %v4739, %v1707
        %v4756 = vadd.f32 %v4740, %v1707
        %v4757 = vadd.f32 %v4741, %v1707
        %v4758 = vadd.f32 %v4742, %v1707
        %v4759 = vadd.f32 %v4743, %v1707
        %v4760 = vadd.f32 %v4744, %v1707
        %v4761 = vadd.f32 %v4745, %v1707
        %v4762 = vadd.f32 %v4746, %v1707
        %v4763 = vmax.f32 %v4747, 0.0
        %v4764 = vmax.f32 %v4748, 0.0
        %v4765 = vmax.f32 %v4749, 0.0
        %v4766 = vmax.f32 %v4750, 0.0
        %v4767 = vmax.f32 %v4751, 0.0
        %v4768 = vmax.f32 %v4752, 0.0
        %v4769 = vmax.f32 %v4753, 0.0
        %v4770 = vmax.f32 %v4754, 0.0
        %v4771 = vmax.f32 %v4755, 0.0
        %v4772 = vmax.f32 %v4756, 0.0
        %v4773 = vmax.f32 %v4757, 0.0
        %v4774 = vmax.f32 %v4758, 0.0
        %v4775 = vmax.f32 %v4759, 0.0
        %v4776 = vmax.f32 %v4760, 0.0
        %v4777 = vmax.f32 %v4761, 0.0
        %v4778 = vmax.f32 %v4762, 0.0
        %v4779 = vpack.c.bf16 %v4763, %v4763
        %v4780 = vpack.c.bf16 %v4764, %v4764
        %v4781 = vpack.c.bf16 %v4765, %v4765
        %v4782 = vpack.c.bf16 %v4766, %v4766
        %v4783 = vpack.c.bf16 %v4767, %v4767
        %v4784 = vpack.c.bf16 %v4768, %v4768
        %v4785 = vpack.c.bf16 %v4769, %v4769
        %v4786 = vpack.c.bf16 %v4770, %v4770
        %v4787 = vpack.c.bf16 %v4771, %v4771
        %v4788 = vpack.c.bf16 %v4772, %v4772
        %v4789 = vpack.c.bf16 %v4773, %v4773
        %v4790 = vpack.c.bf16 %v4774, %v4774
        %v4791 = vpack.c.bf16 %v4775, %v4775
        %v4792 = vpack.c.bf16 %v4776, %v4776
        %v4793 = vpack.c.bf16 %v4777, %v4777
        %v4794 = vpack.c.bf16 %v4778, %v4778
        %4795 = vst [vmem:[%s220 + $0x80] sm:$0xf] %v4779
        %4796 = vst [vmem:[%s220 + $0x84] sm:$0xf] %v4780
        %4797 = vst [vmem:[%s220 + $0x88] sm:$0xf] %v4781
        %4798 = vst [vmem:[%s220 + $0x8c] sm:$0xf] %v4782
        %4799 = vst [vmem:[%s220 + $0x90] sm:$0xf] %v4783
        %4800 = vst [vmem:[%s220 + $0x94] sm:$0xf] %v4784
        %4801 = vst [vmem:[%s220 + $0x98] sm:$0xf] %v4785
        %4802 = vst [vmem:[%s220 + $0x9c] sm:$0xf] %v4786
        %4803 = vst [vmem:[%s220 + $0xa0] sm:$0xf] %v4787
        %4804 = vst [vmem:[%s220 + $0xa4] sm:$0xf] %v4788
        %4805 = vst [vmem:[%s220 + $0xa8] sm:$0xf] %v4789
        %4806 = vst [vmem:[%s220 + $0xac] sm:$0xf] %v4790
        %4807 = vst [vmem:[%s220 + $0xb0] sm:$0xf] %v4791
        %4808 = vst [vmem:[%s220 + $0xb4] sm:$0xf] %v4792
        %4809 = vst [vmem:[%s220 + $0xb8] sm:$0xf] %v4793
        %4810 = vst [vmem:[%s220 + $0xbc] sm:$0xf] %v4794
        %s4811 = sand.u32 %s128, 1
        %s4812 = scalar_lea.sflag [#allocation3], %s4811
        %s4813 = sand.u32 %s128, 1
        %s4814 = smul.addr %s4813, 192
        %s4815 = scalar_lea.vmem [#allocation2], %s4814
        // Predicated region
        $region33: #{tpu_custom_call.1} parent=31 // pred_check
          %p4816 = pneg %p138
        $region34: #{tpu_custom_call.1} parent=31 // pred_check_branch
          %4818 = sbr.rel (%p4816) target = $region36
        $region35: #{tpu_custom_call.1} parent=31 // pred_region
          %4820 = vsyncadd %s4812, 0
          %s4821 = smul.addr %s24, 48
          %s4822 = sadd.s32 %s22, %s4821
          %s4823 = smul.addr %s23, 48
          %s4824 = sadd.s32 %s4822, %s4823
          %s4825 = smul.addr %s4824, 4
          %s4826 = scalar_lea.hbm %s3, %s4825
          %s4827 = sshll.u32 %s4815, 4
          %s4828 = int_to_ptr.vmem [resolvable:$true] %s4827
          %s4829 = sshll.u32 %s4826, 4
          %s4830 = int_to_ptr.hbm [resolvable:$true] %s4829
          %4835 = dma.vmem_to_hbm [thread:$0]  %s4828, 3072, %s4830, %s4812, 64, 64, 4
        $region36: #{tpu_custom_call.1} parent=31 // pred_fallthru
          _
      $region32: #{tpu_custom_call.1} parent=5 // pred_fallthru
        _
      %p4836 = scmp.le.s32.totalorder 2, %s12
      // Predicated region
      $region37: #{tpu_custom_call.1} parent=5 // pred_check
        %p4837 = pneg %p4836
      $region38: #{tpu_custom_call.1} parent=5 // pred_check_branch
        %4839 = sbr.rel (%p4837) target = $region40
      $region39: #{tpu_custom_call.1} parent=5 // pred_region
        %s4840 = ssub.s32 %s12, 2
        // Predicated region
        $region41: #{tpu_custom_call.1} parent=39 // pred_check
          %p4841 = pneg %p144
        $region42: #{tpu_custom_call.1} parent=39 // pred_check_branch
          %4843 = sbr.rel (%p4841) target = $region44
        $region43: #{tpu_custom_call.1} parent=39 // pred_region
          %s4844 = sand.u32 %s129, 1
          %s4845 = scalar_lea.sflag [#allocation3], %s4844
          %s4846 = sand.u32 %s129, 1
          %s4847 = smul.addr %s4846, 192
          %s4848 = scalar_lea.vmem [#allocation2], %s4847
          %4850 = dma.done %s4845, 3072
        $region44: #{tpu_custom_call.1} parent=39 // pred_fallthru
          _
      $region40: #{tpu_custom_call.1} parent=5 // pred_fallthru
        _
    $region6: #{tpu_custom_call.1} parent=1 // loop_footer
      %s16 = sadd.s32 1, %s12
    $region7: #{tpu_custom_call.1} parent=1 // loop_footer_branch
      %11 = sbr.rel target = $region3
    $region8: #{tpu_custom_call.1} parent=1 // loop_exit
      _
    %4851 = vsyncpa [#allocation3], 1
    %s4852 = scalar_lea.sflag [#allocation3], 1
    %4853 = vsyncpa %s4852, 1

</llo_original>
